<compile_context>
chip_gen: v6e
topology: v6e:2x2x1
jax: 0.10.0
libtpu: 0.0.40
codegen_flags: <defaults>
</compile_context>

<pallas_src>
import functools

import jax
import jax.numpy as jnp
from jax.experimental import pallas as pl
from jax.experimental.pallas import tpu as pltpu

# ----------------------------- config (small, synthetic) -----------------------------
B = 2                 # batch
LSTM_DIM = 32         # lstm_output feature dim
CONTEXT_DIM = 16      # scalar_context dim
RES_DIM = 32
RES_NUM = 2           # NOTE: the fused action-type kernel hardcodes 2 residual blocks
ACTION_NUM = 32       # number of action types (real: 327)
ACTION_MAP_DIM = 32
GATE_DIM = 32         # autoregressive-embedding dim (real: 1024)
DELAY_DIM = 16        # delay buckets (real: 128)
DELAY_DECODE = 32
DELAY_MAP_DIM = 32
QUEUED_DIM = 2
QUEUED_DECODE = 32
QUEUED_MAP_DIM = 32
ENTITY_N = 8          # max entities
ENTITY_DIM = 32
KEY_DIM = 32
MAP_H = 16
MAP_W = 16
MAP_C = 8

# deterministic stand-in for distar's SELECTED_UNITS_MASK lookup table
SELECTED_UNITS_MASK = (jnp.arange(ACTION_NUM) % 2 == 0)

NEG_INF = -1e9        # python float -> in-kernel literal (no captured-constant error)

_VMEM = pl.BlockSpec(memory_space=pltpu.MemorySpace.VMEM)
_SMEM = pl.BlockSpec(memory_space=pltpu.MemorySpace.SMEM)


# ------------------------------ in-kernel building blocks ------------------------------
def _linear(x, w_ref, b_ref, relu=False):
    y = jnp.dot(x, w_ref[...], preferred_element_type=jnp.float32) + b_ref[...]
    if relu:
        y = jnp.maximum(y, 0.0)
    return y


def _glu(x, ctx, gw_ref, gb_ref, vw_ref, vb_ref):
    gate = jax.nn.sigmoid(
        jnp.dot(ctx, gw_ref[...], preferred_element_type=jnp.float32) + gb_ref[...])
    val = jnp.dot(x, vw_ref[...], preferred_element_type=jnp.float32) + vb_ref[...]
    return gate * val


def _argmax_keepdims(x):
    """First-occurrence argmax along last axis -> (..., 1) int32 (in-kernel, XLU only)."""
    n = x.shape[-1]
    m = jnp.max(x, axis=-1, keepdims=True)
    idx = jax.lax.broadcasted_iota(jnp.int32, x.shape, x.ndim - 1)
    cand = jnp.where(x >= m, idx, n)
    return jnp.min(cand, axis=-1, keepdims=True).astype(jnp.int32)


def _one_hot(idx_col, n):
    """idx_col: (B, 1) int32 -> (B, n) f32.  Matmul with it == MXU row-gather."""
    lanes = jax.lax.broadcasted_iota(jnp.int32, (idx_col.shape[0], n), 1)
    return (lanes == idx_col).astype(jnp.float32)


# ------------------------- kernel 1: action-type head (fused) --------------------------
def _action_type_kernel(
        lstm_ref, ctx_ref,
        proj_w, proj_b,
        r1a_w, r1a_b, r1b_w, r1b_b,
        r2a_w, r2a_b, r2b_w, r2b_b,
        gl_gw, gl_gb, gl_vw, gl_vb,
        m1_w, m1_b, m2_w, m2_b,
        g1_gw, g1_gb, g1_vw, g1_vb,
        g2_gw, g2_gb, g2_vw, g2_vb,
        logit_ref, action_ref, emb_ref):
    lstm = lstm_ref[...]
    ctx = ctx_ref[...]

    x = _linear(lstm, proj_w, proj_b, relu=True)
    # residual fc block 1
    h = _linear(x, r1a_w, r1a_b, relu=True)
    h = _linear(h, r1b_w, r1b_b)
    x = jnp.maximum(h + x, 0.0)
    # residual fc block 2
    h = _linear(x, r2a_w, r2a_b, relu=True)
    h = _linear(h, r2b_w, r2b_b)
    x = jnp.maximum(h + x, 0.0)

    logit = _glu(x, ctx, gl_gw, gl_gb, gl_vw, gl_vb)        # (B, ACTION_NUM)
    action = _argmax_keepdims(logit)                         # (B, 1) int32
    oh = _one_hot(action, ACTION_NUM)                        # in-kernel; never hits HBM
    z = _linear(oh, m1_w, m1_b, relu=True)
    z = _linear(z, m2_w, m2_b)
    emb1 = _glu(z, ctx, g1_gw, g1_gb, g1_vw, g1_vb)
    emb2 = _glu(lstm, ctx, g2_gw, g2_gb, g2_vw, g2_vb)

    logit_ref[...] = logit
    action_ref[...] = action
    emb_ref[...] = emb1 + emb2


def action_type_head(p, lstm_output, scalar_context):
    assert RES_NUM == 2
    Bn = lstm_output.shape[0]
    args = [
        lstm_output, scalar_context,
        p["proj"]["w"], p["proj"]["b"],
        p["res"][0]["fc1"]["w"], p["res"][0]["fc1"]["b"],
        p["res"][0]["fc2"]["w"], p["res"][0]["fc2"]["b"],
        p["res"][1]["fc1"]["w"], p["res"][1]["fc1"]["b"],
        p["res"][1]["fc2"]["w"], p["res"][1]["fc2"]["b"],
        p["glu_logit"]["gate"]["w"], p["glu_logit"]["gate"]["b"],
        p["glu_logit"]["val"]["w"], p["glu_logit"]["val"]["b"],
        p["map_fc1"]["w"], p["map_fc1"]["b"],
        p["map_fc2"]["w"], p["map_fc2"]["b"],
        p["glu1"]["gate"]["w"], p["glu1"]["gate"]["b"],
        p["glu1"]["val"]["w"], p["glu1"]["val"]["b"],
        p["glu2"]["gate"]["w"], p["glu2"]["gate"]["b"],
        p["glu2"]["val"]["w"], p["glu2"]["val"]["b"],
    ]
    logit, action, emb = pl.pallas_call(
        _action_type_kernel,
        out_shape=(jax.ShapeDtypeStruct((Bn, ACTION_NUM), jnp.float32),
                   jax.ShapeDtypeStruct((Bn, 1), jnp.int32),
                   jax.ShapeDtypeStruct((Bn, GATE_DIM), jnp.float32)),
        in_specs=[_VMEM] * len(args),
        out_specs=(_VMEM, _VMEM, _VMEM),
    )(*args)
    return logit, action[:, 0], emb


# ---------------------- kernel 2: delay + queued heads (fused) --------------------------
def _delay_queued_kernel(
        emb_ref,
        d1_w, d1_b, d2_w, d2_b, d3_w, d3_b, de1_w, de1_b, de2_w, de2_b,
        q1_w, q1_b, q2_w, q2_b, q3_w, q3_b, qe1_w, qe1_b, qe2_w, qe2_b,
        dlogit_ref, delay_ref, qlogit_ref, queued_ref, emb_out_ref):
    emb = emb_ref[...]

    # delay head
    x = _linear(emb, d1_w, d1_b, relu=True)
    x = _linear(x, d2_w, d2_b, relu=True)
    dlogit = _linear(x, d3_w, d3_b)                          # (B, DELAY_DIM)
    delay = _argmax_keepdims(dlogit)                         # (B, 1)
    d = _linear(_one_hot(delay, DELAY_DIM), de1_w, de1_b, relu=True)
    d = _linear(d, de2_w, de2_b)
    emb = emb + d

    # queued head
    x = _linear(emb, q1_w, q1_b, relu=True)
    x = _linear(x, q2_w, q2_b, relu=True)
    qlogit = _linear(x, q3_w, q3_b)                          # (B, QUEUED_DIM)
    queued = _argmax_keepdims(qlogit)                        # (B, 1)
    q = _linear(_one_hot(queued, QUEUED_DIM), qe1_w, qe1_b, relu=True)
    q = _linear(q, qe2_w, qe2_b)
    emb = emb + q

    dlogit_ref[...] = dlogit
    delay_ref[...] = delay
    qlogit_ref[...] = qlogit
    queued_ref[...] = queued
    emb_out_ref[...] = emb


def delay_queued_heads(p_delay, p_queued, emb):
    Bn = emb.shape[0]
    args = [
        emb,
        p_delay["fc1"]["w"], p_delay["fc1"]["b"],
        p_delay["fc2"]["w"], p_delay["fc2"]["b"],
        p_delay["fc3"]["w"], p_delay["fc3"]["b"],
        p_delay["embed_fc1"]["w"], p_delay["embed_fc1"]["b"],
        p_delay["embed_fc2"]["w"], p_delay["embed_fc2"]["b"],
        p_queued["fc1"]["w"], p_queued["fc1"]["b"],
        p_queued["fc2"]["w"], p_queued["fc2"]["b"],
        p_queued["fc3"]["w"], p_queued["fc3"]["b"],
        p_queued["embed_fc1"]["w"], p_queued["embed_fc1"]["b"],
        p_queued["embed_fc2"]["w"], p_queued["embed_fc2"]["b"],
    ]
    dlogit, delay, qlogit, queued, emb_out = pl.pallas_call(
        _delay_queued_kernel,
        out_shape=(jax.ShapeDtypeStruct((Bn, DELAY_DIM), jnp.float32),
                   jax.ShapeDtypeStruct((Bn, 1), jnp.int32),
                   jax.ShapeDtypeStruct((Bn, QUEUED_DIM), jnp.float32),
                   jax.ShapeDtypeStruct((Bn, 1), jnp.int32),
                   jax.ShapeDtypeStruct((Bn, GATE_DIM), jnp.float32)),
        in_specs=[_VMEM] * len(args),
        out_specs=(_VMEM,) * 5,
    )(*args)
    return dlogit, delay[:, 0], qlogit, queued[:, 0], emb_out


# --------------- kernel 3: selected-units + target-unit heads (fused) -------------------
def _units_kernel(
        emb_ref, ent2d_ref, num_ref, sumask_ref,
        s_key_w, s_key_b, s_q1_w, s_q1_b, s_q2_w, s_q2_b,
        s_end_w, s_end_b, s_emb_w, s_emb_b,
        t_key_w, t_key_b, t_q1_w, t_q1_b, t_q2_w, t_q2_b,
        su_logit_ref, su_sel_ref, su_num_ref, emb_out_ref,
        tu_logit_ref, tu_sel_ref, *, n_entity):
    emb = emb_ref[...]                                        # (B, GATE)
    ent2d = ent2d_ref[...]                                    # (B*N, E)
    num = num_ref[...]                                        # (B, 1) int32
    mask_f = sumask_ref[...]                                  # (B, 1) f32 (1./0.)
    Bn = emb.shape[0]
    N = n_entity

    idx = jax.lax.broadcasted_iota(jnp.int32, (Bn, N), 1)
    valid = idx < num                                         # (B, N)
    use_sel = mask_f > 0.5                                    # (B, 1) bool

    # ---- selected-units head (single selection step) ------------------------------
    # TODO(synk): real SelectedUnitsHead runs an autoregressive LSTM over up to
    # max_entity_num selection steps; here one step is performed.
    key2 = jnp.dot(ent2d, s_key_w[...], preferred_element_type=jnp.float32) + s_key_b[...]
    key = key2.reshape(Bn, N, key2.shape[-1])                 # (B, N, K) -- stays in VMEM
    q = _linear(emb, s_q1_w, s_q1_b, relu=True)
    q = _linear(q, s_q2_w, s_q2_b)                            # (B, K)
    scores = jnp.einsum("bqk,bnk->bqn", q[:, None, :], key,
                        preferred_element_type=jnp.float32)[:, 0, :]   # MXU, (B, N)
    unit_logits = jnp.where(valid, scores, NEG_INF)
    end_logit = _linear(emb, s_end_w, s_end_b)                # (B, 1)
    logits = jnp.concatenate([unit_logits, end_logit], axis=-1)        # (B, N+1)

    lane = jax.lax.broadcasted_iota(jnp.int32, (Bn, N + 1), 1)
    no_sel = jnp.where(lane < N, NEG_INF, 0.0)                # force end-flag when masked
    logits = jnp.where(use_sel, logits, no_sel)
    selected = _argmax_keepdims(logits)                       # (B, 1)
    su_count = jnp.where(use_sel, 1, 0).astype(jnp.int32)     # (B, 1)

    sel_idx = _argmax_keepdims(unit_logits)                   # (B, 1)
    sel_oh = _one_hot(sel_idx, N)                             # (B, N)
    sel_key = jnp.einsum("bqn,bnk->bqk", sel_oh[:, None, :], key,
                         preferred_element_type=jnp.float32)[:, 0, :]  # (B, K)
    upd = _linear(sel_key, s_emb_w, s_emb_b)                  # (B, GATE)
    emb2 = emb + upd * mask_f

    # ---- target-unit head ----------------------------------------------------------
    tkey2 = jnp.dot(ent2d, t_key_w[...], preferred_element_type=jnp.float32) + t_key_b[...]
    tkey = tkey2.reshape(Bn, N, tkey2.shape[-1])
    tq = _linear(emb2, t_q1_w, t_q1_b, relu=True)
    tq = _linear(tq, t_q2_w, t_q2_b)
    tscores = jnp.einsum("bqk,bnk->bqn", tq[:, None, :], tkey,
                         preferred_element_type=jnp.float32)[:, 0, :]
    tu_logits = jnp.where(valid, tscores, NEG_INF)
    target = _argmax_keepdims(tu_logits)

    su_logit_ref[...] = logits
    su_sel_ref[...] = selected
    su_num_ref[...] = su_count
    emb_out_ref[...] = emb2
    tu_logit_ref[...] = tu_logits
    tu_sel_ref[...] = target


def units_heads(p_su, p_tu, emb, entity_embeddings, entity_num, su_mask):
    Bn, N, E = entity_embeddings.shape
    ent2d = entity_embeddings.reshape(Bn * N, E)
    num = entity_num.astype(jnp.int32).reshape(Bn, 1)
    mask_f = su_mask.astype(jnp.float32).reshape(Bn, 1)
    args = [
        emb, ent2d, num, mask_f,
        p_su["key_fc"]["w"], p_su["key_fc"]["b"],
        p_su["query_fc1"]["w"], p_su["query_fc1"]["b"],
        p_su["query_fc2"]["w"], p_su["query_fc2"]["b"],
        p_su["end_fc"]["w"], p_su["end_fc"]["b"],
        p_su["emb_fc"]["w"], p_su["emb_fc"]["b"],
        p_tu["key_fc"]["w"], p_tu["key_fc"]["b"],
        p_tu["query_fc1"]["w"], p_tu["query_fc1"]["b"],
        p_tu["query_fc2"]["w"], p_tu["query_fc2"]["b"],
    ]
    su_logits, selected, su_num, emb_out, tu_logits, target = pl.pallas_call(
        functools.partial(_units_kernel, n_entity=N),
        out_shape=(jax.ShapeDtypeStruct((Bn, N + 1), jnp.float32),
                   jax.ShapeDtypeStruct((Bn, 1), jnp.int32),
                   jax.ShapeDtypeStruct((Bn, 1), jnp.int32),
                   jax.ShapeDtypeStruct((Bn, GATE_DIM), jnp.float32),
                   jax.ShapeDtypeStruct((Bn, N), jnp.float32),
                   jax.ShapeDtypeStruct((Bn, 1), jnp.int32)),
        in_specs=[_VMEM] * len(args),
        out_specs=(_VMEM,) * 6,
    )(*args)
    extra_units = jnp.zeros((Bn, N), jnp.float32)
    return (su_logits[:, None, :], selected, emb_out, su_num[:, 0], extra_units,
            tu_logits, target[:, 0])


# ------------------------------- kernel 4: location head --------------------------------
def _location_kernel(emb_ref, map_ref, pw_ref, pb_ref, cw_ref, cb_ref,
                     logit_ref, loc_ref):
    # TODO(synk): real LocationHead stacks gated ResBlocks + transposed-conv upsampling
    # over every map_skip level; here only the last skip + 1x1 conv readout is used.
    emb = emb_ref[...]                                        # (B, GATE)
    m = map_ref[...]                                          # (B, C, H*W) channel-major
    e = jnp.dot(emb, pw_ref[...], preferred_element_type=jnp.float32) + pb_ref[...]  # (B, C)
    x = jnp.maximum(m + e[:, :, None], 0.0)                   # (B, C, H*W)
    w3 = cw_ref[...][:, :, None]                              # (1, C, 1)
    logits = jnp.sum(x * w3, axis=1) + cb_ref[0, 0]           # lane-dense (B, H*W)
    logit_ref[...] = logits
    loc_ref[...] = _argmax_keepdims(logits)


def location_head(p, emb, map_skip):
    m = map_skip[-1]                                          # (B, H, W, C) NHWC
    Bm, H, W, C = m.shape
    m_chw = jnp.transpose(m, (0, 3, 1, 2)).reshape(Bm, C, H * W)   # channel-major
    logits, loc = pl.pallas_call(
        _location_kernel,
        out_shape=(jax.ShapeDtypeStruct((Bm, H * W), jnp.float32),
                   jax.ShapeDtypeStruct((Bm, 1), jnp.int32)),
        in_specs=[_VMEM, _VMEM, _VMEM, _VMEM, _VMEM, _SMEM],  # conv bias scalar in SMEM
        out_specs=(_VMEM, _VMEM),
    )(emb, m_chw, p["proj"]["w"], p["proj"]["b"], p["conv_w"], p["conv_b"])
    return logits, loc[:, 0]


# ----------------------------------- Policy.forward -------------------------------------
def policy_forward(params, lstm_output, entity_embeddings, map_skip, scalar_context, entity_num):
    action = {}
    logit = {}
    logit["action_type"], action["action_type"], emb = action_type_head(
        params["action_type"], lstm_output, scalar_context)
    (logit["delay"], action["delay"],
     logit["queued"], action["queued"], emb) = delay_queued_heads(
        params["delay"], params["queued"], emb)
    su_mask = SELECTED_UNITS_MASK[action["action_type"]]
    (logit["selected_units"], action["selected_units"], emb,
     selected_units_num, extra_units,
     logit["target_unit"], action["target_unit"]) = units_heads(
        params["selected_units"], params["target_unit"],
        emb, entity_embeddings, entity_num, su_mask)
    logit["target_location"], action["target_location"] = location_head(
        params["location"], emb, map_skip)
    return action, selected_units_num, logit, extra_units


# ------------------------------------- parameters ---------------------------------------
def _init_fc(key, din, dout):
    w = jax.random.normal(key, (din, dout), jnp.float32) * (1.0 / (din ** 0.5))
    b = jnp.zeros((1, dout), jnp.float32)
    return {"w": w, "b": b}


def init_params(key):
    keys = iter(jax.random.split(key, 64))

    def fc(din, dout):
        return _init_fc(next(keys), din, dout)

    def glu_p(din, dctx, dout):
        return {"gate": fc(dctx, dout), "val": fc(din, dout)}

    params = {
        "action_type": {
            "proj": fc(LSTM_DIM, RES_DIM),
            "res": [{"fc1": fc(RES_DIM, RES_DIM), "fc2": fc(RES_DIM, RES_DIM)}
                    for _ in range(RES_NUM)],
            "glu_logit": glu_p(RES_DIM, CONTEXT_DIM, ACTION_NUM),
            "map_fc1": fc(ACTION_NUM, ACTION_MAP_DIM),
            "map_fc2": fc(ACTION_MAP_DIM, ACTION_MAP_DIM),
            "glu1": glu_p(ACTION_MAP_DIM, CONTEXT_DIM, GATE_DIM),
            "glu2": glu_p(LSTM_DIM, CONTEXT_DIM, GATE_DIM),
        },
        "delay": {
            "fc1": fc(GATE_DIM, DELAY_DECODE),
            "fc2": fc(DELAY_DECODE, DELAY_DECODE),
            "fc3": fc(DELAY_DECODE, DELAY_DIM),
            "embed_fc1": fc(DELAY_DIM, DELAY_MAP_DIM),
            "embed_fc2": fc(DELAY_MAP_DIM, GATE_DIM),
        },
        "queued": {
            "fc1": fc(GATE_DIM, QUEUED_DECODE),
            "fc2": fc(QUEUED_DECODE, QUEUED_DECODE),
            "fc3": fc(QUEUED_DECODE, QUEUED_DIM),
            "embed_fc1": fc(QUEUED_DIM, QUEUED_MAP_DIM),
            "embed_fc2": fc(QUEUED_MAP_DIM, GATE_DIM),
        },
        "selected_units": {
            "key_fc": fc(ENTITY_DIM, KEY_DIM),
            "query_fc1": fc(GATE_DIM, KEY_DIM),
            "query_fc2": fc(KEY_DIM, KEY_DIM),
            "end_fc": fc(GATE_DIM, 1),
            "emb_fc": fc(KEY_DIM, GATE_DIM),
        },
        "target_unit": {
            "key_fc": fc(ENTITY_DIM, KEY_DIM),
            "query_fc1": fc(GATE_DIM, KEY_DIM),
            "query_fc2": fc(KEY_DIM, KEY_DIM),
        },
        "location": {
            "proj": fc(GATE_DIM, MAP_C),
            "conv_w": jax.random.normal(next(keys), (1, MAP_C), jnp.float32) * (1.0 / MAP_C ** 0.5),
            "conv_b": jnp.zeros((1, 1), jnp.float32),
        },
    }
    return params


# ----------------------------------------- main ------------------------------------------
if __name__ == "__main__":
    root = jax.random.PRNGKey(0)
    kp, k1, k2, k3, k4, k5 = jax.random.split(root, 6)
    params = init_params(kp)

    lstm_output = jax.random.normal(k1, (B, LSTM_DIM), jnp.float32)
    scalar_context = jax.random.normal(k2, (B, CONTEXT_DIM), jnp.float32)
    entity_embeddings = jax.random.normal(k3, (B, ENTITY_N, ENTITY_DIM), jnp.float32)
    map_skip = [
        jax.random.normal(k4, (B, MAP_H, MAP_W, MAP_C), jnp.float32),
        jax.random.normal(k5, (B, MAP_H, MAP_W, MAP_C), jnp.float32),
    ]
    entity_num = jnp.array([5, ENTITY_N], jnp.int32)

    fwd = jax.jit(policy_forward)
    out = fwd(params, lstm_output, entity_embeddings, map_skip, scalar_context, entity_num)
    jax.tree_util.tree_map(lambda a: a.block_until_ready(), out)

    action, selected_units_num, logit, extra_units = out
    assert logit["action_type"].shape == (B, ACTION_NUM)
    assert logit["delay"].shape == (B, DELAY_DIM)
    assert logit["queued"].shape == (B, QUEUED_DIM)
    assert logit["selected_units"].shape == (B, 1, ENTITY_N + 1)
    assert logit["target_unit"].shape == (B, ENTITY_N)
    assert logit["target_location"].shape == (B, MAP_H * MAP_W)
    assert action["action_type"].shape == (B,)
    assert selected_units_num.shape == (B,)
    assert extra_units.shape == (B, ENTITY_N)
    print("KERNEL_OK")
</pallas_src>

<mosaic_0001>
module attributes {stable_mosaic.version = 11 : i64} {
  func.func @_action_type_kernel(%arg0: memref<2x32xf32, #tpu.memory_space<vmem>>, %arg1: memref<2x16xf32, #tpu.memory_space<vmem>>, %arg2: memref<32x32xf32, #tpu.memory_space<vmem>>, %arg3: memref<1x32xf32, #tpu.memory_space<vmem>>, %arg4: memref<32x32xf32, #tpu.memory_space<vmem>>, %arg5: memref<1x32xf32, #tpu.memory_space<vmem>>, %arg6: memref<32x32xf32, #tpu.memory_space<vmem>>, %arg7: memref<1x32xf32, #tpu.memory_space<vmem>>, %arg8: memref<32x32xf32, #tpu.memory_space<vmem>>, %arg9: memref<1x32xf32, #tpu.memory_space<vmem>>, %arg10: memref<32x32xf32, #tpu.memory_space<vmem>>, %arg11: memref<1x32xf32, #tpu.memory_space<vmem>>, %arg12: memref<16x32xf32, #tpu.memory_space<vmem>>, %arg13: memref<1x32xf32, #tpu.memory_space<vmem>>, %arg14: memref<32x32xf32, #tpu.memory_space<vmem>>, %arg15: memref<1x32xf32, #tpu.memory_space<vmem>>, %arg16: memref<32x32xf32, #tpu.memory_space<vmem>>, %arg17: memref<1x32xf32, #tpu.memory_space<vmem>>, %arg18: memref<32x32xf32, #tpu.memory_space<vmem>>, %arg19: memref<1x32xf32, #tpu.memory_space<vmem>>, %arg20: memref<16x32xf32, #tpu.memory_space<vmem>>, %arg21: memref<1x32xf32, #tpu.memory_space<vmem>>, %arg22: memref<32x32xf32, #tpu.memory_space<vmem>>, %arg23: memref<1x32xf32, #tpu.memory_space<vmem>>, %arg24: memref<16x32xf32, #tpu.memory_space<vmem>>, %arg25: memref<1x32xf32, #tpu.memory_space<vmem>>, %arg26: memref<32x32xf32, #tpu.memory_space<vmem>>, %arg27: memref<1x32xf32, #tpu.memory_space<vmem>>, %arg28: memref<2x32xf32, #tpu.memory_space<vmem>>, %arg29: memref<2x1xi32, #tpu.memory_space<vmem>>, %arg30: memref<2x32xf32, #tpu.memory_space<vmem>>) attributes {dimension_semantics = [], scalar_prefetch = 0 : i64, scratch_operands = 0 : i64, tpu.core_type = #tpu.core_type<tc>} {
    %c0 = arith.constant 0 : index
    %c0_0 = arith.constant 0 : index
    %0 = vector.load %arg0[%c0, %c0_0] : memref<2x32xf32, #tpu.memory_space<vmem>>, vector<2x32xf32>
    %c0_1 = arith.constant 0 : index
    %c0_2 = arith.constant 0 : index
    %1 = vector.load %arg1[%c0_1, %c0_2] : memref<2x16xf32, #tpu.memory_space<vmem>>, vector<2x16xf32>
    %c0_3 = arith.constant 0 : index
    %c0_4 = arith.constant 0 : index
    %2 = vector.load %arg2[%c0_3, %c0_4] : memref<32x32xf32, #tpu.memory_space<vmem>>, vector<32x32xf32>
    %cst = arith.constant dense<0.000000e+00> : vector<2x32xf32>
    %3 = tpu.matmul %0, %2, %cst {dimension_numbers = #tpu.dot_dimension_numbers<[1], [0], [0], [1], [0, 0, 1, 1], [], []>} : vector<2x32xf32>, vector<32x32xf32>, vector<2x32xf32> -> vector<2x32xf32>
    %c0_5 = arith.constant 0 : index
    %c0_6 = arith.constant 0 : index
    %4 = vector.load %arg3[%c0_5, %c0_6] : memref<1x32xf32, #tpu.memory_space<vmem>>, vector<1x32xf32>
    %5 = vector.broadcast %4 : vector<1x32xf32> to vector<2x32xf32>
    %6 = arith.addf %3, %5 : vector<2x32xf32>
    %cst_7 = arith.constant 0.000000e+00 : f32
    %7 = vector.broadcast %cst_7 : f32 to vector<2x32xf32>
    %8 = arith.maximumf %6, %7 : vector<2x32xf32>
    %c0_8 = arith.constant 0 : index
    %c0_9 = arith.constant 0 : index
    %9 = vector.load %arg4[%c0_8, %c0_9] : memref<32x32xf32, #tpu.memory_space<vmem>>, vector<32x32xf32>
    %cst_10 = arith.constant dense<0.000000e+00> : vector<2x32xf32>
    %10 = tpu.matmul %8, %9, %cst_10 {dimension_numbers = #tpu.dot_dimension_numbers<[1], [0], [0], [1], [0, 0, 1, 1], [], []>} : vector<2x32xf32>, vector<32x32xf32>, vector<2x32xf32> -> vector<2x32xf32>
    %c0_11 = arith.constant 0 : index
    %c0_12 = arith.constant 0 : index
    %11 = vector.load %arg5[%c0_11, %c0_12] : memref<1x32xf32, #tpu.memory_space<vmem>>, vector<1x32xf32>
    %12 = vector.broadcast %11 : vector<1x32xf32> to vector<2x32xf32>
    %13 = arith.addf %10, %12 : vector<2x32xf32>
    %cst_13 = arith.constant 0.000000e+00 : f32
    %14 = vector.broadcast %cst_13 : f32 to vector<2x32xf32>
    %15 = arith.maximumf %13, %14 : vector<2x32xf32>
    %c0_14 = arith.constant 0 : index
    %c0_15 = arith.constant 0 : index
    %16 = vector.load %arg6[%c0_14, %c0_15] : memref<32x32xf32, #tpu.memory_space<vmem>>, vector<32x32xf32>
    %cst_16 = arith.constant dense<0.000000e+00> : vector<2x32xf32>
    %17 = tpu.matmul %15, %16, %cst_16 {dimension_numbers = #tpu.dot_dimension_numbers<[1], [0], [0], [1], [0, 0, 1, 1], [], []>} : vector<2x32xf32>, vector<32x32xf32>, vector<2x32xf32> -> vector<2x32xf32>
    %c0_17 = arith.constant 0 : index
    %c0_18 = arith.constant 0 : index
    %18 = vector.load %arg7[%c0_17, %c0_18] : memref<1x32xf32, #tpu.memory_space<vmem>>, vector<1x32xf32>
    %19 = vector.broadcast %18 : vector<1x32xf32> to vector<2x32xf32>
    %20 = arith.addf %17, %19 : vector<2x32xf32>
    %21 = arith.addf %20, %8 : vector<2x32xf32>
    %cst_19 = arith.constant 0.000000e+00 : f32
    %22 = vector.broadcast %cst_19 : f32 to vector<2x32xf32>
    %23 = arith.maximumf %21, %22 : vector<2x32xf32>
    %c0_20 = arith.constant 0 : index
    %c0_21 = arith.constant 0 : index
    %24 = vector.load %arg8[%c0_20, %c0_21] : memref<32x32xf32, #tpu.memory_space<vmem>>, vector<32x32xf32>
    %cst_22 = arith.constant dense<0.000000e+00> : vector<2x32xf32>
    %25 = tpu.matmul %23, %24, %cst_22 {dimension_numbers = #tpu.dot_dimension_numbers<[1], [0], [0], [1], [0, 0, 1, 1], [], []>} : vector<2x32xf32>, vector<32x32xf32>, vector<2x32xf32> -> vector<2x32xf32>
    %c0_23 = arith.constant 0 : index
    %c0_24 = arith.constant 0 : index
    %26 = vector.load %arg9[%c0_23, %c0_24] : memref<1x32xf32, #tpu.memory_space<vmem>>, vector<1x32xf32>
    %27 = vector.broadcast %26 : vector<1x32xf32> to vector<2x32xf32>
    %28 = arith.addf %25, %27 : vector<2x32xf32>
    %cst_25 = arith.constant 0.000000e+00 : f32
    %29 = vector.broadcast %cst_25 : f32 to vector<2x32xf32>
    %30 = arith.maximumf %28, %29 : vector<2x32xf32>
    %c0_26 = arith.constant 0 : index
    %c0_27 = arith.constant 0 : index
    %31 = vector.load %arg10[%c0_26, %c0_27] : memref<32x32xf32, #tpu.memory_space<vmem>>, vector<32x32xf32>
    %cst_28 = arith.constant dense<0.000000e+00> : vector<2x32xf32>
    %32 = tpu.matmul %30, %31, %cst_28 {dimension_numbers = #tpu.dot_dimension_numbers<[1], [0], [0], [1], [0, 0, 1, 1], [], []>} : vector<2x32xf32>, vector<32x32xf32>, vector<2x32xf32> -> vector<2x32xf32>
    %c0_29 = arith.constant 0 : index
    %c0_30 = arith.constant 0 : index
    %33 = vector.load %arg11[%c0_29, %c0_30] : memref<1x32xf32, #tpu.memory_space<vmem>>, vector<1x32xf32>
    %34 = vector.broadcast %33 : vector<1x32xf32> to vector<2x32xf32>
    %35 = arith.addf %32, %34 : vector<2x32xf32>
    %36 = arith.addf %35, %23 : vector<2x32xf32>
    %cst_31 = arith.constant 0.000000e+00 : f32
    %37 = vector.broadcast %cst_31 : f32 to vector<2x32xf32>
    %38 = arith.maximumf %36, %37 : vector<2x32xf32>
    %c0_32 = arith.constant 0 : index
    %c0_33 = arith.constant 0 : index
    %39 = vector.load %arg12[%c0_32, %c0_33] : memref<16x32xf32, #tpu.memory_space<vmem>>, vector<16x32xf32>
    %cst_34 = arith.constant dense<0.000000e+00> : vector<2x32xf32>
    %40 = tpu.matmul %1, %39, %cst_34 {dimension_numbers = #tpu.dot_dimension_numbers<[1], [0], [0], [1], [0, 0, 1, 1], [], []>} : vector<2x16xf32>, vector<16x32xf32>, vector<2x32xf32> -> vector<2x32xf32>
    %c0_35 = arith.constant 0 : index
    %c0_36 = arith.constant 0 : index
    %41 = vector.load %arg13[%c0_35, %c0_36] : memref<1x32xf32, #tpu.memory_space<vmem>>, vector<1x32xf32>
    %42 = vector.broadcast %41 : vector<1x32xf32> to vector<2x32xf32>
    %43 = arith.addf %40, %42 : vector<2x32xf32>
    %44 = arith.negf %43 : vector<2x32xf32>
    %45 = math.exp %44 : vector<2x32xf32>
    %cst_37 = arith.constant 1.000000e+00 : f32
    %46 = vector.broadcast %cst_37 : f32 to vector<2x32xf32>
    %47 = arith.addf %46, %45 : vector<2x32xf32>
    %48 = arith.divf %46, %47 : vector<2x32xf32>
    %c0_38 = arith.constant 0 : index
    %c0_39 = arith.constant 0 : index
    %49 = vector.load %arg14[%c0_38, %c0_39] : memref<32x32xf32, #tpu.memory_space<vmem>>, vector<32x32xf32>
    %cst_40 = arith.constant dense<0.000000e+00> : vector<2x32xf32>
    %50 = tpu.matmul %38, %49, %cst_40 {dimension_numbers = #tpu.dot_dimension_numbers<[1], [0], [0], [1], [0, 0, 1, 1], [], []>} : vector<2x32xf32>, vector<32x32xf32>, vector<2x32xf32> -> vector<2x32xf32>
    %c0_41 = arith.constant 0 : index
    %c0_42 = arith.constant 0 : index
    %51 = vector.load %arg15[%c0_41, %c0_42] : memref<1x32xf32, #tpu.memory_space<vmem>>, vector<1x32xf32>
    %52 = vector.broadcast %51 : vector<1x32xf32> to vector<2x32xf32>
    %53 = arith.addf %50, %52 : vector<2x32xf32>
    %54 = arith.mulf %48, %53 : vector<2x32xf32>
    %cst_43 = arith.constant dense<0xFF800000> : vector<2xf32>
    %55 = vector.multi_reduction <maximumf>, %54, %cst_43 [1] : vector<2x32xf32> to vector<2xf32>
    %56 = vector.shape_cast %55 : vector<2xf32> to vector<2x1xf32>
    %57 = tpu.iota {dimensions = array<i32: 1>} : vector<2x32xi32>
    %58 = vector.broadcast %56 : vector<2x1xf32> to vector<2x32xf32>
    %59 = arith.cmpf oge, %54, %58 : vector<2x32xf32>
    %c32_i32 = arith.constant 32 : i32
    %60 = vector.broadcast %c32_i32 : i32 to vector<2x32xi32>
    %61 = arith.select %59, %57, %60 : vector<2x32xi1>, vector<2x32xi32>
    %cst_44 = arith.constant dense<2147483647> : vector<2xi32>
    %62 = vector.multi_reduction <minsi>, %61, %cst_44 [1] : vector<2x32xi32> to vector<2xi32>
    %63 = vector.shape_cast %62 : vector<2xi32> to vector<2x1xi32>
    %64 = tpu.iota {dimensions = array<i32: 1>} : vector<2x32xi32>
    %65 = vector.broadcast %63 : vector<2x1xi32> to vector<2x32xi32>
    %66 = arith.cmpi eq, %64, %65 : vector<2x32xi32>
    %67 = arith.extui %66 : vector<2x32xi1> to vector<2x32xi32>
    %68 = arith.sitofp %67 : vector<2x32xi32> to vector<2x32xf32>
    %c0_45 = arith.constant 0 : index
    %c0_46 = arith.constant 0 : index
    %69 = vector.load %arg16[%c0_45, %c0_46] : memref<32x32xf32, #tpu.memory_space<vmem>>, vector<32x32xf32>
    %cst_47 = arith.constant dense<0.000000e+00> : vector<2x32xf32>
    %70 = tpu.matmul %68, %69, %cst_47 {dimension_numbers = #tpu.dot_dimension_numbers<[1], [0], [0], [1], [0, 0, 1, 1], [], []>} : vector<2x32xf32>, vector<32x32xf32>, vector<2x32xf32> -> vector<2x32xf32>
    %c0_48 = arith.constant 0 : index
    %c0_49 = arith.constant 0 : index
    %71 = vector.load %arg17[%c0_48, %c0_49] : memref<1x32xf32, #tpu.memory_space<vmem>>, vector<1x32xf32>
    %72 = vector.broadcast %71 : vector<1x32xf32> to vector<2x32xf32>
    %73 = arith.addf %70, %72 : vector<2x32xf32>
    %cst_50 = arith.constant 0.000000e+00 : f32
    %74 = vector.broadcast %cst_50 : f32 to vector<2x32xf32>
    %75 = arith.maximumf %73, %74 : vector<2x32xf32>
    %c0_51 = arith.constant 0 : index
    %c0_52 = arith.constant 0 : index
    %76 = vector.load %arg18[%c0_51, %c0_52] : memref<32x32xf32, #tpu.memory_space<vmem>>, vector<32x32xf32>
    %cst_53 = arith.constant dense<0.000000e+00> : vector<2x32xf32>
    %77 = tpu.matmul %75, %76, %cst_53 {dimension_numbers = #tpu.dot_dimension_numbers<[1], [0], [0], [1], [0, 0, 1, 1], [], []>} : vector<2x32xf32>, vector<32x32xf32>, vector<2x32xf32> -> vector<2x32xf32>
    %c0_54 = arith.constant 0 : index
    %c0_55 = arith.constant 0 : index
    %78 = vector.load %arg19[%c0_54, %c0_55] : memref<1x32xf32, #tpu.memory_space<vmem>>, vector<1x32xf32>
    %79 = vector.broadcast %78 : vector<1x32xf32> to vector<2x32xf32>
    %80 = arith.addf %77, %79 : vector<2x32xf32>
    %c0_56 = arith.constant 0 : index
    %c0_57 = arith.constant 0 : index
    %81 = vector.load %arg20[%c0_56, %c0_57] : memref<16x32xf32, #tpu.memory_space<vmem>>, vector<16x32xf32>
    %cst_58 = arith.constant dense<0.000000e+00> : vector<2x32xf32>
    %82 = tpu.matmul %1, %81, %cst_58 {dimension_numbers = #tpu.dot_dimension_numbers<[1], [0], [0], [1], [0, 0, 1, 1], [], []>} : vector<2x16xf32>, vector<16x32xf32>, vector<2x32xf32> -> vector<2x32xf32>
    %c0_59 = arith.constant 0 : index
    %c0_60 = arith.constant 0 : index
    %83 = vector.load %arg21[%c0_59, %c0_60] : memref<1x32xf32, #tpu.memory_space<vmem>>, vector<1x32xf32>
    %84 = vector.broadcast %83 : vector<1x32xf32> to vector<2x32xf32>
    %85 = arith.addf %82, %84 : vector<2x32xf32>
    %86 = arith.negf %85 : vector<2x32xf32>
    %87 = math.exp %86 : vector<2x32xf32>
    %cst_61 = arith.constant 1.000000e+00 : f32
    %88 = vector.broadcast %cst_61 : f32 to vector<2x32xf32>
    %89 = arith.addf %88, %87 : vector<2x32xf32>
    %90 = arith.divf %88, %89 : vector<2x32xf32>
    %c0_62 = arith.constant 0 : index
    %c0_63 = arith.constant 0 : index
    %91 = vector.load %arg22[%c0_62, %c0_63] : memref<32x32xf32, #tpu.memory_space<vmem>>, vector<32x32xf32>
    %cst_64 = arith.constant dense<0.000000e+00> : vector<2x32xf32>
    %92 = tpu.matmul %80, %91, %cst_64 {dimension_numbers = #tpu.dot_dimension_numbers<[1], [0], [0], [1], [0, 0, 1, 1], [], []>} : vector<2x32xf32>, vector<32x32xf32>, vector<2x32xf32> -> vector<2x32xf32>
    %c0_65 = arith.constant 0 : index
    %c0_66 = arith.constant 0 : index
    %93 = vector.load %arg23[%c0_65, %c0_66] : memref<1x32xf32, #tpu.memory_space<vmem>>, vector<1x32xf32>
    %94 = vector.broadcast %93 : vector<1x32xf32> to vector<2x32xf32>
    %95 = arith.addf %92, %94 : vector<2x32xf32>
    %96 = arith.mulf %90, %95 : vector<2x32xf32>
    %c0_67 = arith.constant 0 : index
    %c0_68 = arith.constant 0 : index
    %97 = vector.load %arg24[%c0_67, %c0_68] : memref<16x32xf32, #tpu.memory_space<vmem>>, vector<16x32xf32>
    %cst_69 = arith.constant dense<0.000000e+00> : vector<2x32xf32>
    %98 = tpu.matmul %1, %97, %cst_69 {dimension_numbers = #tpu.dot_dimension_numbers<[1], [0], [0], [1], [0, 0, 1, 1], [], []>} : vector<2x16xf32>, vector<16x32xf32>, vector<2x32xf32> -> vector<2x32xf32>
    %c0_70 = arith.constant 0 : index
    %c0_71 = arith.constant 0 : index
    %99 = vector.load %arg25[%c0_70, %c0_71] : memref<1x32xf32, #tpu.memory_space<vmem>>, vector<1x32xf32>
    %100 = vector.broadcast %99 : vector<1x32xf32> to vector<2x32xf32>
    %101 = arith.addf %98, %100 : vector<2x32xf32>
    %102 = arith.negf %101 : vector<2x32xf32>
    %103 = math.exp %102 : vector<2x32xf32>
    %cst_72 = arith.constant 1.000000e+00 : f32
    %104 = vector.broadcast %cst_72 : f32 to vector<2x32xf32>
    %105 = arith.addf %104, %103 : vector<2x32xf32>
    %106 = arith.divf %104, %105 : vector<2x32xf32>
    %c0_73 = arith.constant 0 : index
    %c0_74 = arith.constant 0 : index
    %107 = vector.load %arg26[%c0_73, %c0_74] : memref<32x32xf32, #tpu.memory_space<vmem>>, vector<32x32xf32>
    %cst_75 = arith.constant dense<0.000000e+00> : vector<2x32xf32>
    %108 = tpu.matmul %0, %107, %cst_75 {dimension_numbers = #tpu.dot_dimension_numbers<[1], [0], [0], [1], [0, 0, 1, 1], [], []>} : vector<2x32xf32>, vector<32x32xf32>, vector<2x32xf32> -> vector<2x32xf32>
    %c0_76 = arith.constant 0 : index
    %c0_77 = arith.constant 0 : index
    %109 = vector.load %arg27[%c0_76, %c0_77] : memref<1x32xf32, #tpu.memory_space<vmem>>, vector<1x32xf32>
    %110 = vector.broadcast %109 : vector<1x32xf32> to vector<2x32xf32>
    %111 = arith.addf %108, %110 : vector<2x32xf32>
    %112 = arith.mulf %106, %111 : vector<2x32xf32>
    %c0_78 = arith.constant 0 : index
    %c0_79 = arith.constant 0 : index
    %113 = vector.load %arg28[%c0_78, %c0_79] : memref<2x32xf32, #tpu.memory_space<vmem>>, vector<2x32xf32>
    tpu.vector_store %arg28[%c0_78, %c0_79], %54 {strides = array<i32>} : memref<2x32xf32, #tpu.memory_space<vmem>>, vector<2x32xf32>,
    %c0_80 = arith.constant 0 : index
    %c0_81 = arith.constant 0 : index
    %114 = vector.load %arg29[%c0_80, %c0_81] : memref<2x1xi32, #tpu.memory_space<vmem>>, vector<2x1xi32>
    tpu.vector_store %arg29[%c0_80, %c0_81], %63 {strides = array<i32>} : memref<2x1xi32, #tpu.memory_space<vmem>>, vector<2x1xi32>,
    %115 = arith.addf %96, %112 : vector<2x32xf32>
    %c0_82 = arith.constant 0 : index
    %c0_83 = arith.constant 0 : index
    %116 = vector.load %arg30[%c0_82, %c0_83] : memref<2x32xf32, #tpu.memory_space<vmem>>, vector<2x32xf32>
    tpu.vector_store %arg30[%c0_82, %c0_83], %115 {strides = array<i32>} : memref<2x32xf32, #tpu.memory_space<vmem>>, vector<2x32xf32>,
    return
  }
}

module attributes {stable_mosaic.version = 11 : i64} {
  func.func @_delay_queued_kernel(%arg0: memref<2x32xf32, #tpu.memory_space<vmem>>, %arg1: memref<32x32xf32, #tpu.memory_space<vmem>>, %arg2: memref<1x32xf32, #tpu.memory_space<vmem>>, %arg3: memref<32x32xf32, #tpu.memory_space<vmem>>, %arg4: memref<1x32xf32, #tpu.memory_space<vmem>>, %arg5: memref<32x16xf32, #tpu.memory_space<vmem>>, %arg6: memref<1x16xf32, #tpu.memory_space<vmem>>, %arg7: memref<16x32xf32, #tpu.memory_space<vmem>>, %arg8: memref<1x32xf32, #tpu.memory_space<vmem>>, %arg9: memref<32x32xf32, #tpu.memory_space<vmem>>, %arg10: memref<1x32xf32, #tpu.memory_space<vmem>>, %arg11: memref<32x32xf32, #tpu.memory_space<vmem>>, %arg12: memref<1x32xf32, #tpu.memory_space<vmem>>, %arg13: memref<32x32xf32, #tpu.memory_space<vmem>>, %arg14: memref<1x32xf32, #tpu.memory_space<vmem>>, %arg15: memref<32x2xf32, #tpu.memory_space<vmem>>, %arg16: memref<1x2xf32, #tpu.memory_space<vmem>>, %arg17: memref<2x32xf32, #tpu.memory_space<vmem>>, %arg18: memref<1x32xf32, #tpu.memory_space<vmem>>, %arg19: memref<32x32xf32, #tpu.memory_space<vmem>>, %arg20: memref<1x32xf32, #tpu.memory_space<vmem>>, %arg21: memref<2x16xf32, #tpu.memory_space<vmem>>, %arg22: memref<2x1xi32, #tpu.memory_space<vmem>>, %arg23: memref<2x2xf32, #tpu.memory_space<vmem>>, %arg24: memref<2x1xi32, #tpu.memory_space<vmem>>, %arg25: memref<2x32xf32, #tpu.memory_space<vmem>>) attributes {dimension_semantics = [], scalar_prefetch = 0 : i64, scratch_operands = 0 : i64, tpu.core_type = #tpu.core_type<tc>} {
    %c0 = arith.constant 0 : index
    %c0_0 = arith.constant 0 : index
    %0 = vector.load %arg0[%c0, %c0_0] : memref<2x32xf32, #tpu.memory_space<vmem>>, vector<2x32xf32>
    %c0_1 = arith.constant 0 : index
    %c0_2 = arith.constant 0 : index
    %1 = vector.load %arg1[%c0_1, %c0_2] : memref<32x32xf32, #tpu.memory_space<vmem>>, vector<32x32xf32>
    %cst = arith.constant dense<0.000000e+00> : vector<2x32xf32>
    %2 = tpu.matmul %0, %1, %cst {dimension_numbers = #tpu.dot_dimension_numbers<[1], [0], [0], [1], [0, 0, 1, 1], [], []>} : vector<2x32xf32>, vector<32x32xf32>, vector<2x32xf32> -> vector<2x32xf32>
    %c0_3 = arith.constant 0 : index
    %c0_4 = arith.constant 0 : index
    %3 = vector.load %arg2[%c0_3, %c0_4] : memref<1x32xf32, #tpu.memory_space<vmem>>, vector<1x32xf32>
    %4 = vector.broadcast %3 : vector<1x32xf32> to vector<2x32xf32>
    %5 = arith.addf %2, %4 : vector<2x32xf32>
    %cst_5 = arith.constant 0.000000e+00 : f32
    %6 = vector.broadcast %cst_5 : f32 to vector<2x32xf32>
    %7 = arith.maximumf %5, %6 : vector<2x32xf32>
    %c0_6 = arith.constant 0 : index
    %c0_7 = arith.constant 0 : index
    %8 = vector.load %arg3[%c0_6, %c0_7] : memref<32x32xf32, #tpu.memory_space<vmem>>, vector<32x32xf32>
    %cst_8 = arith.constant dense<0.000000e+00> : vector<2x32xf32>
    %9 = tpu.matmul %7, %8, %cst_8 {dimension_numbers = #tpu.dot_dimension_numbers<[1], [0], [0], [1], [0, 0, 1, 1], [], []>} : vector<2x32xf32>, vector<32x32xf32>, vector<2x32xf32> -> vector<2x32xf32>
    %c0_9 = arith.constant 0 : index
    %c0_10 = arith.constant 0 : index
    %10 = vector.load %arg4[%c0_9, %c0_10] : memref<1x32xf32, #tpu.memory_space<vmem>>, vector<1x32xf32>
    %11 = vector.broadcast %10 : vector<1x32xf32> to vector<2x32xf32>
    %12 = arith.addf %9, %11 : vector<2x32xf32>
    %cst_11 = arith.constant 0.000000e+00 : f32
    %13 = vector.broadcast %cst_11 : f32 to vector<2x32xf32>
    %14 = arith.maximumf %12, %13 : vector<2x32xf32>
    %c0_12 = arith.constant 0 : index
    %c0_13 = arith.constant 0 : index
    %15 = vector.load %arg5[%c0_12, %c0_13] : memref<32x16xf32, #tpu.memory_space<vmem>>, vector<32x16xf32>
    %cst_14 = arith.constant dense<0.000000e+00> : vector<2x16xf32>
    %16 = tpu.matmul %14, %15, %cst_14 {dimension_numbers = #tpu.dot_dimension_numbers<[1], [0], [0], [1], [0, 0, 1, 1], [], []>} : vector<2x32xf32>, vector<32x16xf32>, vector<2x16xf32> -> vector<2x16xf32>
    %c0_15 = arith.constant 0 : index
    %c0_16 = arith.constant 0 : index
    %17 = vector.load %arg6[%c0_15, %c0_16] : memref<1x16xf32, #tpu.memory_space<vmem>>, vector<1x16xf32>
    %18 = vector.broadcast %17 : vector<1x16xf32> to vector<2x16xf32>
    %19 = arith.addf %16, %18 : vector<2x16xf32>
    %cst_17 = arith.constant dense<0xFF800000> : vector<2xf32>
    %20 = vector.multi_reduction <maximumf>, %19, %cst_17 [1] : vector<2x16xf32> to vector<2xf32>
    %21 = vector.shape_cast %20 : vector<2xf32> to vector<2x1xf32>
    %22 = tpu.iota {dimensions = array<i32: 1>} : vector<2x16xi32>
    %23 = vector.broadcast %21 : vector<2x1xf32> to vector<2x16xf32>
    %24 = arith.cmpf oge, %19, %23 : vector<2x16xf32>
    %c16_i32 = arith.constant 16 : i32
    %25 = vector.broadcast %c16_i32 : i32 to vector<2x16xi32>
    %26 = arith.select %24, %22, %25 : vector<2x16xi1>, vector<2x16xi32>
    %cst_18 = arith.constant dense<2147483647> : vector<2xi32>
    %27 = vector.multi_reduction <minsi>, %26, %cst_18 [1] : vector<2x16xi32> to vector<2xi32>
    %28 = vector.shape_cast %27 : vector<2xi32> to vector<2x1xi32>
    %29 = tpu.iota {dimensions = array<i32: 1>} : vector<2x16xi32>
    %30 = vector.broadcast %28 : vector<2x1xi32> to vector<2x16xi32>
    %31 = arith.cmpi eq, %29, %30 : vector<2x16xi32>
    %32 = arith.extui %31 : vector<2x16xi1> to vector<2x16xi32>
    %33 = arith.sitofp %32 : vector<2x16xi32> to vector<2x16xf32>
    %c0_19 = arith.constant 0 : index
    %c0_20 = arith.constant 0 : index
    %34 = vector.load %arg7[%c0_19, %c0_20] : memref<16x32xf32, #tpu.memory_space<vmem>>, vector<16x32xf32>
    %cst_21 = arith.constant dense<0.000000e+00> : vector<2x32xf32>
    %35 = tpu.matmul %33, %34, %cst_21 {dimension_numbers = #tpu.dot_dimension_numbers<[1], [0], [0], [1], [0, 0, 1, 1], [], []>} : vector<2x16xf32>, vector<16x32xf32>, vector<2x32xf32> -> vector<2x32xf32>
    %c0_22 = arith.constant 0 : index
    %c0_23 = arith.constant 0 : index
    %36 = vector.load %arg8[%c0_22, %c0_23] : memref<1x32xf32, #tpu.memory_space<vmem>>, vector<1x32xf32>
    %37 = vector.broadcast %36 : vector<1x32xf32> to vector<2x32xf32>
    %38 = arith.addf %35, %37 : vector<2x32xf32>
    %cst_24 = arith.constant 0.000000e+00 : f32
    %39 = vector.broadcast %cst_24 : f32 to vector<2x32xf32>
    %40 = arith.maximumf %38, %39 : vector<2x32xf32>
    %c0_25 = arith.constant 0 : index
    %c0_26 = arith.constant 0 : index
    %41 = vector.load %arg9[%c0_25, %c0_26] : memref<32x32xf32, #tpu.memory_space<vmem>>, vector<32x32xf32>
    %cst_27 = arith.constant dense<0.000000e+00> : vector<2x32xf32>
    %42 = tpu.matmul %40, %41, %cst_27 {dimension_numbers = #tpu.dot_dimension_numbers<[1], [0], [0], [1], [0, 0, 1, 1], [], []>} : vector<2x32xf32>, vector<32x32xf32>, vector<2x32xf32> -> vector<2x32xf32>
    %c0_28 = arith.constant 0 : index
    %c0_29 = arith.constant 0 : index
    %43 = vector.load %arg10[%c0_28, %c0_29] : memref<1x32xf32, #tpu.memory_space<vmem>>, vector<1x32xf32>
    %44 = vector.broadcast %43 : vector<1x32xf32> to vector<2x32xf32>
    %45 = arith.addf %42, %44 : vector<2x32xf32>
    %46 = arith.addf %0, %45 : vector<2x32xf32>
    %c0_30 = arith.constant 0 : index
    %c0_31 = arith.constant 0 : index
    %47 = vector.load %arg11[%c0_30, %c0_31] : memref<32x32xf32, #tpu.memory_space<vmem>>, vector<32x32xf32>
    %cst_32 = arith.constant dense<0.000000e+00> : vector<2x32xf32>
    %48 = tpu.matmul %46, %47, %cst_32 {dimension_numbers = #tpu.dot_dimension_numbers<[1], [0], [0], [1], [0, 0, 1, 1], [], []>} : vector<2x32xf32>, vector<32x32xf32>, vector<2x32xf32> -> vector<2x32xf32>
    %c0_33 = arith.constant 0 : index
    %c0_34 = arith.constant 0 : index
    %49 = vector.load %arg12[%c0_33, %c0_34] : memref<1x32xf32, #tpu.memory_space<vmem>>, vector<1x32xf32>
    %50 = vector.broadcast %49 : vector<1x32xf32> to vector<2x32xf32>
    %51 = arith.addf %48, %50 : vector<2x32xf32>
    %cst_35 = arith.constant 0.000000e+00 : f32
    %52 = vector.broadcast %cst_35 : f32 to vector<2x32xf32>
    %53 = arith.maximumf %51, %52 : vector<2x32xf32>
    %c0_36 = arith.constant 0 : index
    %c0_37 = arith.constant 0 : index
    %54 = vector.load %arg13[%c0_36, %c0_37] : memref<32x32xf32, #tpu.memory_space<vmem>>, vector<32x32xf32>
    %cst_38 = arith.constant dense<0.000000e+00> : vector<2x32xf32>
    %55 = tpu.matmul %53, %54, %cst_38 {dimension_numbers = #tpu.dot_dimension_numbers<[1], [0], [0], [1], [0, 0, 1, 1], [], []>} : vector<2x32xf32>, vector<32x32xf32>, vector<2x32xf32> -> vector<2x32xf32>
    %c0_39 = arith.constant 0 : index
    %c0_40 = arith.constant 0 : index
    %56 = vector.load %arg14[%c0_39, %c0_40] : memref<1x32xf32, #tpu.memory_space<vmem>>, vector<1x32xf32>
    %57 = vector.broadcast %56 : vector<1x32xf32> to vector<2x32xf32>
    %58 = arith.addf %55, %57 : vector<2x32xf32>
    %cst_41 = arith.constant 0.000000e+00 : f32
    %59 = vector.broadcast %cst_41 : f32 to vector<2x32xf32>
    %60 = arith.maximumf %58, %59 : vector<2x32xf32>
    %c0_42 = arith.constant 0 : index
    %c0_43 = arith.constant 0 : index
    %61 = vector.load %arg15[%c0_42, %c0_43] : memref<32x2xf32, #tpu.memory_space<vmem>>, vector<32x2xf32>
    %cst_44 = arith.constant dense<0.000000e+00> : vector<2x2xf32>
    %62 = tpu.matmul %60, %61, %cst_44 {dimension_numbers = #tpu.dot_dimension_numbers<[1], [0], [0], [1], [0, 0, 1, 1], [], []>} : vector<2x32xf32>, vector<32x2xf32>, vector<2x2xf32> -> vector<2x2xf32>
    %c0_45 = arith.constant 0 : index
    %c0_46 = arith.constant 0 : index
    %63 = vector.load %arg16[%c0_45, %c0_46] : memref<1x2xf32, #tpu.memory_space<vmem>>, vector<1x2xf32>
    %64 = vector.broadcast %63 : vector<1x2xf32> to vector<2x2xf32>
    %65 = arith.addf %62, %64 : vector<2x2xf32>
    %cst_47 = arith.constant dense<0xFF800000> : vector<2xf32>
    %66 = vector.multi_reduction <maximumf>, %65, %cst_47 [1] : vector<2x2xf32> to vector<2xf32>
    %67 = vector.shape_cast %66 : vector<2xf32> to vector<2x1xf32>
    %68 = tpu.iota {dimensions = array<i32: 1>} : vector<2x2xi32>
    %69 = vector.broadcast %67 : vector<2x1xf32> to vector<2x2xf32>
    %70 = arith.cmpf oge, %65, %69 : vector<2x2xf32>
    %c2_i32 = arith.constant 2 : i32
    %71 = vector.broadcast %c2_i32 : i32 to vector<2x2xi32>
    %72 = arith.select %70, %68, %71 : vector<2x2xi1>, vector<2x2xi32>
    %cst_48 = arith.constant dense<2147483647> : vector<2xi32>
    %73 = vector.multi_reduction <minsi>, %72, %cst_48 [1] : vector<2x2xi32> to vector<2xi32>
    %74 = vector.shape_cast %73 : vector<2xi32> to vector<2x1xi32>
    %75 = tpu.iota {dimensions = array<i32: 1>} : vector<2x2xi32>
    %76 = vector.broadcast %74 : vector<2x1xi32> to vector<2x2xi32>
    %77 = arith.cmpi eq, %75, %76 : vector<2x2xi32>
    %78 = arith.extui %77 : vector<2x2xi1> to vector<2x2xi32>
    %79 = arith.sitofp %78 : vector<2x2xi32> to vector<2x2xf32>
    %c0_49 = arith.constant 0 : index
    %c0_50 = arith.constant 0 : index
    %80 = vector.load %arg17[%c0_49, %c0_50] : memref<2x32xf32, #tpu.memory_space<vmem>>, vector<2x32xf32>
    %cst_51 = arith.constant dense<0.000000e+00> : vector<2x32xf32>
    %81 = tpu.matmul %79, %80, %cst_51 {dimension_numbers = #tpu.dot_dimension_numbers<[1], [0], [0], [1], [0, 0, 1, 1], [], []>} : vector<2x2xf32>, vector<2x32xf32>, vector<2x32xf32> -> vector<2x32xf32>
    %c0_52 = arith.constant 0 : index
    %c0_53 = arith.constant 0 : index
    %82 = vector.load %arg18[%c0_52, %c0_53] : memref<1x32xf32, #tpu.memory_space<vmem>>, vector<1x32xf32>
    %83 = vector.broadcast %82 : vector<1x32xf32> to vector<2x32xf32>
    %84 = arith.addf %81, %83 : vector<2x32xf32>
    %cst_54 = arith.constant 0.000000e+00 : f32
    %85 = vector.broadcast %cst_54 : f32 to vector<2x32xf32>
    %86 = arith.maximumf %84, %85 : vector<2x32xf32>
    %c0_55 = arith.constant 0 : index
    %c0_56 = arith.constant 0 : index
    %87 = vector.load %arg19[%c0_55, %c0_56] : memref<32x32xf32, #tpu.memory_space<vmem>>, vector<32x32xf32>
    %cst_57 = arith.constant dense<0.000000e+00> : vector<2x32xf32>
    %88 = tpu.matmul %86, %87, %cst_57 {dimension_numbers = #tpu.dot_dimension_numbers<[1], [0], [0], [1], [0, 0, 1, 1], [], []>} : vector<2x32xf32>, vector<32x32xf32>, vector<2x32xf32> -> vector<2x32xf32>
    %c0_58 = arith.constant 0 : index
    %c0_59 = arith.constant 0 : index
    %89 = vector.load %arg20[%c0_58, %c0_59] : memref<1x32xf32, #tpu.memory_space<vmem>>, vector<1x32xf32>
    %90 = vector.broadcast %89 : vector<1x32xf32> to vector<2x32xf32>
    %91 = arith.addf %88, %90 : vector<2x32xf32>
    %92 = arith.addf %46, %91 : vector<2x32xf32>
    %c0_60 = arith.constant 0 : index
    %c0_61 = arith.constant 0 : index
    %93 = vector.load %arg21[%c0_60, %c0_61] : memref<2x16xf32, #tpu.memory_space<vmem>>, vector<2x16xf32>
    tpu.vector_store %arg21[%c0_60, %c0_61], %19 {strides = array<i32>} : memref<2x16xf32, #tpu.memory_space<vmem>>, vector<2x16xf32>,
    %c0_62 = arith.constant 0 : index
    %c0_63 = arith.constant 0 : index
    %94 = vector.load %arg22[%c0_62, %c0_63] : memref<2x1xi32, #tpu.memory_space<vmem>>, vector<2x1xi32>
    tpu.vector_store %arg22[%c0_62, %c0_63], %28 {strides = array<i32>} : memref<2x1xi32, #tpu.memory_space<vmem>>, vector<2x1xi32>,
    %c0_64 = arith.constant 0 : index
    %c0_65 = arith.constant 0 : index
    %95 = vector.load %arg23[%c0_64, %c0_65] : memref<2x2xf32, #tpu.memory_space<vmem>>, vector<2x2xf32>
    tpu.vector_store %arg23[%c0_64, %c0_65], %65 {strides = array<i32>} : memref<2x2xf32, #tpu.memory_space<vmem>>, vector<2x2xf32>,
    %c0_66 = arith.constant 0 : index
    %c0_67 = arith.constant 0 : index
    %96 = vector.load %arg24[%c0_66, %c0_67] : memref<2x1xi32, #tpu.memory_space<vmem>>, vector<2x1xi32>
    tpu.vector_store %arg24[%c0_66, %c0_67], %74 {strides = array<i32>} : memref<2x1xi32, #tpu.memory_space<vmem>>, vector<2x1xi32>,
    %c0_68 = arith.constant 0 : index
    %c0_69 = arith.constant 0 : index
    %97 = vector.load %arg25[%c0_68, %c0_69] : memref<2x32xf32, #tpu.memory_space<vmem>>, vector<2x32xf32>
    tpu.vector_store %arg25[%c0_68, %c0_69], %92 {strides = array<i32>} : memref<2x32xf32, #tpu.memory_space<vmem>>, vector<2x32xf32>,
    return
  }
}

module attributes {stable_mosaic.version = 11 : i64} {
  func.func @_units_kernel(%arg0: memref<2x32xf32, #tpu.memory_space<vmem>>, %arg1: memref<16x32xf32, #tpu.memory_space<vmem>>, %arg2: memref<2x1xi32, #tpu.memory_space<vmem>>, %arg3: memref<2x1xf32, #tpu.memory_space<vmem>>, %arg4: memref<32x32xf32, #tpu.memory_space<vmem>>, %arg5: memref<1x32xf32, #tpu.memory_space<vmem>>, %arg6: memref<32x32xf32, #tpu.memory_space<vmem>>, %arg7: memref<1x32xf32, #tpu.memory_space<vmem>>, %arg8: memref<32x32xf32, #tpu.memory_space<vmem>>, %arg9: memref<1x32xf32, #tpu.memory_space<vmem>>, %arg10: memref<32x1xf32, #tpu.memory_space<vmem>>, %arg11: memref<1x1xf32, #tpu.memory_space<vmem>>, %arg12: memref<32x32xf32, #tpu.memory_space<vmem>>, %arg13: memref<1x32xf32, #tpu.memory_space<vmem>>, %arg14: memref<32x32xf32, #tpu.memory_space<vmem>>, %arg15: memref<1x32xf32, #tpu.memory_space<vmem>>, %arg16: memref<32x32xf32, #tpu.memory_space<vmem>>, %arg17: memref<1x32xf32, #tpu.memory_space<vmem>>, %arg18: memref<32x32xf32, #tpu.memory_space<vmem>>, %arg19: memref<1x32xf32, #tpu.memory_space<vmem>>, %arg20: memref<2x9xf32, #tpu.memory_space<vmem>>, %arg21: memref<2x1xi32, #tpu.memory_space<vmem>>, %arg22: memref<2x1xi32, #tpu.memory_space<vmem>>, %arg23: memref<2x32xf32, #tpu.memory_space<vmem>>, %arg24: memref<2x8xf32, #tpu.memory_space<vmem>>, %arg25: memref<2x1xi32, #tpu.memory_space<vmem>>) attributes {dimension_semantics = [], scalar_prefetch = 0 : i64, scratch_operands = 0 : i64, tpu.core_type = #tpu.core_type<tc>} {
    %c0 = arith.constant 0 : index
    %c0_0 = arith.constant 0 : index
    %0 = vector.load %arg0[%c0, %c0_0] : memref<2x32xf32, #tpu.memory_space<vmem>>, vector<2x32xf32>
    %c0_1 = arith.constant 0 : index
    %c0_2 = arith.constant 0 : index
    %1 = vector.load %arg1[%c0_1, %c0_2] : memref<16x32xf32, #tpu.memory_space<vmem>>, vector<16x32xf32>
    %c0_3 = arith.constant 0 : index
    %c0_4 = arith.constant 0 : index
    %2 = vector.load %arg2[%c0_3, %c0_4] : memref<2x1xi32, #tpu.memory_space<vmem>>, vector<2x1xi32>
    %c0_5 = arith.constant 0 : index
    %c0_6 = arith.constant 0 : index
    %3 = vector.load %arg3[%c0_5, %c0_6] : memref<2x1xf32, #tpu.memory_space<vmem>>, vector<2x1xf32>
    %4 = tpu.iota {dimensions = array<i32: 1>} : vector<2x8xi32>
    %5 = vector.broadcast %2 : vector<2x1xi32> to vector<2x8xi32>
    %6 = arith.cmpi slt, %4, %5 : vector<2x8xi32>
    %cst = arith.constant 5.000000e-01 : f32
    %7 = vector.broadcast %cst : f32 to vector<2x1xf32>
    %8 = arith.cmpf ogt, %3, %7 : vector<2x1xf32>
    %c0_7 = arith.constant 0 : index
    %c0_8 = arith.constant 0 : index
    %9 = vector.load %arg4[%c0_7, %c0_8] : memref<32x32xf32, #tpu.memory_space<vmem>>, vector<32x32xf32>
    %cst_9 = arith.constant dense<0.000000e+00> : vector<16x32xf32>
    %10 = tpu.matmul %1, %9, %cst_9 {dimension_numbers = #tpu.dot_dimension_numbers<[1], [0], [0], [1], [0, 0, 1, 1], [], []>} : vector<16x32xf32>, vector<32x32xf32>, vector<16x32xf32> -> vector<16x32xf32>
    %c0_10 = arith.constant 0 : index
    %c0_11 = arith.constant 0 : index
    %11 = vector.load %arg5[%c0_10, %c0_11] : memref<1x32xf32, #tpu.memory_space<vmem>>, vector<1x32xf32>
    %12 = vector.broadcast %11 : vector<1x32xf32> to vector<16x32xf32>
    %13 = arith.addf %10, %12 : vector<16x32xf32>
    %14 = vector.shape_cast %13 : vector<16x32xf32> to vector<2x8x32xf32>
    %c0_12 = arith.constant 0 : index
    %c0_13 = arith.constant 0 : index
    %15 = vector.load %arg6[%c0_12, %c0_13] : memref<32x32xf32, #tpu.memory_space<vmem>>, vector<32x32xf32>
    %cst_14 = arith.constant dense<0.000000e+00> : vector<2x32xf32>
    %16 = tpu.matmul %0, %15, %cst_14 {dimension_numbers = #tpu.dot_dimension_numbers<[1], [0], [0], [1], [0, 0, 1, 1], [], []>} : vector<2x32xf32>, vector<32x32xf32>, vector<2x32xf32> -> vector<2x32xf32>
    %c0_15 = arith.constant 0 : index
    %c0_16 = arith.constant 0 : index
    %17 = vector.load %arg7[%c0_15, %c0_16] : memref<1x32xf32, #tpu.memory_space<vmem>>, vector<1x32xf32>
    %18 = vector.broadcast %17 : vector<1x32xf32> to vector<2x32xf32>
    %19 = arith.addf %16, %18 : vector<2x32xf32>
    %cst_17 = arith.constant 0.000000e+00 : f32
    %20 = vector.broadcast %cst_17 : f32 to vector<2x32xf32>
    %21 = arith.maximumf %19, %20 : vector<2x32xf32>
    %c0_18 = arith.constant 0 : index
    %c0_19 = arith.constant 0 : index
    %22 = vector.load %arg8[%c0_18, %c0_19] : memref<32x32xf32, #tpu.memory_space<vmem>>, vector<32x32xf32>
    %cst_20 = arith.constant dense<0.000000e+00> : vector<2x32xf32>
    %23 = tpu.matmul %21, %22, %cst_20 {dimension_numbers = #tpu.dot_dimension_numbers<[1], [0], [0], [1], [0, 0, 1, 1], [], []>} : vector<2x32xf32>, vector<32x32xf32>, vector<2x32xf32> -> vector<2x32xf32>
    %c0_21 = arith.constant 0 : index
    %c0_22 = arith.constant 0 : index
    %24 = vector.load %arg9[%c0_21, %c0_22] : memref<1x32xf32, #tpu.memory_space<vmem>>, vector<1x32xf32>
    %25 = vector.broadcast %24 : vector<1x32xf32> to vector<2x32xf32>
    %26 = arith.addf %23, %25 : vector<2x32xf32>
    %27 = vector.shape_cast %26 : vector<2x32xf32> to vector<2x1x32xf32>
    "tpu.trace_start"() <{level = 10 : i32, message = "bqk,bnk->bqn"}> : () -> ()
    %cst_23 = arith.constant dense<0.000000e+00> : vector<2x1x8xf32>
    %28 = tpu.matmul %27, %14, %cst_23 {dimension_numbers = #tpu.dot_dimension_numbers<[2], [2], [1], [1], [0, 0, 0, 1, 1, 1], [0], [0]>} : vector<2x1x32xf32>, vector<2x8x32xf32>, vector<2x1x8xf32> -> vector<2x1x8xf32>
    "tpu.trace_stop"() : () -> ()
    %29 = vector.shape_cast %28 : vector<2x1x8xf32> to vector<2x8xf32>
    %cst_24 = arith.constant -1.000000e+09 : f32
    %30 = vector.broadcast %cst_24 : f32 to vector<2x8xf32>
    %31 = arith.select %6, %29, %30 : vector<2x8xi1>, vector<2x8xf32>
    %c0_25 = arith.constant 0 : index
    %c0_26 = arith.constant 0 : index
    %32 = vector.load %arg10[%c0_25, %c0_26] : memref<32x1xf32, #tpu.memory_space<vmem>>, vector<32x1xf32>
    %cst_27 = arith.constant dense<0.000000e+00> : vector<2x1xf32>
    %33 = tpu.matmul %0, %32, %cst_27 {dimension_numbers = #tpu.dot_dimension_numbers<[1], [0], [0], [1], [0, 0, 1, 1], [], []>} : vector<2x32xf32>, vector<32x1xf32>, vector<2x1xf32> -> vector<2x1xf32>
    %c0_28 = arith.constant 0 : index
    %c0_29 = arith.constant 0 : index
    %34 = vector.load %arg11[%c0_28, %c0_29] : memref<1x1xf32, #tpu.memory_space<vmem>>, vector<1x1xf32>
    %35 = vector.broadcast %34 : vector<1x1xf32> to vector<2x1xf32>
    %36 = arith.addf %33, %35 : vector<2x1xf32>
    %37 = tpu.concatenate %31, %36 in 1 : vector<2x8xf32>, vector<2x1xf32> -> vector<2x9xf32>
    %38 = tpu.iota {dimensions = array<i32: 1>} : vector<2x9xi32>
    %c8_i32 = arith.constant 8 : i32
    %39 = vector.broadcast %c8_i32 : i32 to vector<2x9xi32>
    %40 = arith.cmpi slt, %38, %39 : vector<2x9xi32>
    %cst_30 = arith.constant -1.000000e+09 : f32
    %cst_31 = arith.constant 0.000000e+00 : f32
    %41 = vector.broadcast %cst_30 : f32 to vector<2x9xf32>
    %42 = vector.broadcast %cst_31 : f32 to vector<2x9xf32>
    %43 = arith.select %40, %41, %42 : vector<2x9xi1>, vector<2x9xf32>
    %44 = vector.shape_cast %8 : vector<2x1xi1> to vector<2x1xi1>
    %45 = vector.broadcast %44 : vector<2x1xi1> to vector<2x9xi1>
    %46 = arith.select %45, %37, %43 : vector<2x9xi1>, vector<2x9xf32>
    %cst_32 = arith.constant dense<0xFF800000> : vector<2xf32>
    %47 = vector.multi_reduction <maximumf>, %46, %cst_32 [1] : vector<2x9xf32> to vector<2xf32>
    %48 = vector.shape_cast %47 : vector<2xf32> to vector<2x1xf32>
    %49 = tpu.iota {dimensions = array<i32: 1>} : vector<2x9xi32>
    %50 = vector.broadcast %48 : vector<2x1xf32> to vector<2x9xf32>
    %51 = arith.cmpf oge, %46, %50 : vector<2x9xf32>
    %c9_i32 = arith.constant 9 : i32
    %52 = vector.broadcast %c9_i32 : i32 to vector<2x9xi32>
    %53 = arith.select %51, %49, %52 : vector<2x9xi1>, vector<2x9xi32>
    %cst_33 = arith.constant dense<2147483647> : vector<2xi32>
    %54 = vector.multi_reduction <minsi>, %53, %cst_33 [1] : vector<2x9xi32> to vector<2xi32>
    %55 = vector.shape_cast %54 : vector<2xi32> to vector<2x1xi32>
    %c1_i32 = arith.constant 1 : i32
    %c0_i32 = arith.constant 0 : i32
    %56 = vector.broadcast %c1_i32 : i32 to vector<2x1xi32>
    %57 = vector.broadcast %c0_i32 : i32 to vector<2x1xi32>
    %58 = arith.select %8, %56, %57 : vector<2x1xi1>, vector<2x1xi32>
    %cst_34 = arith.constant dense<0xFF800000> : vector<2xf32>
    %59 = vector.multi_reduction <maximumf>, %31, %cst_34 [1] : vector<2x8xf32> to vector<2xf32>
    %60 = vector.shape_cast %59 : vector<2xf32> to vector<2x1xf32>
    %61 = tpu.iota {dimensions = array<i32: 1>} : vector<2x8xi32>
    %62 = vector.broadcast %60 : vector<2x1xf32> to vector<2x8xf32>
    %63 = arith.cmpf oge, %31, %62 : vector<2x8xf32>
    %c8_i32_35 = arith.constant 8 : i32
    %64 = vector.broadcast %c8_i32_35 : i32 to vector<2x8xi32>
    %65 = arith.select %63, %61, %64 : vector<2x8xi1>, vector<2x8xi32>
    %cst_36 = arith.constant dense<2147483647> : vector<2xi32>
    %66 = vector.multi_reduction <minsi>, %65, %cst_36 [1] : vector<2x8xi32> to vector<2xi32>
    %67 = vector.shape_cast %66 : vector<2xi32> to vector<2x1xi32>
    %68 = tpu.iota {dimensions = array<i32: 1>} : vector<2x8xi32>
    %69 = vector.broadcast %67 : vector<2x1xi32> to vector<2x8xi32>
    %70 = arith.cmpi eq, %68, %69 : vector<2x8xi32>
    %71 = arith.extui %70 : vector<2x8xi1> to vector<2x8xi32>
    %72 = arith.sitofp %71 : vector<2x8xi32> to vector<2x8xf32>
    %73 = vector.shape_cast %72 : vector<2x8xf32> to vector<2x1x8xf32>
    "tpu.trace_start"() <{level = 10 : i32, message = "bqn,bnk->bqk"}> : () -> ()
    %cst_37 = arith.constant dense<0.000000e+00> : vector<2x1x32xf32>
    %74 = tpu.matmul %73, %14, %cst_37 {dimension_numbers = #tpu.dot_dimension_numbers<[2], [1], [1], [2], [0, 0, 0, 1, 1, 2], [0], [0]>} : vector<2x1x8xf32>, vector<2x8x32xf32>, vector<2x1x32xf32> -> vector<2x1x32xf32>
    "tpu.trace_stop"() : () -> ()
    %75 = vector.shape_cast %74 : vector<2x1x32xf32> to vector<2x32xf32>
    %c0_38 = arith.constant 0 : index
    %c0_39 = arith.constant 0 : index
    %76 = vector.load %arg12[%c0_38, %c0_39] : memref<32x32xf32, #tpu.memory_space<vmem>>, vector<32x32xf32>
    %cst_40 = arith.constant dense<0.000000e+00> : vector<2x32xf32>
    %77 = tpu.matmul %75, %76, %cst_40 {dimension_numbers = #tpu.dot_dimension_numbers<[1], [0], [0], [1], [0, 0, 1, 1], [], []>} : vector<2x32xf32>, vector<32x32xf32>, vector<2x32xf32> -> vector<2x32xf32>
    %c0_41 = arith.constant 0 : index
    %c0_42 = arith.constant 0 : index
    %78 = vector.load %arg13[%c0_41, %c0_42] : memref<1x32xf32, #tpu.memory_space<vmem>>, vector<1x32xf32>
    %79 = vector.broadcast %78 : vector<1x32xf32> to vector<2x32xf32>
    %80 = arith.addf %77, %79 : vector<2x32xf32>
    %81 = vector.broadcast %3 : vector<2x1xf32> to vector<2x32xf32>
    %82 = arith.mulf %80, %81 : vector<2x32xf32>
    %83 = arith.addf %0, %82 : vector<2x32xf32>
    %c0_43 = arith.constant 0 : index
    %c0_44 = arith.constant 0 : index
    %84 = vector.load %arg14[%c0_43, %c0_44] : memref<32x32xf32, #tpu.memory_space<vmem>>, vector<32x32xf32>
    %cst_45 = arith.constant dense<0.000000e+00> : vector<16x32xf32>
    %85 = tpu.matmul %1, %84, %cst_45 {dimension_numbers = #tpu.dot_dimension_numbers<[1], [0], [0], [1], [0, 0, 1, 1], [], []>} : vector<16x32xf32>, vector<32x32xf32>, vector<16x32xf32> -> vector<16x32xf32>
    %c0_46 = arith.constant 0 : index
    %c0_47 = arith.constant 0 : index
    %86 = vector.load %arg15[%c0_46, %c0_47] : memref<1x32xf32, #tpu.memory_space<vmem>>, vector<1x32xf32>
    %87 = vector.broadcast %86 : vector<1x32xf32> to vector<16x32xf32>
    %88 = arith.addf %85, %87 : vector<16x32xf32>
    %89 = vector.shape_cast %88 : vector<16x32xf32> to vector<2x8x32xf32>
    %c0_48 = arith.constant 0 : index
    %c0_49 = arith.constant 0 : index
    %90 = vector.load %arg16[%c0_48, %c0_49] : memref<32x32xf32, #tpu.memory_space<vmem>>, vector<32x32xf32>
    %cst_50 = arith.constant dense<0.000000e+00> : vector<2x32xf32>
    %91 = tpu.matmul %83, %90, %cst_50 {dimension_numbers = #tpu.dot_dimension_numbers<[1], [0], [0], [1], [0, 0, 1, 1], [], []>} : vector<2x32xf32>, vector<32x32xf32>, vector<2x32xf32> -> vector<2x32xf32>
    %c0_51 = arith.constant 0 : index
    %c0_52 = arith.constant 0 : index
    %92 = vector.load %arg17[%c0_51, %c0_52] : memref<1x32xf32, #tpu.memory_space<vmem>>, vector<1x32xf32>
    %93 = vector.broadcast %92 : vector<1x32xf32> to vector<2x32xf32>
    %94 = arith.addf %91, %93 : vector<2x32xf32>
    %cst_53 = arith.constant 0.000000e+00 : f32
    %95 = vector.broadcast %cst_53 : f32 to vector<2x32xf32>
    %96 = arith.maximumf %94, %95 : vector<2x32xf32>
    %c0_54 = arith.constant 0 : index
    %c0_55 = arith.constant 0 : index
    %97 = vector.load %arg18[%c0_54, %c0_55] : memref<32x32xf32, #tpu.memory_space<vmem>>, vector<32x32xf32>
    %cst_56 = arith.constant dense<0.000000e+00> : vector<2x32xf32>
    %98 = tpu.matmul %96, %97, %cst_56 {dimension_numbers = #tpu.dot_dimension_numbers<[1], [0], [0], [1], [0, 0, 1, 1], [], []>} : vector<2x32xf32>, vector<32x32xf32>, vector<2x32xf32> -> vector<2x32xf32>
    %c0_57 = arith.constant 0 : index
    %c0_58 = arith.constant 0 : index
    %99 = vector.load %arg19[%c0_57, %c0_58] : memref<1x32xf32, #tpu.memory_space<vmem>>, vector<1x32xf32>
    %100 = vector.broadcast %99 : vector<1x32xf32> to vector<2x32xf32>
    %101 = arith.addf %98, %100 : vector<2x32xf32>
    %102 = vector.shape_cast %101 : vector<2x32xf32> to vector<2x1x32xf32>
    "tpu.trace_start"() <{level = 10 : i32, message = "bqk,bnk->bqn"}> : () -> ()
    %cst_59 = arith.constant dense<0.000000e+00> : vector<2x1x8xf32>
    %103 = tpu.matmul %102, %89, %cst_59 {dimension_numbers = #tpu.dot_dimension_numbers<[2], [2], [1], [1], [0, 0, 0, 1, 1, 1], [0], [0]>} : vector<2x1x32xf32>, vector<2x8x32xf32>, vector<2x1x8xf32> -> vector<2x1x8xf32>
    "tpu.trace_stop"() : () -> ()
    %104 = vector.shape_cast %103 : vector<2x1x8xf32> to vector<2x8xf32>
    %cst_60 = arith.constant -1.000000e+09 : f32
    %105 = vector.broadcast %cst_60 : f32 to vector<2x8xf32>
    %106 = arith.select %6, %104, %105 : vector<2x8xi1>, vector<2x8xf32>
    %cst_61 = arith.constant dense<0xFF800000> : vector<2xf32>
    %107 = vector.multi_reduction <maximumf>, %106, %cst_61 [1] : vector<2x8xf32> to vector<2xf32>
    %108 = vector.shape_cast %107 : vector<2xf32> to vector<2x1xf32>
    %109 = tpu.iota {dimensions = array<i32: 1>} : vector<2x8xi32>
    %110 = vector.broadcast %108 : vector<2x1xf32> to vector<2x8xf32>
    %111 = arith.cmpf oge, %106, %110 : vector<2x8xf32>
    %c8_i32_62 = arith.constant 8 : i32
    %112 = vector.broadcast %c8_i32_62 : i32 to vector<2x8xi32>
    %113 = arith.select %111, %109, %112 : vector<2x8xi1>, vector<2x8xi32>
    %cst_63 = arith.constant dense<2147483647> : vector<2xi32>
    %114 = vector.multi_reduction <minsi>, %113, %cst_63 [1] : vector<2x8xi32> to vector<2xi32>
    %115 = vector.shape_cast %114 : vector<2xi32> to vector<2x1xi32>
    %c0_64 = arith.constant 0 : index
    %c0_65 = arith.constant 0 : index
    %116 = vector.load %arg20[%c0_64, %c0_65] : memref<2x9xf32, #tpu.memory_space<vmem>>, vector<2x9xf32>
    tpu.vector_store %arg20[%c0_64, %c0_65], %46 {strides = array<i32>} : memref<2x9xf32, #tpu.memory_space<vmem>>, vector<2x9xf32>,
    %c0_66 = arith.constant 0 : index
    %c0_67 = arith.constant 0 : index
    %117 = vector.load %arg21[%c0_66, %c0_67] : memref<2x1xi32, #tpu.memory_space<vmem>>, vector<2x1xi32>
    tpu.vector_store %arg21[%c0_66, %c0_67], %55 {strides = array<i32>} : memref<2x1xi32, #tpu.memory_space<vmem>>, vector<2x1xi32>,
    %c0_68 = arith.constant 0 : index
    %c0_69 = arith.constant 0 : index
    %118 = vector.load %arg22[%c0_68, %c0_69] : memref<2x1xi32, #tpu.memory_space<vmem>>, vector<2x1xi32>
    tpu.vector_store %arg22[%c0_68, %c0_69], %58 {strides = array<i32>} : memref<2x1xi32, #tpu.memory_space<vmem>>, vector<2x1xi32>,
    %c0_70 = arith.constant 0 : index
    %c0_71 = arith.constant 0 : index
    %119 = vector.load %arg23[%c0_70, %c0_71] : memref<2x32xf32, #tpu.memory_space<vmem>>, vector<2x32xf32>
    tpu.vector_store %arg23[%c0_70, %c0_71], %83 {strides = array<i32>} : memref<2x32xf32, #tpu.memory_space<vmem>>, vector<2x32xf32>,
    %c0_72 = arith.constant 0 : index
    %c0_73 = arith.constant 0 : index
    %120 = vector.load %arg24[%c0_72, %c0_73] : memref<2x8xf32, #tpu.memory_space<vmem>>, vector<2x8xf32>
    tpu.vector_store %arg24[%c0_72, %c0_73], %106 {strides = array<i32>} : memref<2x8xf32, #tpu.memory_space<vmem>>, vector<2x8xf32>,
    %c0_74 = arith.constant 0 : index
    %c0_75 = arith.constant 0 : index
    %121 = vector.load %arg25[%c0_74, %c0_75] : memref<2x1xi32, #tpu.memory_space<vmem>>, vector<2x1xi32>
    tpu.vector_store %arg25[%c0_74, %c0_75], %115 {strides = array<i32>} : memref<2x1xi32, #tpu.memory_space<vmem>>, vector<2x1xi32>,
    return
  }
}

module attributes {stable_mosaic.version = 11 : i64} {
  func.func @_location_kernel(%arg0: memref<2x32xf32, #tpu.memory_space<vmem>>, %arg1: memref<2x8x256xf32, #tpu.memory_space<vmem>>, %arg2: memref<32x8xf32, #tpu.memory_space<vmem>>, %arg3: memref<1x8xf32, #tpu.memory_space<vmem>>, %arg4: memref<1x8xf32, #tpu.memory_space<vmem>>, %arg5: memref<1x1xf32, #tpu.memory_space<smem>>, %arg6: memref<2x256xf32, #tpu.memory_space<vmem>>, %arg7: memref<2x1xi32, #tpu.memory_space<vmem>>) attributes {dimension_semantics = [], scalar_prefetch = 0 : i64, scratch_operands = 0 : i64, tpu.core_type = #tpu.core_type<tc>} {
    %c0 = arith.constant 0 : index
    %c0_0 = arith.constant 0 : index
    %0 = vector.load %arg0[%c0, %c0_0] : memref<2x32xf32, #tpu.memory_space<vmem>>, vector<2x32xf32>
    %c0_1 = arith.constant 0 : index
    %c0_2 = arith.constant 0 : index
    %c0_3 = arith.constant 0 : index
    %1 = vector.load %arg1[%c0_1, %c0_2, %c0_3] : memref<2x8x256xf32, #tpu.memory_space<vmem>>, vector<2x8x256xf32>
    %c0_4 = arith.constant 0 : index
    %c0_5 = arith.constant 0 : index
    %2 = vector.load %arg2[%c0_4, %c0_5] : memref<32x8xf32, #tpu.memory_space<vmem>>, vector<32x8xf32>
    %cst = arith.constant dense<0.000000e+00> : vector<2x8xf32>
    %3 = tpu.matmul %0, %2, %cst {dimension_numbers = #tpu.dot_dimension_numbers<[1], [0], [0], [1], [0, 0, 1, 1], [], []>} : vector<2x32xf32>, vector<32x8xf32>, vector<2x8xf32> -> vector<2x8xf32>
    %c0_6 = arith.constant 0 : index
    %c0_7 = arith.constant 0 : index
    %4 = vector.load %arg3[%c0_6, %c0_7] : memref<1x8xf32, #tpu.memory_space<vmem>>, vector<1x8xf32>
    %5 = vector.broadcast %4 : vector<1x8xf32> to vector<2x8xf32>
    %6 = arith.addf %3, %5 : vector<2x8xf32>
    %7 = vector.shape_cast %6 : vector<2x8xf32> to vector<2x8x1xf32>
    %8 = vector.broadcast %7 : vector<2x8x1xf32> to vector<2x8x256xf32>
    %9 = arith.addf %1, %8 : vector<2x8x256xf32>
    %cst_8 = arith.constant 0.000000e+00 : f32
    %10 = vector.broadcast %cst_8 : f32 to vector<2x8x256xf32>
    %11 = arith.maximumf %9, %10 : vector<2x8x256xf32>
    %c0_9 = arith.constant 0 : index
    %c0_10 = arith.constant 0 : index
    %12 = vector.load %arg4[%c0_9, %c0_10] : memref<1x8xf32, #tpu.memory_space<vmem>>, vector<1x8xf32>
    %13 = vector.shape_cast %12 : vector<1x8xf32> to vector<1x8x1xf32>
    %14 = vector.broadcast %13 : vector<1x8x1xf32> to vector<2x8x256xf32>
    %15 = arith.mulf %11, %14 : vector<2x8x256xf32>
    %cst_11 = arith.constant dense<0.000000e+00> : vector<2x256xf32>
    %16 = vector.multi_reduction <add>, %15, %cst_11 [1] : vector<2x8x256xf32> to vector<2x256xf32>
    %c0_12 = arith.constant 0 : index
    %c0_13 = arith.constant 0 : index
    %17 = memref.load %arg5[%c0_12, %c0_13] : memref<1x1xf32, #tpu.memory_space<smem>>
    %18 = vector.broadcast %17 : f32 to vector<2x256xf32>
    %19 = arith.addf %16, %18 : vector<2x256xf32>
    %c0_14 = arith.constant 0 : index
    %c0_15 = arith.constant 0 : index
    %20 = vector.load %arg6[%c0_14, %c0_15] : memref<2x256xf32, #tpu.memory_space<vmem>>, vector<2x256xf32>
    tpu.vector_store %arg6[%c0_14, %c0_15], %19 {strides = array<i32>} : memref<2x256xf32, #tpu.memory_space<vmem>>, vector<2x256xf32>,
    %cst_16 = arith.constant dense<0xFF800000> : vector<2xf32>
    %21 = vector.multi_reduction <maximumf>, %19, %cst_16 [1] : vector<2x256xf32> to vector<2xf32>
    %22 = vector.shape_cast %21 : vector<2xf32> to vector<2x1xf32>
    %23 = tpu.iota {dimensions = array<i32: 1>} : vector<2x256xi32>
    %24 = vector.broadcast %22 : vector<2x1xf32> to vector<2x256xf32>
    %25 = arith.cmpf oge, %19, %24 : vector<2x256xf32>
    %c256_i32 = arith.constant 256 : i32
    %26 = vector.broadcast %c256_i32 : i32 to vector<2x256xi32>
    %27 = arith.select %25, %23, %26 : vector<2x256xi1>, vector<2x256xi32>
    %cst_17 = arith.constant dense<2147483647> : vector<2xi32>
    %28 = vector.multi_reduction <minsi>, %27, %cst_17 [1] : vector<2x256xi32> to vector<2xi32>
    %29 = vector.shape_cast %28 : vector<2xi32> to vector<2x1xi32>
    %c0_18 = arith.constant 0 : index
    %c0_19 = arith.constant 0 : index
    %30 = vector.load %arg7[%c0_18, %c0_19] : memref<2x1xi32, #tpu.memory_space<vmem>>, vector<2x1xi32>
    tpu.vector_store %arg7[%c0_18, %c0_19], %29 {strides = array<i32>} : memref<2x1xi32, #tpu.memory_space<vmem>>, vector<2x1xi32>,
    return
  }
}

</mosaic_0001>

<llo_original>
// kernel: policy_forward.4
$region0: #{policy_forward.4}
  #allocation0 [shape = 'u32[]', space=smem, size = 0x4, offset = 0x4, fixed_abs, tag = 'smem constant byte address 0x4 - core index']
  #allocation1 [shape = 'u32[144,128]{1,0:T(1,128)}', space=vmem, size = 0x12000, scoped, tag = 'internal scratch']
  %s0 = inlined_call_operand.smem [shape: u32[31], index: -1, kind: input, shape index: {}]
  %s1 = sld [smem:[%s0]]
  %s2 = scalar_lea.smem %s0, 1
  %s3 = sld [smem:[%s2]]
  %s4 = scalar_lea.smem %s0, 2
  %s5 = sld [smem:[%s4]]
  %s6 = scalar_lea.smem %s0, 3
  %s7 = sld [smem:[%s6]]
  %s8 = scalar_lea.smem %s0, 4
  %s9 = sld [smem:[%s8]]
  %s10 = scalar_lea.smem %s0, 5
  %s11 = sld [smem:[%s10]]
  %s12 = scalar_lea.smem %s0, 6
  %s13 = sld [smem:[%s12]]
  %s14 = scalar_lea.smem %s0, 7
  %s15 = sld [smem:[%s14]]
  %s16 = scalar_lea.smem %s0, 8
  %s17 = sld [smem:[%s16]]
  %s18 = scalar_lea.smem %s0, 9
  %s19 = sld [smem:[%s18]]
  %s20 = scalar_lea.smem %s0, 10
  %s21 = sld [smem:[%s20]]
  %s22 = scalar_lea.smem %s0, 11
  %s23 = sld [smem:[%s22]]
  %s24 = scalar_lea.smem %s0, 12
  %s25 = sld [smem:[%s24]]
  %s26 = scalar_lea.smem %s0, 13
  %s27 = sld [smem:[%s26]]
  %s28 = scalar_lea.smem %s0, 14
  %s29 = sld [smem:[%s28]]
  %s30 = scalar_lea.smem %s0, 15
  %s31 = sld [smem:[%s30]]
  %s32 = scalar_lea.smem %s0, 16
  %s33 = sld [smem:[%s32]]
  %s34 = scalar_lea.smem %s0, 17
  %s35 = sld [smem:[%s34]]
  %s36 = scalar_lea.smem %s0, 18
  %s37 = sld [smem:[%s36]]
  %s38 = scalar_lea.smem %s0, 19
  %s39 = sld [smem:[%s38]]
  %s40 = scalar_lea.smem %s0, 20
  %s41 = sld [smem:[%s40]]
  %s42 = scalar_lea.smem %s0, 21
  %s43 = sld [smem:[%s42]]
  %s44 = scalar_lea.smem %s0, 22
  %s45 = sld [smem:[%s44]]
  %s46 = scalar_lea.smem %s0, 23
  %s47 = sld [smem:[%s46]]
  %s48 = scalar_lea.smem %s0, 24
  %s49 = sld [smem:[%s48]]
  %s50 = scalar_lea.smem %s0, 25
  %s51 = sld [smem:[%s50]]
  %s52 = scalar_lea.smem %s0, 26
  %s53 = sld [smem:[%s52]]
  %s54 = scalar_lea.smem %s0, 27
  %s55 = sld [smem:[%s54]]
  %s56 = scalar_lea.smem %s0, 28
  %s57 = sld [smem:[%s56]]
  %s58 = scalar_lea.smem %s0, 29
  %s59 = sld [smem:[%s58]]
  %s60 = scalar_lea.smem %s0, 30
  %s61 = sld [smem:[%s60]]
  %62 = xla_tuple %s57, %s59, %s61
  %s63 = sld [smem:[#allocation0]]
  $region210: #{policy_forward.4} parent=0
    _
  %s65 = ssub.s32 1, %s63
  %s66 = scalar_select 0, %s65, %s63
  $region1: #{policy_forward.4} parent=0
    #allocation2 [shape = 'u8[16384]{0}', space=vmem, size = 0x4000, scoped, tag = 'input window, operand 8, single buffered']
    #allocation3 [shape = 's32[1]{0}', space=sflag, size = 0x4, scoped, tag = 'scoped memory for policy_forward.4']
    #allocation4 [shape = 's32[1]{0}', space=sflag, size = 0x4, scoped, tag = 'scoped memory for policy_forward.4']
    #allocation5 [shape = 'u8[16384]{0}', space=vmem, size = 0x4000, scoped, tag = 'input window, operand 10, single buffered']
    #allocation6 [shape = 's32[1]{0}', space=sflag, size = 0x4, scoped, tag = 'scoped memory for policy_forward.4']
    #allocation7 [shape = 'u8[8192]{0}', space=vmem, size = 0x2000, scoped, tag = 'input window, operand 12, single buffered']
    #allocation8 [shape = 'u8[512]{0}', space=vmem, size = 0x400, scoped, tag = 'input window, operand 13, single buffered']
    #allocation9 [shape = 's32[1]{0}', space=sflag, size = 0x4, scoped, tag = 'scoped memory for policy_forward.4']
    #allocation10 [shape = 'u8[16384]{0}', space=vmem, size = 0x4000, scoped, tag = 'input window, operand 14, single buffered']
    #allocation11 [shape = 'u8[512]{0}', space=vmem, size = 0x400, scoped, tag = 'input window, operand 15, single buffered']
    #allocation12 [shape = 's32[1]{0}', space=sflag, size = 0x4, scoped, tag = 'scoped memory for policy_forward.4']
    #allocation13 [shape = 'u8[16384]{0}', space=vmem, size = 0x4000, scoped, tag = 'input window, operand 16, single buffered']
    #allocation14 [shape = 'u8[512]{0}', space=vmem, size = 0x400, scoped, tag = 'input window, operand 17, single buffered']
    #allocation15 [shape = 's32[1]{0}', space=sflag, size = 0x4, scoped, tag = 'scoped memory for policy_forward.4']
    #allocation16 [shape = 'u8[16384]{0}', space=vmem, size = 0x4000, scoped, tag = 'input window, operand 18, single buffered']
    #allocation17 [shape = 'u8[512]{0}', space=vmem, size = 0x400, scoped, tag = 'input window, operand 19, single buffered']
    #allocation18 [shape = 's32[1]{0}', space=sflag, size = 0x4, scoped, tag = 'scoped memory for policy_forward.4']
    #allocation19 [shape = 'u8[8192]{0}', space=vmem, size = 0x2000, scoped, tag = 'input window, operand 20, single buffered']
    #allocation20 [shape = 'u8[512]{0}', space=vmem, size = 0x400, scoped, tag = 'input window, operand 21, single buffered']
    #allocation21 [shape = 's32[1]{0}', space=sflag, size = 0x4, scoped, tag = 'scoped memory for policy_forward.4']
    #allocation22 [shape = 'u8[16384]{0}', space=vmem, size = 0x4000, scoped, tag = 'input window, operand 22, single buffered']
    #allocation23 [shape = 'u8[512]{0}', space=vmem, size = 0x400, scoped, tag = 'input window, operand 23, single buffered']
    #allocation24 [shape = 's32[1]{0}', space=sflag, size = 0x4, scoped, tag = 'scoped memory for policy_forward.4']
    #allocation25 [shape = 'u8[8192]{0}', space=vmem, size = 0x2000, scoped, tag = 'input window, operand 24, single buffered']
    #allocation26 [shape = 'u8[512]{0}', space=vmem, size = 0x400, scoped, tag = 'input window, operand 25, single buffered']
    #allocation27 [shape = 's32[1]{0}', space=sflag, size = 0x4, scoped, tag = 'scoped memory for policy_forward.4']
    #allocation28 [shape = 'u8[16384]{0}', space=vmem, size = 0x4000, scoped, tag = 'input window, operand 26, single buffered']
    #allocation29 [shape = 'u8[512]{0}', space=vmem, size = 0x400, scoped, tag = 'input window, operand 27, single buffered']
    #allocation30 [shape = 's32[1]{0}', space=sflag, size = 0x4, scoped, tag = 'scoped memory for policy_forward.4']
    #allocation31 [shape = 'u8[1024]{0}', space=vmem, size = 0x400, scoped, tag = 'output window, operand 0, single buffered']
    %67 = vsyncpa [#allocation3], 0
    %68 = vsyncpa [#allocation6], 0
    %69 = vsyncpa [#allocation9], 0
    %70 = vsyncpa [#allocation12], 0
    %71 = vsyncpa [#allocation15], 0
    %72 = vsyncpa [#allocation18], 0
    %73 = vsyncpa [#allocation21], 0
    %74 = vsyncpa [#allocation24], 0
    %75 = vsyncpa [#allocation27], 0
    %76 = vsyncpa [#allocation30], 0
    %77 = vsyncpa [#allocation4], 0
    // Predicated region
    $region2: #{policy_forward.4} parent=1 // pred_check
      _
    $region3: #{policy_forward.4} parent=1 // pred_check_branch
      %79 = sbr.rel (0) target = $region5
    $region4: #{policy_forward.4} parent=1 // pred_region
      _
    $region5: #{policy_forward.4} parent=1 // pred_fallthru
      _
    // Predicated region
    $region6: #{policy_forward.4} parent=1 // pred_check
      _
    $region7: #{policy_forward.4} parent=1 // pred_check_branch
      %81 = sbr.rel (0) target = $region9
    $region8: #{policy_forward.4} parent=1 // pred_region
      _
    $region9: #{policy_forward.4} parent=1 // pred_fallthru
      _
    // Predicated region
    $region10: #{policy_forward.4} parent=1 // pred_check
      _
    $region11: #{policy_forward.4} parent=1 // pred_check_branch
      %83 = sbr.rel (0) target = $region13
    $region12: #{policy_forward.4} parent=1 // pred_region
      _
    $region13: #{policy_forward.4} parent=1 // pred_fallthru
      _
    // Predicated region
    $region14: #{policy_forward.4} parent=1 // pred_check
      _
    $region15: #{policy_forward.4} parent=1 // pred_check_branch
      %85 = sbr.rel (0) target = $region17
    $region16: #{policy_forward.4} parent=1 // pred_region
      _
    $region17: #{policy_forward.4} parent=1 // pred_fallthru
      _
    // Predicated region
    $region18: #{policy_forward.4} parent=1 // pred_check
      _
    $region19: #{policy_forward.4} parent=1 // pred_check_branch
      %87 = sbr.rel (0) target = $region21
    $region20: #{policy_forward.4} parent=1 // pred_region
      _
    $region21: #{policy_forward.4} parent=1 // pred_fallthru
      _
    // Predicated region
    $region22: #{policy_forward.4} parent=1 // pred_check
      _
    $region23: #{policy_forward.4} parent=1 // pred_check_branch
      %89 = sbr.rel (0) target = $region25
    $region24: #{policy_forward.4} parent=1 // pred_region
      _
    $region25: #{policy_forward.4} parent=1 // pred_fallthru
      _
    // Predicated region
    $region26: #{policy_forward.4} parent=1 // pred_check
      _
    $region27: #{policy_forward.4} parent=1 // pred_check_branch
      %91 = sbr.rel (0) target = $region29
    $region28: #{policy_forward.4} parent=1 // pred_region
      _
    $region29: #{policy_forward.4} parent=1 // pred_fallthru
      _
    // Predicated region
    $region30: #{policy_forward.4} parent=1 // pred_check
      _
    $region31: #{policy_forward.4} parent=1 // pred_check_branch
      %93 = sbr.rel (0) target = $region33
    $region32: #{policy_forward.4} parent=1 // pred_region
      _
    $region33: #{policy_forward.4} parent=1 // pred_fallthru
      _
    // Predicated region
    $region34: #{policy_forward.4} parent=1 // pred_check
      _
    $region35: #{policy_forward.4} parent=1 // pred_check_branch
      %95 = sbr.rel (0) target = $region37
    $region36: #{policy_forward.4} parent=1 // pred_region
      %s97 = ssub.s32 512, 512
      %98 = vsyncadd [#allocation3], %s97
      %s99 = sshll.u32 [#allocation2], 4
      %s100 = int_to_ptr.vmem [resolvable:$true] %s99
      %105 = dma.hbm_to_vmem [thread:$0]  %s17, 512, %s100, [#allocation3], 128, 128, 8
    $region37: #{policy_forward.4} parent=1 // pred_fallthru
      _
    // Predicated region
    $region38: #{policy_forward.4} parent=1 // pred_check
      _
    $region39: #{policy_forward.4} parent=1 // pred_check_branch
      %107 = sbr.rel (0) target = $region41
    $region40: #{policy_forward.4} parent=1 // pred_region
      _
    $region41: #{policy_forward.4} parent=1 // pred_fallthru
      _
    // Predicated region
    $region42: #{policy_forward.4} parent=1 // pred_check
      _
    $region43: #{policy_forward.4} parent=1 // pred_check_branch
      %109 = sbr.rel (0) target = $region45
    $region44: #{policy_forward.4} parent=1 // pred_region
      %s111 = ssub.s32 512, 512
      %112 = vsyncadd [#allocation6], %s111
      %s113 = sshll.u32 [#allocation5], 4
      %s114 = int_to_ptr.vmem [resolvable:$true] %s113
      %119 = dma.hbm_to_vmem [thread:$0]  %s21, 512, %s114, [#allocation6], 128, 128, 8
    $region45: #{policy_forward.4} parent=1 // pred_fallthru
      _
    // Predicated region
    $region46: #{policy_forward.4} parent=1 // pred_check
      _
    $region47: #{policy_forward.4} parent=1 // pred_check_branch
      %121 = sbr.rel (0) target = $region49
    $region48: #{policy_forward.4} parent=1 // pred_region
      _
    $region49: #{policy_forward.4} parent=1 // pred_fallthru
      _
    // Predicated region
    $region50: #{policy_forward.4} parent=1 // pred_check
      _
    $region51: #{policy_forward.4} parent=1 // pred_check_branch
      %123 = sbr.rel (0) target = $region53
    $region52: #{policy_forward.4} parent=1 // pred_region
      %s125 = ssub.s32 256, 256
      %126 = vsyncadd [#allocation6], %s125
      %s127 = sshll.u32 [#allocation7], 4
      %s128 = int_to_ptr.vmem [resolvable:$true] %s127
      %133 = dma.hbm_to_vmem [thread:$0]  %s25, 256, %s128, [#allocation6], 128, 128, 8
    $region53: #{policy_forward.4} parent=1 // pred_fallthru
      _
    // Predicated region
    $region54: #{policy_forward.4} parent=1 // pred_check
      _
    $region55: #{policy_forward.4} parent=1 // pred_check_branch
      %135 = sbr.rel (0) target = $region57
    $region56: #{policy_forward.4} parent=1 // pred_region
      %s137 = ssub.s32 16, 16
      %138 = vsyncadd [#allocation9], %s137
      %s140 = sshll.u32 [#allocation8], 4
      %s141 = int_to_ptr.vmem [resolvable:$true] %s140
      %143 = dma.hbm_to_vmem [thread:$0]  %s27, 16, %s141, [#allocation9]
    $region57: #{policy_forward.4} parent=1 // pred_fallthru
      _
    // Predicated region
    $region58: #{policy_forward.4} parent=1 // pred_check
      _
    $region59: #{policy_forward.4} parent=1 // pred_check_branch
      %145 = sbr.rel (0) target = $region61
    $region60: #{policy_forward.4} parent=1 // pred_region
      %s147 = ssub.s32 512, 512
      %148 = vsyncadd [#allocation9], %s147
      %s149 = sshll.u32 [#allocation10], 4
      %s150 = int_to_ptr.vmem [resolvable:$true] %s149
      %155 = dma.hbm_to_vmem [thread:$0]  %s29, 512, %s150, [#allocation9], 128, 128, 8
    $region61: #{policy_forward.4} parent=1 // pred_fallthru
      _
    // Predicated region
    $region62: #{policy_forward.4} parent=1 // pred_check
      _
    $region63: #{policy_forward.4} parent=1 // pred_check_branch
      %157 = sbr.rel (0) target = $region65
    $region64: #{policy_forward.4} parent=1 // pred_region
      %s159 = ssub.s32 16, 16
      %160 = vsyncadd [#allocation12], %s159
      %s162 = sshll.u32 [#allocation11], 4
      %s163 = int_to_ptr.vmem [resolvable:$true] %s162
      %165 = dma.hbm_to_vmem [thread:$0]  %s31, 16, %s163, [#allocation12]
    $region65: #{policy_forward.4} parent=1 // pred_fallthru
      _
    // Predicated region
    $region66: #{policy_forward.4} parent=1 // pred_check
      _
    $region67: #{policy_forward.4} parent=1 // pred_check_branch
      %167 = sbr.rel (0) target = $region69
    $region68: #{policy_forward.4} parent=1 // pred_region
      %s169 = ssub.s32 512, 512
      %170 = vsyncadd [#allocation12], %s169
      %s171 = sshll.u32 [#allocation13], 4
      %s172 = int_to_ptr.vmem [resolvable:$true] %s171
      %177 = dma.hbm_to_vmem [thread:$0]  %s33, 512, %s172, [#allocation12], 128, 128, 8
    $region69: #{policy_forward.4} parent=1 // pred_fallthru
      _
    // Predicated region
    $region70: #{policy_forward.4} parent=1 // pred_check
      _
    $region71: #{policy_forward.4} parent=1 // pred_check_branch
      %179 = sbr.rel (0) target = $region73
    $region72: #{policy_forward.4} parent=1 // pred_region
      %s181 = ssub.s32 16, 16
      %182 = vsyncadd [#allocation15], %s181
      %s184 = sshll.u32 [#allocation14], 4
      %s185 = int_to_ptr.vmem [resolvable:$true] %s184
      %187 = dma.hbm_to_vmem [thread:$0]  %s35, 16, %s185, [#allocation15]
    $region73: #{policy_forward.4} parent=1 // pred_fallthru
      _
    // Predicated region
    $region74: #{policy_forward.4} parent=1 // pred_check
      _
    $region75: #{policy_forward.4} parent=1 // pred_check_branch
      %189 = sbr.rel (0) target = $region77
    $region76: #{policy_forward.4} parent=1 // pred_region
      %s191 = ssub.s32 512, 512
      %192 = vsyncadd [#allocation15], %s191
      %s193 = sshll.u32 [#allocation16], 4
      %s194 = int_to_ptr.vmem [resolvable:$true] %s193
      %199 = dma.hbm_to_vmem [thread:$0]  %s37, 512, %s194, [#allocation15], 128, 128, 8
    $region77: #{policy_forward.4} parent=1 // pred_fallthru
      _
    // Predicated region
    $region78: #{policy_forward.4} parent=1 // pred_check
      _
    $region79: #{policy_forward.4} parent=1 // pred_check_branch
      %201 = sbr.rel (0) target = $region81
    $region80: #{policy_forward.4} parent=1 // pred_region
      %s203 = ssub.s32 16, 16
      %204 = vsyncadd [#allocation18], %s203
      %s206 = sshll.u32 [#allocation17], 4
      %s207 = int_to_ptr.vmem [resolvable:$true] %s206
      %209 = dma.hbm_to_vmem [thread:$0]  %s39, 16, %s207, [#allocation18]
    $region81: #{policy_forward.4} parent=1 // pred_fallthru
      _
    // Predicated region
    $region82: #{policy_forward.4} parent=1 // pred_check
      _
    $region83: #{policy_forward.4} parent=1 // pred_check_branch
      %211 = sbr.rel (0) target = $region85
    $region84: #{policy_forward.4} parent=1 // pred_region
      %s213 = ssub.s32 256, 256
      %214 = vsyncadd [#allocation18], %s213
      %s215 = sshll.u32 [#allocation19], 4
      %s216 = int_to_ptr.vmem [resolvable:$true] %s215
      %221 = dma.hbm_to_vmem [thread:$0]  %s41, 256, %s216, [#allocation18], 128, 128, 8
    $region85: #{policy_forward.4} parent=1 // pred_fallthru
      _
    // Predicated region
    $region86: #{policy_forward.4} parent=1 // pred_check
      _
    $region87: #{policy_forward.4} parent=1 // pred_check_branch
      %223 = sbr.rel (0) target = $region89
    $region88: #{policy_forward.4} parent=1 // pred_region
      %s225 = ssub.s32 16, 16
      %226 = vsyncadd [#allocation21], %s225
      %s228 = sshll.u32 [#allocation20], 4
      %s229 = int_to_ptr.vmem [resolvable:$true] %s228
      %231 = dma.hbm_to_vmem [thread:$0]  %s43, 16, %s229, [#allocation21]
    $region89: #{policy_forward.4} parent=1 // pred_fallthru
      _
    // Predicated region
    $region90: #{policy_forward.4} parent=1 // pred_check
      _
    $region91: #{policy_forward.4} parent=1 // pred_check_branch
      %233 = sbr.rel (0) target = $region93
    $region92: #{policy_forward.4} parent=1 // pred_region
      %s235 = ssub.s32 512, 512
      %236 = vsyncadd [#allocation21], %s235
      %s237 = sshll.u32 [#allocation22], 4
      %s238 = int_to_ptr.vmem [resolvable:$true] %s237
      %243 = dma.hbm_to_vmem [thread:$0]  %s45, 512, %s238, [#allocation21], 128, 128, 8
    $region93: #{policy_forward.4} parent=1 // pred_fallthru
      _
    // Predicated region
    $region94: #{policy_forward.4} parent=1 // pred_check
      _
    $region95: #{policy_forward.4} parent=1 // pred_check_branch
      %245 = sbr.rel (0) target = $region97
    $region96: #{policy_forward.4} parent=1 // pred_region
      %s247 = ssub.s32 16, 16
      %248 = vsyncadd [#allocation24], %s247
      %s250 = sshll.u32 [#allocation23], 4
      %s251 = int_to_ptr.vmem [resolvable:$true] %s250
      %253 = dma.hbm_to_vmem [thread:$0]  %s47, 16, %s251, [#allocation24]
    $region97: #{policy_forward.4} parent=1 // pred_fallthru
      _
    // Predicated region
    $region98: #{policy_forward.4} parent=1 // pred_check
      _
    $region99: #{policy_forward.4} parent=1 // pred_check_branch
      %255 = sbr.rel (0) target = $region101
    $region100: #{policy_forward.4} parent=1 // pred_region
      %s257 = ssub.s32 256, 256
      %258 = vsyncadd [#allocation24], %s257
      %s259 = sshll.u32 [#allocation25], 4
      %s260 = int_to_ptr.vmem [resolvable:$true] %s259
      %265 = dma.hbm_to_vmem [thread:$0]  %s49, 256, %s260, [#allocation24], 128, 128, 8
    $region101: #{policy_forward.4} parent=1 // pred_fallthru
      _
    // Predicated region
    $region102: #{policy_forward.4} parent=1 // pred_check
      _
    $region103: #{policy_forward.4} parent=1 // pred_check_branch
      %267 = sbr.rel (0) target = $region105
    $region104: #{policy_forward.4} parent=1 // pred_region
      %s269 = ssub.s32 16, 16
      %270 = vsyncadd [#allocation27], %s269
      %s272 = sshll.u32 [#allocation26], 4
      %s273 = int_to_ptr.vmem [resolvable:$true] %s272
      %275 = dma.hbm_to_vmem [thread:$0]  %s51, 16, %s273, [#allocation27]
    $region105: #{policy_forward.4} parent=1 // pred_fallthru
      _
    // Predicated region
    $region106: #{policy_forward.4} parent=1 // pred_check
      _
    $region107: #{policy_forward.4} parent=1 // pred_check_branch
      %277 = sbr.rel (0) target = $region109
    $region108: #{policy_forward.4} parent=1 // pred_region
      %s279 = ssub.s32 512, 512
      %280 = vsyncadd [#allocation27], %s279
      %s281 = sshll.u32 [#allocation28], 4
      %s282 = int_to_ptr.vmem [resolvable:$true] %s281
      %287 = dma.hbm_to_vmem [thread:$0]  %s53, 512, %s282, [#allocation27], 128, 128, 8
    $region109: #{policy_forward.4} parent=1 // pred_fallthru
      _
    // Predicated region
    $region110: #{policy_forward.4} parent=1 // pred_check
      _
    $region111: #{policy_forward.4} parent=1 // pred_check_branch
      %289 = sbr.rel (0) target = $region113
    $region112: #{policy_forward.4} parent=1 // pred_region
      %s291 = ssub.s32 16, 16
      %292 = vsyncadd [#allocation30], %s291
      %s294 = sshll.u32 [#allocation29], 4
      %s295 = int_to_ptr.vmem [resolvable:$true] %s294
      %297 = dma.hbm_to_vmem [thread:$0]  %s55, 16, %s295, [#allocation30]
    $region113: #{policy_forward.4} parent=1 // pred_fallthru
      _
    // Predicated region
    $region114: #{policy_forward.4} parent=1 // pred_check
      _
    $region115: #{policy_forward.4} parent=1 // pred_check_branch
      %299 = sbr.rel (0) target = $region117
    $region116: #{policy_forward.4} parent=1 // pred_region
      %300 = dma.done [#allocation3], 512
    $region117: #{policy_forward.4} parent=1 // pred_fallthru
      _
    // Predicated region
    $region118: #{policy_forward.4} parent=1 // pred_check
      _
    $region119: #{policy_forward.4} parent=1 // pred_check_branch
      %302 = sbr.rel (0) target = $region121
    $region120: #{policy_forward.4} parent=1 // pred_region
      %303 = dma.done [#allocation6], 512
    $region121: #{policy_forward.4} parent=1 // pred_fallthru
      _
    // Predicated region
    $region122: #{policy_forward.4} parent=1 // pred_check
      _
    $region123: #{policy_forward.4} parent=1 // pred_check_branch
      %305 = sbr.rel (0) target = $region125
    $region124: #{policy_forward.4} parent=1 // pred_region
      %306 = dma.done [#allocation6], 256
    $region125: #{policy_forward.4} parent=1 // pred_fallthru
      _
    // Predicated region
    $region126: #{policy_forward.4} parent=1 // pred_check
      _
    $region127: #{policy_forward.4} parent=1 // pred_check_branch
      %308 = sbr.rel (0) target = $region129
    $region128: #{policy_forward.4} parent=1 // pred_region
      %309 = dma.done [#allocation9], 16
    $region129: #{policy_forward.4} parent=1 // pred_fallthru
      _
    // Predicated region
    $region130: #{policy_forward.4} parent=1 // pred_check
      _
    $region131: #{policy_forward.4} parent=1 // pred_check_branch
      %311 = sbr.rel (0) target = $region133
    $region132: #{policy_forward.4} parent=1 // pred_region
      %312 = dma.done [#allocation9], 512
    $region133: #{policy_forward.4} parent=1 // pred_fallthru
      _
    // Predicated region
    $region134: #{policy_forward.4} parent=1 // pred_check
      _
    $region135: #{policy_forward.4} parent=1 // pred_check_branch
      %314 = sbr.rel (0) target = $region137
    $region136: #{policy_forward.4} parent=1 // pred_region
      %315 = dma.done [#allocation12], 16
    $region137: #{policy_forward.4} parent=1 // pred_fallthru
      _
    // Predicated region
    $region138: #{policy_forward.4} parent=1 // pred_check
      _
    $region139: #{policy_forward.4} parent=1 // pred_check_branch
      %317 = sbr.rel (0) target = $region141
    $region140: #{policy_forward.4} parent=1 // pred_region
      %318 = dma.done [#allocation12], 512
    $region141: #{policy_forward.4} parent=1 // pred_fallthru
      _
    // Predicated region
    $region142: #{policy_forward.4} parent=1 // pred_check
      _
    $region143: #{policy_forward.4} parent=1 // pred_check_branch
      %320 = sbr.rel (0) target = $region145
    $region144: #{policy_forward.4} parent=1 // pred_region
      %321 = dma.done [#allocation15], 16
    $region145: #{policy_forward.4} parent=1 // pred_fallthru
      _
    // Predicated region
    $region146: #{policy_forward.4} parent=1 // pred_check
      _
    $region147: #{policy_forward.4} parent=1 // pred_check_branch
      %323 = sbr.rel (0) target = $region149
    $region148: #{policy_forward.4} parent=1 // pred_region
      %324 = dma.done [#allocation15], 512
    $region149: #{policy_forward.4} parent=1 // pred_fallthru
      _
    // Predicated region
    $region150: #{policy_forward.4} parent=1 // pred_check
      _
    $region151: #{policy_forward.4} parent=1 // pred_check_branch
      %326 = sbr.rel (0) target = $region153
    $region152: #{policy_forward.4} parent=1 // pred_region
      %327 = dma.done [#allocation18], 16
    $region153: #{policy_forward.4} parent=1 // pred_fallthru
      _
    // Predicated region
    $region154: #{policy_forward.4} parent=1 // pred_check
      _
    $region155: #{policy_forward.4} parent=1 // pred_check_branch
      %329 = sbr.rel (0) target = $region157
    $region156: #{policy_forward.4} parent=1 // pred_region
      %330 = dma.done [#allocation18], 256
    $region157: #{policy_forward.4} parent=1 // pred_fallthru
      _
    // Predicated region
    $region158: #{policy_forward.4} parent=1 // pred_check
      _
    $region159: #{policy_forward.4} parent=1 // pred_check_branch
      %332 = sbr.rel (0) target = $region161
    $region160: #{policy_forward.4} parent=1 // pred_region
      %333 = dma.done [#allocation21], 16
    $region161: #{policy_forward.4} parent=1 // pred_fallthru
      _
    // Predicated region
    $region162: #{policy_forward.4} parent=1 // pred_check
      _
    $region163: #{policy_forward.4} parent=1 // pred_check_branch
      %335 = sbr.rel (0) target = $region165
    $region164: #{policy_forward.4} parent=1 // pred_region
      %336 = dma.done [#allocation21], 512
    $region165: #{policy_forward.4} parent=1 // pred_fallthru
      _
    // Predicated region
    $region166: #{policy_forward.4} parent=1 // pred_check
      _
    $region167: #{policy_forward.4} parent=1 // pred_check_branch
      %338 = sbr.rel (0) target = $region169
    $region168: #{policy_forward.4} parent=1 // pred_region
      %339 = dma.done [#allocation24], 16
    $region169: #{policy_forward.4} parent=1 // pred_fallthru
      _
    // Predicated region
    $region170: #{policy_forward.4} parent=1 // pred_check
      _
    $region171: #{policy_forward.4} parent=1 // pred_check_branch
      %341 = sbr.rel (0) target = $region173
    $region172: #{policy_forward.4} parent=1 // pred_region
      %342 = dma.done [#allocation24], 256
    $region173: #{policy_forward.4} parent=1 // pred_fallthru
      _
    // Predicated region
    $region174: #{policy_forward.4} parent=1 // pred_check
      _
    $region175: #{policy_forward.4} parent=1 // pred_check_branch
      %344 = sbr.rel (0) target = $region177
    $region176: #{policy_forward.4} parent=1 // pred_region
      %345 = dma.done [#allocation27], 16
    $region177: #{policy_forward.4} parent=1 // pred_fallthru
      _
    // Predicated region
    $region178: #{policy_forward.4} parent=1 // pred_check
      _
    $region179: #{policy_forward.4} parent=1 // pred_check_branch
      %347 = sbr.rel (0) target = $region181
    $region180: #{policy_forward.4} parent=1 // pred_region
      %348 = dma.done [#allocation27], 512
    $region181: #{policy_forward.4} parent=1 // pred_fallthru
      _
    // Predicated region
    $region182: #{policy_forward.4} parent=1 // pred_check
      _
    $region183: #{policy_forward.4} parent=1 // pred_check_branch
      %350 = sbr.rel (0) target = $region185
    $region184: #{policy_forward.4} parent=1 // pred_region
      %351 = dma.done [#allocation30], 16
    $region185: #{policy_forward.4} parent=1 // pred_fallthru
      _
    %v352 = vld [vmem:[%s1] sm:$0x3]
    %v353 = vld [vmem:[%s3] sm:$0x3]
    %v354 = vld [vmem:[%s5] sm:$0xff]
    %v355 = vld [vmem:[%s5 + $0x8] sm:$0xff]
    %v356 = vld [vmem:[%s5 + $0x10] sm:$0xff]
    %v357 = vld [vmem:[%s5 + $0x18] sm:$0xff]
    %v358 = vld [vmem:[%s7] sm:$0x1]
    %v360 = vlaneseq
    %v361 = vshrl.u32 %v360, 7
    %v362 = vsub.s32 0, %v361
    %v363 = vrot.slane %v358, %v362
    %vm365 = vcmask 261120
    %v367 = vsel %vm365, %v352, 0
    %369 = vmatprep.subr.mxu0 0.0
    %370 = vmatpush1.msra.mxu0 0.0
    %371 = vmatprep.subr.mxu0 0.0
    %372 = vmatpush1.msra.mxu0 0.0
    %373 = vmatprep.subr.mxu0 0.0
    %374 = vmatpush1.msra.mxu0 0.0
    %375 = vmatprep.subr.mxu0 0.0
    %376 = vmatpush1.msra.mxu0 0.0
    %377 = vmatprep.subr.mxu0 0.0
    %378 = vmatpush1.msra.mxu0 0.0
    %379 = vmatprep.subr.mxu0 0.0
    %380 = vmatpush1.msra.mxu0 0.0
    %381 = vmatprep.subr.mxu0 0.0
    %382 = vmatpush1.msra.mxu0 0.0
    %383 = vmatprep.subr.mxu0 0.0
    %384 = vmatpush1.msra.mxu0 0.0
    %385 = vmatprep.subr.mxu0 0.0
    %386 = vmatpush1.msra.mxu0 0.0
    %387 = vmatprep.subr.mxu0 0.0
    %388 = vmatpush1.msra.mxu0 0.0
    %389 = vmatprep.subr.mxu0 0.0
    %390 = vmatpush1.msra.mxu0 0.0
    %391 = vmatprep.subr.mxu0 0.0
    %392 = vmatpush1.msra.mxu0 0.0
    %393 = vmatprep.subr.mxu0 0.0
    %394 = vmatpush1.msra.mxu0 %v357
    %395 = vmatprep.subr.mxu0 0.0
    %396 = vmatpush1.msra.mxu0 %v356
    %397 = vmatprep.subr.mxu0 0.0
    %398 = vmatpush1.msra.mxu0 %v355
    %399 = vmatprep.subr.mxu0 0.0
    %400 = vmatpush1.msra.mxu0 %v354
    %401 = vmatprep.subr.mxu0 0.0
    %402 = vmatpush2.msra.mxu0 0.0
    %403 = vmatprep.subr.mxu0 0.0
    %404 = vmatpush2.msra.mxu0 0.0
    %405 = vmatprep.subr.mxu0 0.0
    %406 = vmatpush2.msra.mxu0 0.0
    %407 = vmatprep.subr.mxu0 0.0
    %408 = vmatpush2.msra.mxu0 0.0
    %409 = vmatprep.subr.mxu0 0.0
    %410 = vmatpush2.msra.mxu0 0.0
    %411 = vmatprep.subr.mxu0 0.0
    %412 = vmatpush2.msra.mxu0 0.0
    %413 = vmatprep.subr.mxu0 0.0
    %414 = vmatpush2.msra.mxu0 0.0
    %415 = vmatprep.subr.mxu0 0.0
    %416 = vmatpush2.msra.mxu0 0.0
    %417 = vmatprep.subr.mxu0 0.0
    %418 = vmatpush2.msra.mxu0 0.0
    %419 = vmatprep.subr.mxu0 0.0
    %420 = vmatpush2.msra.mxu0 0.0
    %421 = vmatprep.subr.mxu0 0.0
    %422 = vmatpush2.msra.mxu0 0.0
    %423 = vmatprep.subr.mxu0 0.0
    %424 = vmatpush2.msra.mxu0 0.0
    %425 = vmatprep.subr.mxu0 0.0
    %426 = vmatpush2.msra.mxu0 0.0
    %427 = vmatprep.subr.mxu0 0.0
    %428 = vmatpush2.msra.mxu0 0.0
    %429 = vmatprep.subr.mxu0 0.0
    %430 = vmatpush2.msra.mxu0 0.0
    %431 = vmatprep.subr.mxu0 0.0
    %432 = vmatpush2.msra.mxu0 0.0
    %433 = vmatprep.mubr.f32.mxu0 0.0
    %434 = vmatmul.mubr.f32.gmra.mxu0 %v367
    %v435 = vpop.f32.mrf.mxu0
    %v436 = vadd.f32 %v363, %v435
    %v437 = vpop.f32.mrf.mxu0
    %438 = vdwg.mxu0
    %v439 = vmax.f32 %v436, 0.0
    %v440 = vld [vmem:[%s9] sm:$0xff]
    %v441 = vld [vmem:[%s9 + $0x8] sm:$0xff]
    %v442 = vld [vmem:[%s9 + $0x10] sm:$0xff]
    %v443 = vld [vmem:[%s9 + $0x18] sm:$0xff]
    %v444 = vld [vmem:[%s11] sm:$0x1]
    %v446 = vlaneseq
    %v447 = vshrl.u32 %v446, 7
    %v448 = vsub.s32 0, %v447
    %v449 = vrot.slane %v444, %v448
    %v452 = vsel %vm365, %v439, 0
    %454 = vmatprep.subr.mxu0 0.0
    %455 = vmatpush1.msra.mxu0 0.0
    %456 = vmatprep.subr.mxu0 0.0
    %457 = vmatpush1.msra.mxu0 0.0
    %458 = vmatprep.subr.mxu0 0.0
    %459 = vmatpush1.msra.mxu0 0.0
    %460 = vmatprep.subr.mxu0 0.0
    %461 = vmatpush1.msra.mxu0 0.0
    %462 = vmatprep.subr.mxu0 0.0
    %463 = vmatpush1.msra.mxu0 0.0
    %464 = vmatprep.subr.mxu0 0.0
    %465 = vmatpush1.msra.mxu0 0.0
    %466 = vmatprep.subr.mxu0 0.0
    %467 = vmatpush1.msra.mxu0 0.0
    %468 = vmatprep.subr.mxu0 0.0
    %469 = vmatpush1.msra.mxu0 0.0
    %470 = vmatprep.subr.mxu0 0.0
    %471 = vmatpush1.msra.mxu0 0.0
    %472 = vmatprep.subr.mxu0 0.0
    %473 = vmatpush1.msra.mxu0 0.0
    %474 = vmatprep.subr.mxu0 0.0
    %475 = vmatpush1.msra.mxu0 0.0
    %476 = vmatprep.subr.mxu0 0.0
    %477 = vmatpush1.msra.mxu0 0.0
    %478 = vmatprep.subr.mxu0 0.0
    %479 = vmatpush1.msra.mxu0 %v443
    %480 = vmatprep.subr.mxu0 0.0
    %481 = vmatpush1.msra.mxu0 %v442
    %482 = vmatprep.subr.mxu0 0.0
    %483 = vmatpush1.msra.mxu0 %v441
    %484 = vmatprep.subr.mxu0 0.0
    %485 = vmatpush1.msra.mxu0 %v440
    %486 = vmatprep.subr.mxu0 0.0
    %487 = vmatpush2.msra.mxu0 0.0
    %488 = vmatprep.subr.mxu0 0.0
    %489 = vmatpush2.msra.mxu0 0.0
    %490 = vmatprep.subr.mxu0 0.0
    %491 = vmatpush2.msra.mxu0 0.0
    %492 = vmatprep.subr.mxu0 0.0
    %493 = vmatpush2.msra.mxu0 0.0
    %494 = vmatprep.subr.mxu0 0.0
    %495 = vmatpush2.msra.mxu0 0.0
    %496 = vmatprep.subr.mxu0 0.0
    %497 = vmatpush2.msra.mxu0 0.0
    %498 = vmatprep.subr.mxu0 0.0
    %499 = vmatpush2.msra.mxu0 0.0
    %500 = vmatprep.subr.mxu0 0.0
    %501 = vmatpush2.msra.mxu0 0.0
    %502 = vmatprep.subr.mxu0 0.0
    %503 = vmatpush2.msra.mxu0 0.0
    %504 = vmatprep.subr.mxu0 0.0
    %505 = vmatpush2.msra.mxu0 0.0
    %506 = vmatprep.subr.mxu0 0.0
    %507 = vmatpush2.msra.mxu0 0.0
    %508 = vmatprep.subr.mxu0 0.0
    %509 = vmatpush2.msra.mxu0 0.0
    %510 = vmatprep.subr.mxu0 0.0
    %511 = vmatpush2.msra.mxu0 0.0
    %512 = vmatprep.subr.mxu0 0.0
    %513 = vmatpush2.msra.mxu0 0.0
    %514 = vmatprep.subr.mxu0 0.0
    %515 = vmatpush2.msra.mxu0 0.0
    %516 = vmatprep.subr.mxu0 0.0
    %517 = vmatpush2.msra.mxu0 0.0
    %518 = vmatprep.mubr.f32.mxu0 0.0
    %519 = vmatmul.mubr.f32.gmra.mxu0 %v452
    %v520 = vpop.f32.mrf.mxu0
    %v521 = vadd.f32 %v449, %v520
    %v522 = vpop.f32.mrf.mxu0
    %523 = vdwg.mxu0
    %v524 = vmax.f32 %v521, 0.0
    %v525 = vld [vmem:[%s13] sm:$0xff]
    %v526 = vld [vmem:[%s13 + $0x8] sm:$0xff]
    %v527 = vld [vmem:[%s13 + $0x10] sm:$0xff]
    %v528 = vld [vmem:[%s13 + $0x18] sm:$0xff]
    %v529 = vld [vmem:[%s15] sm:$0x1]
    %v531 = vlaneseq
    %v532 = vshrl.u32 %v531, 7
    %v533 = vsub.s32 0, %v532
    %v534 = vrot.slane %v529, %v533
    %v537 = vsel %vm365, %v524, 0
    %539 = vmatprep.subr.mxu0 0.0
    %540 = vmatpush1.msra.mxu0 0.0
    %541 = vmatprep.subr.mxu0 0.0
    %542 = vmatpush1.msra.mxu0 0.0
    %543 = vmatprep.subr.mxu0 0.0
    %544 = vmatpush1.msra.mxu0 0.0
    %545 = vmatprep.subr.mxu0 0.0
    %546 = vmatpush1.msra.mxu0 0.0
    %547 = vmatprep.subr.mxu0 0.0
    %548 = vmatpush1.msra.mxu0 0.0
    %549 = vmatprep.subr.mxu0 0.0
    %550 = vmatpush1.msra.mxu0 0.0
    %551 = vmatprep.subr.mxu0 0.0
    %552 = vmatpush1.msra.mxu0 0.0
    %553 = vmatprep.subr.mxu0 0.0
    %554 = vmatpush1.msra.mxu0 0.0
    %555 = vmatprep.subr.mxu0 0.0
    %556 = vmatpush1.msra.mxu0 0.0
    %557 = vmatprep.subr.mxu0 0.0
    %558 = vmatpush1.msra.mxu0 0.0
    %559 = vmatprep.subr.mxu0 0.0
    %560 = vmatpush1.msra.mxu0 0.0
    %561 = vmatprep.subr.mxu0 0.0
    %562 = vmatpush1.msra.mxu0 0.0
    %563 = vmatprep.subr.mxu0 0.0
    %564 = vmatpush1.msra.mxu0 %v528
    %565 = vmatprep.subr.mxu0 0.0
    %566 = vmatpush1.msra.mxu0 %v527
    %567 = vmatprep.subr.mxu0 0.0
    %568 = vmatpush1.msra.mxu0 %v526
    %569 = vmatprep.subr.mxu0 0.0
    %570 = vmatpush1.msra.mxu0 %v525
    %571 = vmatprep.subr.mxu0 0.0
    %572 = vmatpush2.msra.mxu0 0.0
    %573 = vmatprep.subr.mxu0 0.0
    %574 = vmatpush2.msra.mxu0 0.0
    %575 = vmatprep.subr.mxu0 0.0
    %576 = vmatpush2.msra.mxu0 0.0
    %577 = vmatprep.subr.mxu0 0.0
    %578 = vmatpush2.msra.mxu0 0.0
    %579 = vmatprep.subr.mxu0 0.0
    %580 = vmatpush2.msra.mxu0 0.0
    %581 = vmatprep.subr.mxu0 0.0
    %582 = vmatpush2.msra.mxu0 0.0
    %583 = vmatprep.subr.mxu0 0.0
    %584 = vmatpush2.msra.mxu0 0.0
    %585 = vmatprep.subr.mxu0 0.0
    %586 = vmatpush2.msra.mxu0 0.0
    %587 = vmatprep.subr.mxu0 0.0
    %588 = vmatpush2.msra.mxu0 0.0
    %589 = vmatprep.subr.mxu0 0.0
    %590 = vmatpush2.msra.mxu0 0.0
    %591 = vmatprep.subr.mxu0 0.0
    %592 = vmatpush2.msra.mxu0 0.0
    %593 = vmatprep.subr.mxu0 0.0
    %594 = vmatpush2.msra.mxu0 0.0
    %595 = vmatprep.subr.mxu0 0.0
    %596 = vmatpush2.msra.mxu0 0.0
    %597 = vmatprep.subr.mxu0 0.0
    %598 = vmatpush2.msra.mxu0 0.0
    %599 = vmatprep.subr.mxu0 0.0
    %600 = vmatpush2.msra.mxu0 0.0
    %601 = vmatprep.subr.mxu0 0.0
    %602 = vmatpush2.msra.mxu0 0.0
    %603 = vmatprep.mubr.f32.mxu0 0.0
    %604 = vmatmul.mubr.f32.gmra.mxu0 %v537
    %v605 = vpop.f32.mrf.mxu0
    %v606 = vadd.f32 %v534, %v605
    %v607 = vpop.f32.mrf.mxu0
    %608 = vdwg.mxu0
    %v609 = vadd.f32 %v606, %v439
    %v610 = vmax.f32 %v609, 0.0
    %v611 = vld [vmem:[#allocation2] sm:$0xff]
    %v612 = vld [vmem:[#allocation2 + $0x8] sm:$0xff]
    %v613 = vld [vmem:[#allocation2 + $0x10] sm:$0xff]
    %v614 = vld [vmem:[#allocation2 + $0x18] sm:$0xff]
    %v615 = vld [vmem:[%s19] sm:$0x1]
    %v617 = vlaneseq
    %v618 = vshrl.u32 %v617, 7
    %v619 = vsub.s32 0, %v618
    %v620 = vrot.slane %v615, %v619
    %v623 = vsel %vm365, %v610, 0
    %625 = vmatprep.subr.mxu0 0.0
    %626 = vmatpush1.msra.mxu0 0.0
    %627 = vmatprep.subr.mxu0 0.0
    %628 = vmatpush1.msra.mxu0 0.0
    %629 = vmatprep.subr.mxu0 0.0
    %630 = vmatpush1.msra.mxu0 0.0
    %631 = vmatprep.subr.mxu0 0.0
    %632 = vmatpush1.msra.mxu0 0.0
    %633 = vmatprep.subr.mxu0 0.0
    %634 = vmatpush1.msra.mxu0 0.0
    %635 = vmatprep.subr.mxu0 0.0
    %636 = vmatpush1.msra.mxu0 0.0
    %637 = vmatprep.subr.mxu0 0.0
    %638 = vmatpush1.msra.mxu0 0.0
    %639 = vmatprep.subr.mxu0 0.0
    %640 = vmatpush1.msra.mxu0 0.0
    %641 = vmatprep.subr.mxu0 0.0
    %642 = vmatpush1.msra.mxu0 0.0
    %643 = vmatprep.subr.mxu0 0.0
    %644 = vmatpush1.msra.mxu0 0.0
    %645 = vmatprep.subr.mxu0 0.0
    %646 = vmatpush1.msra.mxu0 0.0
    %647 = vmatprep.subr.mxu0 0.0
    %648 = vmatpush1.msra.mxu0 0.0
    %649 = vmatprep.subr.mxu0 0.0
    %650 = vmatpush1.msra.mxu0 %v614
    %651 = vmatprep.subr.mxu0 0.0
    %652 = vmatpush1.msra.mxu0 %v613
    %653 = vmatprep.subr.mxu0 0.0
    %654 = vmatpush1.msra.mxu0 %v612
    %655 = vmatprep.subr.mxu0 0.0
    %656 = vmatpush1.msra.mxu0 %v611
    %657 = vmatprep.subr.mxu0 0.0
    %658 = vmatpush2.msra.mxu0 0.0
    %659 = vmatprep.subr.mxu0 0.0
    %660 = vmatpush2.msra.mxu0 0.0
    %661 = vmatprep.subr.mxu0 0.0
    %662 = vmatpush2.msra.mxu0 0.0
    %663 = vmatprep.subr.mxu0 0.0
    %664 = vmatpush2.msra.mxu0 0.0
    %665 = vmatprep.subr.mxu0 0.0
    %666 = vmatpush2.msra.mxu0 0.0
    %667 = vmatprep.subr.mxu0 0.0
    %668 = vmatpush2.msra.mxu0 0.0
    %669 = vmatprep.subr.mxu0 0.0
    %670 = vmatpush2.msra.mxu0 0.0
    %671 = vmatprep.subr.mxu0 0.0
    %672 = vmatpush2.msra.mxu0 0.0
    %673 = vmatprep.subr.mxu0 0.0
    %674 = vmatpush2.msra.mxu0 0.0
    %675 = vmatprep.subr.mxu0 0.0
    %676 = vmatpush2.msra.mxu0 0.0
    %677 = vmatprep.subr.mxu0 0.0
    %678 = vmatpush2.msra.mxu0 0.0
    %679 = vmatprep.subr.mxu0 0.0
    %680 = vmatpush2.msra.mxu0 0.0
    %681 = vmatprep.subr.mxu0 0.0
    %682 = vmatpush2.msra.mxu0 0.0
    %683 = vmatprep.subr.mxu0 0.0
    %684 = vmatpush2.msra.mxu0 0.0
    %685 = vmatprep.subr.mxu0 0.0
    %686 = vmatpush2.msra.mxu0 0.0
    %687 = vmatprep.subr.mxu0 0.0
    %688 = vmatpush2.msra.mxu0 0.0
    %689 = vmatprep.mubr.f32.mxu0 0.0
    %690 = vmatmul.mubr.f32.gmra.mxu0 %v623
    %v691 = vpop.f32.mrf.mxu0
    %v692 = vadd.f32 %v620, %v691
    %v693 = vpop.f32.mrf.mxu0
    %694 = vdwg.mxu0
    %v695 = vmax.f32 %v692, 0.0
    %v696 = vld [vmem:[#allocation5] sm:$0xff]
    %v697 = vld [vmem:[#allocation5 + $0x8] sm:$0xff]
    %v698 = vld [vmem:[#allocation5 + $0x10] sm:$0xff]
    %v699 = vld [vmem:[#allocation5 + $0x18] sm:$0xff]
    %v700 = vld [vmem:[%s23] sm:$0x1]
    %v702 = vlaneseq
    %v703 = vshrl.u32 %v702, 7
    %v704 = vsub.s32 0, %v703
    %v705 = vrot.slane %v700, %v704
    %v708 = vsel %vm365, %v695, 0
    %710 = vmatprep.subr.mxu0 0.0
    %711 = vmatpush1.msra.mxu0 0.0
    %712 = vmatprep.subr.mxu0 0.0
    %713 = vmatpush1.msra.mxu0 0.0
    %714 = vmatprep.subr.mxu0 0.0
    %715 = vmatpush1.msra.mxu0 0.0
    %716 = vmatprep.subr.mxu0 0.0
    %717 = vmatpush1.msra.mxu0 0.0
    %718 = vmatprep.subr.mxu0 0.0
    %719 = vmatpush1.msra.mxu0 0.0
    %720 = vmatprep.subr.mxu0 0.0
    %721 = vmatpush1.msra.mxu0 0.0
    %722 = vmatprep.subr.mxu0 0.0
    %723 = vmatpush1.msra.mxu0 0.0
    %724 = vmatprep.subr.mxu0 0.0
    %725 = vmatpush1.msra.mxu0 0.0
    %726 = vmatprep.subr.mxu0 0.0
    %727 = vmatpush1.msra.mxu0 0.0
    %728 = vmatprep.subr.mxu0 0.0
    %729 = vmatpush1.msra.mxu0 0.0
    %730 = vmatprep.subr.mxu0 0.0
    %731 = vmatpush1.msra.mxu0 0.0
    %732 = vmatprep.subr.mxu0 0.0
    %733 = vmatpush1.msra.mxu0 0.0
    %734 = vmatprep.subr.mxu0 0.0
    %735 = vmatpush1.msra.mxu0 %v699
    %736 = vmatprep.subr.mxu0 0.0
    %737 = vmatpush1.msra.mxu0 %v698
    %738 = vmatprep.subr.mxu0 0.0
    %739 = vmatpush1.msra.mxu0 %v697
    %740 = vmatprep.subr.mxu0 0.0
    %741 = vmatpush1.msra.mxu0 %v696
    %742 = vmatprep.subr.mxu0 0.0
    %743 = vmatpush2.msra.mxu0 0.0
    %744 = vmatprep.subr.mxu0 0.0
    %745 = vmatpush2.msra.mxu0 0.0
    %746 = vmatprep.subr.mxu0 0.0
    %747 = vmatpush2.msra.mxu0 0.0
    %748 = vmatprep.subr.mxu0 0.0
    %749 = vmatpush2.msra.mxu0 0.0
    %750 = vmatprep.subr.mxu0 0.0
    %751 = vmatpush2.msra.mxu0 0.0
    %752 = vmatprep.subr.mxu0 0.0
    %753 = vmatpush2.msra.mxu0 0.0
    %754 = vmatprep.subr.mxu0 0.0
    %755 = vmatpush2.msra.mxu0 0.0
    %756 = vmatprep.subr.mxu0 0.0
    %757 = vmatpush2.msra.mxu0 0.0
    %758 = vmatprep.subr.mxu0 0.0
    %759 = vmatpush2.msra.mxu0 0.0
    %760 = vmatprep.subr.mxu0 0.0
    %761 = vmatpush2.msra.mxu0 0.0
    %762 = vmatprep.subr.mxu0 0.0
    %763 = vmatpush2.msra.mxu0 0.0
    %764 = vmatprep.subr.mxu0 0.0
    %765 = vmatpush2.msra.mxu0 0.0
    %766 = vmatprep.subr.mxu0 0.0
    %767 = vmatpush2.msra.mxu0 0.0
    %768 = vmatprep.subr.mxu0 0.0
    %769 = vmatpush2.msra.mxu0 0.0
    %770 = vmatprep.subr.mxu0 0.0
    %771 = vmatpush2.msra.mxu0 0.0
    %772 = vmatprep.subr.mxu0 0.0
    %773 = vmatpush2.msra.mxu0 0.0
    %774 = vmatprep.mubr.f32.mxu0 0.0
    %775 = vmatmul.mubr.f32.gmra.mxu0 %v708
    %v776 = vpop.f32.mrf.mxu0
    %v777 = vadd.f32 %v705, %v776
    %v778 = vpop.f32.mrf.mxu0
    %779 = vdwg.mxu0
    %v780 = vadd.f32 %v777, %v610
    %v781 = vmax.f32 %v780, 0.0
    %v782 = vld [vmem:[#allocation7] sm:$0xff]
    %v783 = vld [vmem:[#allocation7 + $0x8] sm:$0xff]
    %v784 = vld [vmem:[#allocation8] sm:$0x1]
    %v786 = vlaneseq
    %v787 = vshrl.u32 %v786, 7
    %v788 = vsub.s32 0, %v787
    %v789 = vrot.slane %v784, %v788
    %vm791 = vcmask 130048
    %v793 = vsel %vm791, %v353, 0
    %795 = vmatprep.subr.mxu0 0.0
    %796 = vmatpush1.msra.mxu0 0.0
    %797 = vmatprep.subr.mxu0 0.0
    %798 = vmatpush1.msra.mxu0 0.0
    %799 = vmatprep.subr.mxu0 0.0
    %800 = vmatpush1.msra.mxu0 0.0
    %801 = vmatprep.subr.mxu0 0.0
    %802 = vmatpush1.msra.mxu0 0.0
    %803 = vmatprep.subr.mxu0 0.0
    %804 = vmatpush1.msra.mxu0 0.0
    %805 = vmatprep.subr.mxu0 0.0
    %806 = vmatpush1.msra.mxu0 0.0
    %807 = vmatprep.subr.mxu0 0.0
    %808 = vmatpush1.msra.mxu0 0.0
    %809 = vmatprep.subr.mxu0 0.0
    %810 = vmatpush1.msra.mxu0 0.0
    %811 = vmatprep.subr.mxu0 0.0
    %812 = vmatpush1.msra.mxu0 0.0
    %813 = vmatprep.subr.mxu0 0.0
    %814 = vmatpush1.msra.mxu0 0.0
    %815 = vmatprep.subr.mxu0 0.0
    %816 = vmatpush1.msra.mxu0 0.0
    %817 = vmatprep.subr.mxu0 0.0
    %818 = vmatpush1.msra.mxu0 0.0
    %819 = vmatprep.subr.mxu0 0.0
    %820 = vmatpush1.msra.mxu0 0.0
    %821 = vmatprep.subr.mxu0 0.0
    %822 = vmatpush1.msra.mxu0 0.0
    %823 = vmatprep.subr.mxu0 0.0
    %824 = vmatpush1.msra.mxu0 %v783
    %825 = vmatprep.subr.mxu0 0.0
    %826 = vmatpush1.msra.mxu0 %v782
    %827 = vmatprep.subr.mxu0 0.0
    %828 = vmatpush2.msra.mxu0 0.0
    %829 = vmatprep.subr.mxu0 0.0
    %830 = vmatpush2.msra.mxu0 0.0
    %831 = vmatprep.subr.mxu0 0.0
    %832 = vmatpush2.msra.mxu0 0.0
    %833 = vmatprep.subr.mxu0 0.0
    %834 = vmatpush2.msra.mxu0 0.0
    %835 = vmatprep.subr.mxu0 0.0
    %836 = vmatpush2.msra.mxu0 0.0
    %837 = vmatprep.subr.mxu0 0.0
    %838 = vmatpush2.msra.mxu0 0.0
    %839 = vmatprep.subr.mxu0 0.0
    %840 = vmatpush2.msra.mxu0 0.0
    %841 = vmatprep.subr.mxu0 0.0
    %842 = vmatpush2.msra.mxu0 0.0
    %843 = vmatprep.subr.mxu0 0.0
    %844 = vmatpush2.msra.mxu0 0.0
    %845 = vmatprep.subr.mxu0 0.0
    %846 = vmatpush2.msra.mxu0 0.0
    %847 = vmatprep.subr.mxu0 0.0
    %848 = vmatpush2.msra.mxu0 0.0
    %849 = vmatprep.subr.mxu0 0.0
    %850 = vmatpush2.msra.mxu0 0.0
    %851 = vmatprep.subr.mxu0 0.0
    %852 = vmatpush2.msra.mxu0 0.0
    %853 = vmatprep.subr.mxu0 0.0
    %854 = vmatpush2.msra.mxu0 0.0
    %855 = vmatprep.subr.mxu0 0.0
    %856 = vmatpush2.msra.mxu0 0.0
    %857 = vmatprep.subr.mxu0 0.0
    %858 = vmatpush2.msra.mxu0 0.0
    %859 = vmatprep.mubr.f32.mxu0 0.0
    %860 = vmatmul.mubr.f32.gmra.mxu0 %v793
    %v861 = vpop.f32.mrf.mxu0
    %v862 = vadd.f32 %v789, %v861
    %v863 = vpop.f32.mrf.mxu0
    %864 = vdwg.mxu0
    %v865 = vxor.u32 %v862, 2147483648
    %v866 = vmul.f32 %v865, 1.442695
    %v867 = vpow.pop %v866
    %v868 = vadd.f32 %v867, 1.0
    %v869 = vrcp.pop %v868
    %v870 = vmul.f32 1.0, %v869
    %v871 = vld [vmem:[#allocation10] sm:$0xff]
    %v872 = vld [vmem:[#allocation10 + $0x8] sm:$0xff]
    %v873 = vld [vmem:[#allocation10 + $0x10] sm:$0xff]
    %v874 = vld [vmem:[#allocation10 + $0x18] sm:$0xff]
    %v875 = vld [vmem:[#allocation11] sm:$0x1]
    %v877 = vlaneseq
    %v878 = vshrl.u32 %v877, 7
    %v879 = vsub.s32 0, %v878
    %v880 = vrot.slane %v875, %v879
    %v883 = vsel %vm365, %v781, 0
    %885 = vmatprep.subr.mxu0 0.0
    %886 = vmatpush1.msra.mxu0 0.0
    %887 = vmatprep.subr.mxu0 0.0
    %888 = vmatpush1.msra.mxu0 0.0
    %889 = vmatprep.subr.mxu0 0.0
    %890 = vmatpush1.msra.mxu0 0.0
    %891 = vmatprep.subr.mxu0 0.0
    %892 = vmatpush1.msra.mxu0 0.0
    %893 = vmatprep.subr.mxu0 0.0
    %894 = vmatpush1.msra.mxu0 0.0
    %895 = vmatprep.subr.mxu0 0.0
    %896 = vmatpush1.msra.mxu0 0.0
    %897 = vmatprep.subr.mxu0 0.0
    %898 = vmatpush1.msra.mxu0 0.0
    %899 = vmatprep.subr.mxu0 0.0
    %900 = vmatpush1.msra.mxu0 0.0
    %901 = vmatprep.subr.mxu0 0.0
    %902 = vmatpush1.msra.mxu0 0.0
    %903 = vmatprep.subr.mxu0 0.0
    %904 = vmatpush1.msra.mxu0 0.0
    %905 = vmatprep.subr.mxu0 0.0
    %906 = vmatpush1.msra.mxu0 0.0
    %907 = vmatprep.subr.mxu0 0.0
    %908 = vmatpush1.msra.mxu0 0.0
    %909 = vmatprep.subr.mxu0 0.0
    %910 = vmatpush1.msra.mxu0 %v874
    %911 = vmatprep.subr.mxu0 0.0
    %912 = vmatpush1.msra.mxu0 %v873
    %913 = vmatprep.subr.mxu0 0.0
    %914 = vmatpush1.msra.mxu0 %v872
    %915 = vmatprep.subr.mxu0 0.0
    %916 = vmatpush1.msra.mxu0 %v871
    %917 = vmatprep.subr.mxu0 0.0
    %918 = vmatpush2.msra.mxu0 0.0
    %919 = vmatprep.subr.mxu0 0.0
    %920 = vmatpush2.msra.mxu0 0.0
    %921 = vmatprep.subr.mxu0 0.0
    %922 = vmatpush2.msra.mxu0 0.0
    %923 = vmatprep.subr.mxu0 0.0
    %924 = vmatpush2.msra.mxu0 0.0
    %925 = vmatprep.subr.mxu0 0.0
    %926 = vmatpush2.msra.mxu0 0.0
    %927 = vmatprep.subr.mxu0 0.0
    %928 = vmatpush2.msra.mxu0 0.0
    %929 = vmatprep.subr.mxu0 0.0
    %930 = vmatpush2.msra.mxu0 0.0
    %931 = vmatprep.subr.mxu0 0.0
    %932 = vmatpush2.msra.mxu0 0.0
    %933 = vmatprep.subr.mxu0 0.0
    %934 = vmatpush2.msra.mxu0 0.0
    %935 = vmatprep.subr.mxu0 0.0
    %936 = vmatpush2.msra.mxu0 0.0
    %937 = vmatprep.subr.mxu0 0.0
    %938 = vmatpush2.msra.mxu0 0.0
    %939 = vmatprep.subr.mxu0 0.0
    %940 = vmatpush2.msra.mxu0 0.0
    %941 = vmatprep.subr.mxu0 0.0
    %942 = vmatpush2.msra.mxu0 0.0
    %943 = vmatprep.subr.mxu0 0.0
    %944 = vmatpush2.msra.mxu0 0.0
    %945 = vmatprep.subr.mxu0 0.0
    %946 = vmatpush2.msra.mxu0 0.0
    %947 = vmatprep.subr.mxu0 0.0
    %948 = vmatpush2.msra.mxu0 0.0
    %949 = vmatprep.mubr.f32.mxu0 0.0
    %950 = vmatmul.mubr.f32.gmra.mxu0 %v883
    %v951 = vpop.f32.mrf.mxu0
    %v952 = vadd.f32 %v880, %v951
    %v953 = vpop.f32.mrf.mxu0
    %954 = vdwg.mxu0
    %v955 = vmul.f32 %v870, %v952
    %vm956 = vcmask 254976
    %v957 = vsel %vm956, %v955, -inf
    %958 = vmax.xlane.f32.xlu0 %v957
    %v959 = vpop.xlane.xlu0 %958
    %v960 = vlaneseq
    %v961 = vand.u32 %v960, 127
    %vm962 = vcmp.ge.f32.partialorder %v955, %v959
    %v963 = vsel %vm962, %v961, 32
    %v964 = vsel %vm956, %v963, 2147483647
    %v965 = vand.u32 %v964, 65535
    %v966 = vshra.s32 %v964, 16
    %v967 = vcvt.s32.f32 %v965
    %v968 = vcvt.s32.f32 %v966
    %969 = vmin.xlane.f32.xlu0 %v968
    %v970 = vpop.xlane.xlu0 %969
    %vm971 = vcmp.eq.f32.partialorder %v968, %v970
    %v972 = vsel %vm971, %v967, inf
    %973 = vmin.xlane.f32.xlu0 %v972
    %v974 = vpop.xlane.xlu0 %973
    %v975 = vcvt.f32.s32 %v974
    %v976 = vcvt.f32.s32 %v970
    %v977 = vshll.u32 %v976, 16
    %v978 = vadd.s32 %v977, %v975
    %vm979 = vcmp.eq.s32.totalorder %v961, %v978
    %v980 = vsel %vm979, 1, 0
    %v981 = vcvt.s32.f32 %v980
    %v982 = vld [vmem:[#allocation13] sm:$0xff]
    %v983 = vld [vmem:[#allocation13 + $0x8] sm:$0xff]
    %v984 = vld [vmem:[#allocation13 + $0x10] sm:$0xff]
    %v985 = vld [vmem:[#allocation13 + $0x18] sm:$0xff]
    %v986 = vld [vmem:[#allocation14] sm:$0x1]
    %v988 = vlaneseq
    %v989 = vshrl.u32 %v988, 7
    %v990 = vsub.s32 0, %v989
    %v991 = vrot.slane %v986, %v990
    %v994 = vsel %vm365, %v981, 0
    %996 = vmatprep.subr.mxu0 0.0
    %997 = vmatpush1.msra.mxu0 0.0
    %998 = vmatprep.subr.mxu0 0.0
    %999 = vmatpush1.msra.mxu0 0.0
    %1000 = vmatprep.subr.mxu0 0.0
    %1001 = vmatpush1.msra.mxu0 0.0
    %1002 = vmatprep.subr.mxu0 0.0
    %1003 = vmatpush1.msra.mxu0 0.0
    %1004 = vmatprep.subr.mxu0 0.0
    %1005 = vmatpush1.msra.mxu0 0.0
    %1006 = vmatprep.subr.mxu0 0.0
    %1007 = vmatpush1.msra.mxu0 0.0
    %1008 = vmatprep.subr.mxu0 0.0
    %1009 = vmatpush1.msra.mxu0 0.0
    %1010 = vmatprep.subr.mxu0 0.0
    %1011 = vmatpush1.msra.mxu0 0.0
    %1012 = vmatprep.subr.mxu0 0.0
    %1013 = vmatpush1.msra.mxu0 0.0
    %1014 = vmatprep.subr.mxu0 0.0
    %1015 = vmatpush1.msra.mxu0 0.0
    %1016 = vmatprep.subr.mxu0 0.0
    %1017 = vmatpush1.msra.mxu0 0.0
    %1018 = vmatprep.subr.mxu0 0.0
    %1019 = vmatpush1.msra.mxu0 0.0
    %1020 = vmatprep.subr.mxu0 0.0
    %1021 = vmatpush1.msra.mxu0 %v985
    %1022 = vmatprep.subr.mxu0 0.0
    %1023 = vmatpush1.msra.mxu0 %v984
    %1024 = vmatprep.subr.mxu0 0.0
    %1025 = vmatpush1.msra.mxu0 %v983
    %1026 = vmatprep.subr.mxu0 0.0
    %1027 = vmatpush1.msra.mxu0 %v982
    %1028 = vmatprep.subr.mxu0 0.0
    %1029 = vmatpush2.msra.mxu0 0.0
    %1030 = vmatprep.subr.mxu0 0.0
    %1031 = vmatpush2.msra.mxu0 0.0
    %1032 = vmatprep.subr.mxu0 0.0
    %1033 = vmatpush2.msra.mxu0 0.0
    %1034 = vmatprep.subr.mxu0 0.0
    %1035 = vmatpush2.msra.mxu0 0.0
    %1036 = vmatprep.subr.mxu0 0.0
    %1037 = vmatpush2.msra.mxu0 0.0
    %1038 = vmatprep.subr.mxu0 0.0
    %1039 = vmatpush2.msra.mxu0 0.0
    %1040 = vmatprep.subr.mxu0 0.0
    %1041 = vmatpush2.msra.mxu0 0.0
    %1042 = vmatprep.subr.mxu0 0.0
    %1043 = vmatpush2.msra.mxu0 0.0
    %1044 = vmatprep.subr.mxu0 0.0
    %1045 = vmatpush2.msra.mxu0 0.0
    %1046 = vmatprep.subr.mxu0 0.0
    %1047 = vmatpush2.msra.mxu0 0.0
    %1048 = vmatprep.subr.mxu0 0.0
    %1049 = vmatpush2.msra.mxu0 0.0
    %1050 = vmatprep.subr.mxu0 0.0
    %1051 = vmatpush2.msra.mxu0 0.0
    %1052 = vmatprep.subr.mxu0 0.0
    %1053 = vmatpush2.msra.mxu0 0.0
    %1054 = vmatprep.subr.mxu0 0.0
    %1055 = vmatpush2.msra.mxu0 0.0
    %1056 = vmatprep.subr.mxu0 0.0
    %1057 = vmatpush2.msra.mxu0 0.0
    %1058 = vmatprep.subr.mxu0 0.0
    %1059 = vmatpush2.msra.mxu0 0.0
    %1060 = vmatprep.mubr.f32.mxu0 0.0
    %1061 = vmatmul.mubr.f32.gmra.mxu0 %v994
    %v1062 = vpop.f32.mrf.mxu0
    %v1063 = vadd.f32 %v991, %v1062
    %v1064 = vpop.f32.mrf.mxu0
    %1065 = vdwg.mxu0
    %v1066 = vmax.f32 %v1063, 0.0
    %v1067 = vld [vmem:[#allocation16] sm:$0xff]
    %v1068 = vld [vmem:[#allocation16 + $0x8] sm:$0xff]
    %v1069 = vld [vmem:[#allocation16 + $0x10] sm:$0xff]
    %v1070 = vld [vmem:[#allocation16 + $0x18] sm:$0xff]
    %v1071 = vld [vmem:[#allocation17] sm:$0x1]
    %v1073 = vlaneseq
    %v1074 = vshrl.u32 %v1073, 7
    %v1075 = vsub.s32 0, %v1074
    %v1076 = vrot.slane %v1071, %v1075
    %v1079 = vsel %vm365, %v1066, 0
    %1081 = vmatprep.subr.mxu0 0.0
    %1082 = vmatpush1.msra.mxu0 0.0
    %1083 = vmatprep.subr.mxu0 0.0
    %1084 = vmatpush1.msra.mxu0 0.0
    %1085 = vmatprep.subr.mxu0 0.0
    %1086 = vmatpush1.msra.mxu0 0.0
    %1087 = vmatprep.subr.mxu0 0.0
    %1088 = vmatpush1.msra.mxu0 0.0
    %1089 = vmatprep.subr.mxu0 0.0
    %1090 = vmatpush1.msra.mxu0 0.0
    %1091 = vmatprep.subr.mxu0 0.0
    %1092 = vmatpush1.msra.mxu0 0.0
    %1093 = vmatprep.subr.mxu0 0.0
    %1094 = vmatpush1.msra.mxu0 0.0
    %1095 = vmatprep.subr.mxu0 0.0
    %1096 = vmatpush1.msra.mxu0 0.0
    %1097 = vmatprep.subr.mxu0 0.0
    %1098 = vmatpush1.msra.mxu0 0.0
    %1099 = vmatprep.subr.mxu0 0.0
    %1100 = vmatpush1.msra.mxu0 0.0
    %1101 = vmatprep.subr.mxu0 0.0
    %1102 = vmatpush1.msra.mxu0 0.0
    %1103 = vmatprep.subr.mxu0 0.0
    %1104 = vmatpush1.msra.mxu0 0.0
    %1105 = vmatprep.subr.mxu0 0.0
    %1106 = vmatpush1.msra.mxu0 %v1070
    %1107 = vmatprep.subr.mxu0 0.0
    %1108 = vmatpush1.msra.mxu0 %v1069
    %1109 = vmatprep.subr.mxu0 0.0
    %1110 = vmatpush1.msra.mxu0 %v1068
    %1111 = vmatprep.subr.mxu0 0.0
    %1112 = vmatpush1.msra.mxu0 %v1067
    %1113 = vmatprep.subr.mxu0 0.0
    %1114 = vmatpush2.msra.mxu0 0.0
    %1115 = vmatprep.subr.mxu0 0.0
    %1116 = vmatpush2.msra.mxu0 0.0
    %1117 = vmatprep.subr.mxu0 0.0
    %1118 = vmatpush2.msra.mxu0 0.0
    %1119 = vmatprep.subr.mxu0 0.0
    %1120 = vmatpush2.msra.mxu0 0.0
    %1121 = vmatprep.subr.mxu0 0.0
    %1122 = vmatpush2.msra.mxu0 0.0
    %1123 = vmatprep.subr.mxu0 0.0
    %1124 = vmatpush2.msra.mxu0 0.0
    %1125 = vmatprep.subr.mxu0 0.0
    %1126 = vmatpush2.msra.mxu0 0.0
    %1127 = vmatprep.subr.mxu0 0.0
    %1128 = vmatpush2.msra.mxu0 0.0
    %1129 = vmatprep.subr.mxu0 0.0
    %1130 = vmatpush2.msra.mxu0 0.0
    %1131 = vmatprep.subr.mxu0 0.0
    %1132 = vmatpush2.msra.mxu0 0.0
    %1133 = vmatprep.subr.mxu0 0.0
    %1134 = vmatpush2.msra.mxu0 0.0
    %1135 = vmatprep.subr.mxu0 0.0
    %1136 = vmatpush2.msra.mxu0 0.0
    %1137 = vmatprep.subr.mxu0 0.0
    %1138 = vmatpush2.msra.mxu0 0.0
    %1139 = vmatprep.subr.mxu0 0.0
    %1140 = vmatpush2.msra.mxu0 0.0
    %1141 = vmatprep.subr.mxu0 0.0
    %1142 = vmatpush2.msra.mxu0 0.0
    %1143 = vmatprep.subr.mxu0 0.0
    %1144 = vmatpush2.msra.mxu0 0.0
    %1145 = vmatprep.mubr.f32.mxu0 0.0
    %1146 = vmatmul.mubr.f32.gmra.mxu0 %v1079
    %v1147 = vpop.f32.mrf.mxu0
    %v1148 = vadd.f32 %v1076, %v1147
    %v1149 = vpop.f32.mrf.mxu0
    %1150 = vdwg.mxu0
    %v1151 = vld [vmem:[#allocation19] sm:$0xff]
    %v1152 = vld [vmem:[#allocation19 + $0x8] sm:$0xff]
    %v1153 = vld [vmem:[#allocation20] sm:$0x1]
    %v1155 = vlaneseq
    %v1156 = vshrl.u32 %v1155, 7
    %v1157 = vsub.s32 0, %v1156
    %v1158 = vrot.slane %v1153, %v1157
    %1160 = vmatprep.subr.mxu0 0.0
    %1161 = vmatpush1.msra.mxu0 0.0
    %1162 = vmatprep.subr.mxu0 0.0
    %1163 = vmatpush1.msra.mxu0 0.0
    %1164 = vmatprep.subr.mxu0 0.0
    %1165 = vmatpush1.msra.mxu0 0.0
    %1166 = vmatprep.subr.mxu0 0.0
    %1167 = vmatpush1.msra.mxu0 0.0
    %1168 = vmatprep.subr.mxu0 0.0
    %1169 = vmatpush1.msra.mxu0 0.0
    %1170 = vmatprep.subr.mxu0 0.0
    %1171 = vmatpush1.msra.mxu0 0.0
    %1172 = vmatprep.subr.mxu0 0.0
    %1173 = vmatpush1.msra.mxu0 0.0
    %1174 = vmatprep.subr.mxu0 0.0
    %1175 = vmatpush1.msra.mxu0 0.0
    %1176 = vmatprep.subr.mxu0 0.0
    %1177 = vmatpush1.msra.mxu0 0.0
    %1178 = vmatprep.subr.mxu0 0.0
    %1179 = vmatpush1.msra.mxu0 0.0
    %1180 = vmatprep.subr.mxu0 0.0
    %1181 = vmatpush1.msra.mxu0 0.0
    %1182 = vmatprep.subr.mxu0 0.0
    %1183 = vmatpush1.msra.mxu0 0.0
    %1184 = vmatprep.subr.mxu0 0.0
    %1185 = vmatpush1.msra.mxu0 0.0
    %1186 = vmatprep.subr.mxu0 0.0
    %1187 = vmatpush1.msra.mxu0 0.0
    %1188 = vmatprep.subr.mxu0 0.0
    %1189 = vmatpush1.msra.mxu0 %v1152
    %1190 = vmatprep.subr.mxu0 0.0
    %1191 = vmatpush1.msra.mxu0 %v1151
    %1192 = vmatprep.subr.mxu0 0.0
    %1193 = vmatpush2.msra.mxu0 0.0
    %1194 = vmatprep.subr.mxu0 0.0
    %1195 = vmatpush2.msra.mxu0 0.0
    %1196 = vmatprep.subr.mxu0 0.0
    %1197 = vmatpush2.msra.mxu0 0.0
    %1198 = vmatprep.subr.mxu0 0.0
    %1199 = vmatpush2.msra.mxu0 0.0
    %1200 = vmatprep.subr.mxu0 0.0
    %1201 = vmatpush2.msra.mxu0 0.0
    %1202 = vmatprep.subr.mxu0 0.0
    %1203 = vmatpush2.msra.mxu0 0.0
    %1204 = vmatprep.subr.mxu0 0.0
    %1205 = vmatpush2.msra.mxu0 0.0
    %1206 = vmatprep.subr.mxu0 0.0
    %1207 = vmatpush2.msra.mxu0 0.0
    %1208 = vmatprep.subr.mxu0 0.0
    %1209 = vmatpush2.msra.mxu0 0.0
    %1210 = vmatprep.subr.mxu0 0.0
    %1211 = vmatpush2.msra.mxu0 0.0
    %1212 = vmatprep.subr.mxu0 0.0
    %1213 = vmatpush2.msra.mxu0 0.0
    %1214 = vmatprep.subr.mxu0 0.0
    %1215 = vmatpush2.msra.mxu0 0.0
    %1216 = vmatprep.subr.mxu0 0.0
    %1217 = vmatpush2.msra.mxu0 0.0
    %1218 = vmatprep.subr.mxu0 0.0
    %1219 = vmatpush2.msra.mxu0 0.0
    %1220 = vmatprep.subr.mxu0 0.0
    %1221 = vmatpush2.msra.mxu0 0.0
    %1222 = vmatprep.subr.mxu0 0.0
    %1223 = vmatpush2.msra.mxu0 0.0
    %1224 = vmatprep.mubr.f32.mxu0 0.0
    %1225 = vmatmul.mubr.f32.gmra.mxu0 %v793
    %v1226 = vpop.f32.mrf.mxu0
    %v1227 = vadd.f32 %v1158, %v1226
    %v1228 = vpop.f32.mrf.mxu0
    %1229 = vdwg.mxu0
    %v1230 = vxor.u32 %v1227, 2147483648
    %v1231 = vmul.f32 %v1230, 1.442695
    %v1232 = vpow.pop %v1231
    %v1233 = vadd.f32 %v1232, 1.0
    %v1234 = vrcp.pop %v1233
    %v1235 = vmul.f32 1.0, %v1234
    %v1236 = vld [vmem:[#allocation22] sm:$0xff]
    %v1237 = vld [vmem:[#allocation22 + $0x8] sm:$0xff]
    %v1238 = vld [vmem:[#allocation22 + $0x10] sm:$0xff]
    %v1239 = vld [vmem:[#allocation22 + $0x18] sm:$0xff]
    %v1240 = vld [vmem:[#allocation23] sm:$0x1]
    %v1242 = vlaneseq
    %v1243 = vshrl.u32 %v1242, 7
    %v1244 = vsub.s32 0, %v1243
    %v1245 = vrot.slane %v1240, %v1244
    %v1248 = vsel %vm365, %v1148, 0
    %1250 = vmatprep.subr.mxu0 0.0
    %1251 = vmatpush1.msra.mxu0 0.0
    %1252 = vmatprep.subr.mxu0 0.0
    %1253 = vmatpush1.msra.mxu0 0.0
    %1254 = vmatprep.subr.mxu0 0.0
    %1255 = vmatpush1.msra.mxu0 0.0
    %1256 = vmatprep.subr.mxu0 0.0
    %1257 = vmatpush1.msra.mxu0 0.0
    %1258 = vmatprep.subr.mxu0 0.0
    %1259 = vmatpush1.msra.mxu0 0.0
    %1260 = vmatprep.subr.mxu0 0.0
    %1261 = vmatpush1.msra.mxu0 0.0
    %1262 = vmatprep.subr.mxu0 0.0
    %1263 = vmatpush1.msra.mxu0 0.0
    %1264 = vmatprep.subr.mxu0 0.0
    %1265 = vmatpush1.msra.mxu0 0.0
    %1266 = vmatprep.subr.mxu0 0.0
    %1267 = vmatpush1.msra.mxu0 0.0
    %1268 = vmatprep.subr.mxu0 0.0
    %1269 = vmatpush1.msra.mxu0 0.0
    %1270 = vmatprep.subr.mxu0 0.0
    %1271 = vmatpush1.msra.mxu0 0.0
    %1272 = vmatprep.subr.mxu0 0.0
    %1273 = vmatpush1.msra.mxu0 0.0
    %1274 = vmatprep.subr.mxu0 0.0
    %1275 = vmatpush1.msra.mxu0 %v1239
    %1276 = vmatprep.subr.mxu0 0.0
    %1277 = vmatpush1.msra.mxu0 %v1238
    %1278 = vmatprep.subr.mxu0 0.0
    %1279 = vmatpush1.msra.mxu0 %v1237
    %1280 = vmatprep.subr.mxu0 0.0
    %1281 = vmatpush1.msra.mxu0 %v1236
    %1282 = vmatprep.subr.mxu0 0.0
    %1283 = vmatpush2.msra.mxu0 0.0
    %1284 = vmatprep.subr.mxu0 0.0
    %1285 = vmatpush2.msra.mxu0 0.0
    %1286 = vmatprep.subr.mxu0 0.0
    %1287 = vmatpush2.msra.mxu0 0.0
    %1288 = vmatprep.subr.mxu0 0.0
    %1289 = vmatpush2.msra.mxu0 0.0
    %1290 = vmatprep.subr.mxu0 0.0
    %1291 = vmatpush2.msra.mxu0 0.0
    %1292 = vmatprep.subr.mxu0 0.0
    %1293 = vmatpush2.msra.mxu0 0.0
    %1294 = vmatprep.subr.mxu0 0.0
    %1295 = vmatpush2.msra.mxu0 0.0
    %1296 = vmatprep.subr.mxu0 0.0
    %1297 = vmatpush2.msra.mxu0 0.0
    %1298 = vmatprep.subr.mxu0 0.0
    %1299 = vmatpush2.msra.mxu0 0.0
    %1300 = vmatprep.subr.mxu0 0.0
    %1301 = vmatpush2.msra.mxu0 0.0
    %1302 = vmatprep.subr.mxu0 0.0
    %1303 = vmatpush2.msra.mxu0 0.0
    %1304 = vmatprep.subr.mxu0 0.0
    %1305 = vmatpush2.msra.mxu0 0.0
    %1306 = vmatprep.subr.mxu0 0.0
    %1307 = vmatpush2.msra.mxu0 0.0
    %1308 = vmatprep.subr.mxu0 0.0
    %1309 = vmatpush2.msra.mxu0 0.0
    %1310 = vmatprep.subr.mxu0 0.0
    %1311 = vmatpush2.msra.mxu0 0.0
    %1312 = vmatprep.subr.mxu0 0.0
    %1313 = vmatpush2.msra.mxu0 0.0
    %1314 = vmatprep.mubr.f32.mxu0 0.0
    %1315 = vmatmul.mubr.f32.gmra.mxu0 %v1248
    %v1316 = vpop.f32.mrf.mxu0
    %v1317 = vadd.f32 %v1245, %v1316
    %v1318 = vpop.f32.mrf.mxu0
    %1319 = vdwg.mxu0
    %v1320 = vmul.f32 %v1235, %v1317
    %v1321 = vld [vmem:[#allocation25] sm:$0xff]
    %v1322 = vld [vmem:[#allocation25 + $0x8] sm:$0xff]
    %v1323 = vld [vmem:[#allocation26] sm:$0x1]
    %v1325 = vlaneseq
    %v1326 = vshrl.u32 %v1325, 7
    %v1327 = vsub.s32 0, %v1326
    %v1328 = vrot.slane %v1323, %v1327
    %1330 = vmatprep.subr.mxu0 0.0
    %1331 = vmatpush1.msra.mxu0 0.0
    %1332 = vmatprep.subr.mxu0 0.0
    %1333 = vmatpush1.msra.mxu0 0.0
    %1334 = vmatprep.subr.mxu0 0.0
    %1335 = vmatpush1.msra.mxu0 0.0
    %1336 = vmatprep.subr.mxu0 0.0
    %1337 = vmatpush1.msra.mxu0 0.0
    %1338 = vmatprep.subr.mxu0 0.0
    %1339 = vmatpush1.msra.mxu0 0.0
    %1340 = vmatprep.subr.mxu0 0.0
    %1341 = vmatpush1.msra.mxu0 0.0
    %1342 = vmatprep.subr.mxu0 0.0
    %1343 = vmatpush1.msra.mxu0 0.0
    %1344 = vmatprep.subr.mxu0 0.0
    %1345 = vmatpush1.msra.mxu0 0.0
    %1346 = vmatprep.subr.mxu0 0.0
    %1347 = vmatpush1.msra.mxu0 0.0
    %1348 = vmatprep.subr.mxu0 0.0
    %1349 = vmatpush1.msra.mxu0 0.0
    %1350 = vmatprep.subr.mxu0 0.0
    %1351 = vmatpush1.msra.mxu0 0.0
    %1352 = vmatprep.subr.mxu0 0.0
    %1353 = vmatpush1.msra.mxu0 0.0
    %1354 = vmatprep.subr.mxu0 0.0
    %1355 = vmatpush1.msra.mxu0 0.0
    %1356 = vmatprep.subr.mxu0 0.0
    %1357 = vmatpush1.msra.mxu0 0.0
    %1358 = vmatprep.subr.mxu0 0.0
    %1359 = vmatpush1.msra.mxu0 %v1322
    %1360 = vmatprep.subr.mxu0 0.0
    %1361 = vmatpush1.msra.mxu0 %v1321
    %1362 = vmatprep.subr.mxu0 0.0
    %1363 = vmatpush2.msra.mxu0 0.0
    %1364 = vmatprep.subr.mxu0 0.0
    %1365 = vmatpush2.msra.mxu0 0.0
    %1366 = vmatprep.subr.mxu0 0.0
    %1367 = vmatpush2.msra.mxu0 0.0
    %1368 = vmatprep.subr.mxu0 0.0
    %1369 = vmatpush2.msra.mxu0 0.0
    %1370 = vmatprep.subr.mxu0 0.0
    %1371 = vmatpush2.msra.mxu0 0.0
    %1372 = vmatprep.subr.mxu0 0.0
    %1373 = vmatpush2.msra.mxu0 0.0
    %1374 = vmatprep.subr.mxu0 0.0
    %1375 = vmatpush2.msra.mxu0 0.0
    %1376 = vmatprep.subr.mxu0 0.0
    %1377 = vmatpush2.msra.mxu0 0.0
    %1378 = vmatprep.subr.mxu0 0.0
    %1379 = vmatpush2.msra.mxu0 0.0
    %1380 = vmatprep.subr.mxu0 0.0
    %1381 = vmatpush2.msra.mxu0 0.0
    %1382 = vmatprep.subr.mxu0 0.0
    %1383 = vmatpush2.msra.mxu0 0.0
    %1384 = vmatprep.subr.mxu0 0.0
    %1385 = vmatpush2.msra.mxu0 0.0
    %1386 = vmatprep.subr.mxu0 0.0
    %1387 = vmatpush2.msra.mxu0 0.0
    %1388 = vmatprep.subr.mxu0 0.0
    %1389 = vmatpush2.msra.mxu0 0.0
    %1390 = vmatprep.subr.mxu0 0.0
    %1391 = vmatpush2.msra.mxu0 0.0
    %1392 = vmatprep.subr.mxu0 0.0
    %1393 = vmatpush2.msra.mxu0 0.0
    %1394 = vmatprep.mubr.f32.mxu0 0.0
    %1395 = vmatmul.mubr.f32.gmra.mxu0 %v793
    %v1396 = vpop.f32.mrf.mxu0
    %v1397 = vadd.f32 %v1328, %v1396
    %v1398 = vpop.f32.mrf.mxu0
    %1399 = vdwg.mxu0
    %v1400 = vxor.u32 %v1397, 2147483648
    %v1401 = vmul.f32 %v1400, 1.442695
    %v1402 = vpow.pop %v1401
    %v1403 = vadd.f32 %v1402, 1.0
    %v1404 = vrcp.pop %v1403
    %v1405 = vmul.f32 1.0, %v1404
    %v1406 = vld [vmem:[#allocation28] sm:$0xff]
    %v1407 = vld [vmem:[#allocation28 + $0x8] sm:$0xff]
    %v1408 = vld [vmem:[#allocation28 + $0x10] sm:$0xff]
    %v1409 = vld [vmem:[#allocation28 + $0x18] sm:$0xff]
    %v1410 = vld [vmem:[#allocation29] sm:$0x1]
    %v1412 = vlaneseq
    %v1413 = vshrl.u32 %v1412, 7
    %v1414 = vsub.s32 0, %v1413
    %v1415 = vrot.slane %v1410, %v1414
    %1417 = vmatprep.subr.mxu0 0.0
    %1418 = vmatpush1.msra.mxu0 0.0
    %1419 = vmatprep.subr.mxu0 0.0
    %1420 = vmatpush1.msra.mxu0 0.0
    %1421 = vmatprep.subr.mxu0 0.0
    %1422 = vmatpush1.msra.mxu0 0.0
    %1423 = vmatprep.subr.mxu0 0.0
    %1424 = vmatpush1.msra.mxu0 0.0
    %1425 = vmatprep.subr.mxu0 0.0
    %1426 = vmatpush1.msra.mxu0 0.0
    %1427 = vmatprep.subr.mxu0 0.0
    %1428 = vmatpush1.msra.mxu0 0.0
    %1429 = vmatprep.subr.mxu0 0.0
    %1430 = vmatpush1.msra.mxu0 0.0
    %1431 = vmatprep.subr.mxu0 0.0
    %1432 = vmatpush1.msra.mxu0 0.0
    %1433 = vmatprep.subr.mxu0 0.0
    %1434 = vmatpush1.msra.mxu0 0.0
    %1435 = vmatprep.subr.mxu0 0.0
    %1436 = vmatpush1.msra.mxu0 0.0
    %1437 = vmatprep.subr.mxu0 0.0
    %1438 = vmatpush1.msra.mxu0 0.0
    %1439 = vmatprep.subr.mxu0 0.0
    %1440 = vmatpush1.msra.mxu0 0.0
    %1441 = vmatprep.subr.mxu0 0.0
    %1442 = vmatpush1.msra.mxu0 %v1409
    %1443 = vmatprep.subr.mxu0 0.0
    %1444 = vmatpush1.msra.mxu0 %v1408
    %1445 = vmatprep.subr.mxu0 0.0
    %1446 = vmatpush1.msra.mxu0 %v1407
    %1447 = vmatprep.subr.mxu0 0.0
    %1448 = vmatpush1.msra.mxu0 %v1406
    %1449 = vmatprep.subr.mxu0 0.0
    %1450 = vmatpush2.msra.mxu0 0.0
    %1451 = vmatprep.subr.mxu0 0.0
    %1452 = vmatpush2.msra.mxu0 0.0
    %1453 = vmatprep.subr.mxu0 0.0
    %1454 = vmatpush2.msra.mxu0 0.0
    %1455 = vmatprep.subr.mxu0 0.0
    %1456 = vmatpush2.msra.mxu0 0.0
    %1457 = vmatprep.subr.mxu0 0.0
    %1458 = vmatpush2.msra.mxu0 0.0
    %1459 = vmatprep.subr.mxu0 0.0
    %1460 = vmatpush2.msra.mxu0 0.0
    %1461 = vmatprep.subr.mxu0 0.0
    %1462 = vmatpush2.msra.mxu0 0.0
    %1463 = vmatprep.subr.mxu0 0.0
    %1464 = vmatpush2.msra.mxu0 0.0
    %1465 = vmatprep.subr.mxu0 0.0
    %1466 = vmatpush2.msra.mxu0 0.0
    %1467 = vmatprep.subr.mxu0 0.0
    %1468 = vmatpush2.msra.mxu0 0.0
    %1469 = vmatprep.subr.mxu0 0.0
    %1470 = vmatpush2.msra.mxu0 0.0
    %1471 = vmatprep.subr.mxu0 0.0
    %1472 = vmatpush2.msra.mxu0 0.0
    %1473 = vmatprep.subr.mxu0 0.0
    %1474 = vmatpush2.msra.mxu0 0.0
    %1475 = vmatprep.subr.mxu0 0.0
    %1476 = vmatpush2.msra.mxu0 0.0
    %1477 = vmatprep.subr.mxu0 0.0
    %1478 = vmatpush2.msra.mxu0 0.0
    %1479 = vmatprep.subr.mxu0 0.0
    %1480 = vmatpush2.msra.mxu0 0.0
    %1481 = vmatprep.mubr.f32.mxu0 0.0
    %1482 = vmatmul.mubr.f32.gmra.mxu0 %v367
    %v1483 = vpop.f32.mrf.mxu0
    %v1484 = vadd.f32 %v1415, %v1483
    %v1485 = vpop.f32.mrf.mxu0
    %1486 = vdwg.mxu0
    %v1487 = vmul.f32 %v1405, %v1484
    %1488 = vst.msk [vmem:[#allocation31] sm:$0x3] %vm956, %v955
    %vm1489 = vcmask 1024
    %1490 = vst.msk [vmem:[%s59] sm:$0x3] %vm1489, %v978
    %v1491 = vadd.f32 %v1320, %v1487
    %1492 = vst.msk [vmem:[%s61] sm:$0x3] %vm956, %v1491
    // Predicated region
    $region186: #{policy_forward.4} parent=1 // pred_check
      _
    $region187: #{policy_forward.4} parent=1 // pred_check_branch
      %1494 = sbr.rel (0) target = $region189
    $region188: #{policy_forward.4} parent=1 // pred_region
      %s1496 = ssub.s32 32, 32
      %1497 = vsyncadd [#allocation4], %s1496
      %s1499 = sshll.u32 [#allocation31], 4
      %s1500 = int_to_ptr.vmem [resolvable:$true] %s1499
      %1502 = dma.vmem_to_hbm [thread:$0]  %s1500, 32, %s57, [#allocation4]
    $region189: #{policy_forward.4} parent=1 // pred_fallthru
      _
    // Predicated region
    $region190: #{policy_forward.4} parent=1 // pred_check
      _
    $region191: #{policy_forward.4} parent=1 // pred_check_branch
      %1504 = sbr.rel (0) target = $region193
    $region192: #{policy_forward.4} parent=1 // pred_region
      _
    $region193: #{policy_forward.4} parent=1 // pred_fallthru
      _
    // Predicated region
    $region194: #{policy_forward.4} parent=1 // pred_check
      _
    $region195: #{policy_forward.4} parent=1 // pred_check_branch
      %1506 = sbr.rel (0) target = $region197
    $region196: #{policy_forward.4} parent=1 // pred_region
      _
    $region197: #{policy_forward.4} parent=1 // pred_fallthru
      _
    // Predicated region
    $region198: #{policy_forward.4} parent=1 // pred_check
      _
    $region199: #{policy_forward.4} parent=1 // pred_check_branch
      %1508 = sbr.rel (0) target = $region201
    $region200: #{policy_forward.4} parent=1 // pred_region
      %1509 = dma.done [#allocation4], 32
    $region201: #{policy_forward.4} parent=1 // pred_fallthru
      _
    // Predicated region
    $region202: #{policy_forward.4} parent=1 // pred_check
      _
    $region203: #{policy_forward.4} parent=1 // pred_check_branch
      %1511 = sbr.rel (0) target = $region205
    $region204: #{policy_forward.4} parent=1 // pred_region
      _
    $region205: #{policy_forward.4} parent=1 // pred_fallthru
      _
    // Predicated region
    $region206: #{policy_forward.4} parent=1 // pred_check
      _
    $region207: #{policy_forward.4} parent=1 // pred_check_branch
      %1513 = sbr.rel (0) target = $region209
    $region208: #{policy_forward.4} parent=1 // pred_region
      _
    $region209: #{policy_forward.4} parent=1 // pred_fallthru
      _
    %1514 = vsyncpa [#allocation3], 1
    %1515 = vsyncpa [#allocation6], 1
    %1516 = vsyncpa [#allocation9], 1
    %1517 = vsyncpa [#allocation12], 1
    %1518 = vsyncpa [#allocation15], 1
    %1519 = vsyncpa [#allocation18], 1
    %1520 = vsyncpa [#allocation21], 1
    %1521 = vsyncpa [#allocation24], 1
    %1522 = vsyncpa [#allocation27], 1
    %1523 = vsyncpa [#allocation30], 1
    %1524 = vsyncpa [#allocation4], 1

// kernel: policy_forward.5
$region0: #{policy_forward.5}
  #allocation0 [shape = 'u32[]', space=smem, size = 0x4, offset = 0x4, fixed_abs, tag = 'smem constant byte address 0x4 - core index']
  #allocation1 [shape = 'u32[144,128]{1,0:T(1,128)}', space=vmem, size = 0x12000, scoped, tag = 'internal scratch']
  %s0 = inlined_call_operand.vmem [shape: f32[2,32], index: 0, kind: input, shape index: {}]
  %s1 = inlined_call_operand.vmem [shape: f32[32,32], index: 1, kind: input, shape index: {}]
  %s2 = inlined_call_operand.vmem [shape: f32[1,32], index: 2, kind: input, shape index: {}]
  %s3 = inlined_call_operand.vmem [shape: f32[32,32], index: 3, kind: input, shape index: {}]
  %s4 = inlined_call_operand.vmem [shape: f32[1,32], index: 4, kind: input, shape index: {}]
  %s5 = inlined_call_operand.vmem [shape: f32[32,16], index: 5, kind: input, shape index: {}]
  %s6 = inlined_call_operand.vmem [shape: f32[1,16], index: 6, kind: input, shape index: {}]
  %s7 = inlined_call_operand.vmem [shape: f32[16,32], index: 7, kind: input, shape index: {}]
  %s8 = inlined_call_operand.vmem [shape: f32[1,32], index: 8, kind: input, shape index: {}]
  %s9 = inlined_call_operand.vmem [shape: f32[32,32], index: 9, kind: input, shape index: {}]
  %s10 = inlined_call_operand.vmem [shape: f32[1,32], index: 10, kind: input, shape index: {}]
  %s11 = inlined_call_operand.vmem [shape: f32[32,32], index: 11, kind: input, shape index: {}]
  %s12 = inlined_call_operand.vmem [shape: f32[1,32], index: 12, kind: input, shape index: {}]
  %s13 = inlined_call_operand.vmem [shape: f32[32,32], index: 13, kind: input, shape index: {}]
  %s14 = inlined_call_operand.vmem [shape: f32[1,32], index: 14, kind: input, shape index: {}]
  %s15 = inlined_call_operand.vmem [shape: f32[32,2], index: 15, kind: input, shape index: {}]
  %s16 = inlined_call_operand.vmem [shape: f32[1,2], index: 16, kind: input, shape index: {}]
  %s17 = inlined_call_operand.vmem [shape: f32[2,32], index: 17, kind: input, shape index: {}]
  %s18 = inlined_call_operand.vmem [shape: f32[1,32], index: 18, kind: input, shape index: {}]
  %s19 = inlined_call_operand.vmem [shape: f32[32,32], index: 19, kind: input, shape index: {}]
  %s20 = inlined_call_operand.vmem [shape: f32[1,32], index: 20, kind: input, shape index: {}]
  %s21 = inlined_call_operand.hbm [shape: f32[2,16], index: 21, kind: output, shape index: {0}]
  %s22 = inlined_call_operand.vmem [shape: s32[2,1], index: 22, kind: output, shape index: {1}]
  %s23 = inlined_call_operand.hbm [shape: f32[2,2], index: 23, kind: output, shape index: {2}]
  %s24 = inlined_call_operand.vmem [shape: s32[2,1], index: 24, kind: output, shape index: {3}]
  %s25 = inlined_call_operand.vmem [shape: f32[2,32], index: 25, kind: output, shape index: {4}]
  %26 = xla_tuple %s21, %s22, %s23, %s24, %s25
  %s27 = sld [smem:[#allocation0]]
  $region126: #{policy_forward.5} parent=0
    _
  %s29 = ssub.s32 1, %s27
  %s30 = scalar_select 0, %s29, %s27
  $region1: #{policy_forward.5} parent=0
    #allocation2 [shape = 'u8[1024]{0}', space=vmem, size = 0x400, scoped, tag = 'output window, operand 0, single buffered']
    #allocation3 [shape = 's32[1]{0}', space=sflag, size = 0x4, scoped, tag = 'scoped memory for policy_forward.5']
    #allocation4 [shape = 'u8[1024]{0}', space=vmem, size = 0x400, scoped, tag = 'output window, operand 2, single buffered']
    #allocation5 [shape = 's32[1]{0}', space=sflag, size = 0x4, scoped, tag = 'scoped memory for policy_forward.5']
    %31 = vsyncpa [#allocation3], 0
    %32 = vsyncpa [#allocation5], 0
    // Predicated region
    $region2: #{policy_forward.5} parent=1 // pred_check
      _
    $region3: #{policy_forward.5} parent=1 // pred_check_branch
      %34 = sbr.rel (0) target = $region5
    $region4: #{policy_forward.5} parent=1 // pred_region
      _
    $region5: #{policy_forward.5} parent=1 // pred_fallthru
      _
    // Predicated region
    $region6: #{policy_forward.5} parent=1 // pred_check
      _
    $region7: #{policy_forward.5} parent=1 // pred_check_branch
      %36 = sbr.rel (0) target = $region9
    $region8: #{policy_forward.5} parent=1 // pred_region
      _
    $region9: #{policy_forward.5} parent=1 // pred_fallthru
      _
    // Predicated region
    $region10: #{policy_forward.5} parent=1 // pred_check
      _
    $region11: #{policy_forward.5} parent=1 // pred_check_branch
      %38 = sbr.rel (0) target = $region13
    $region12: #{policy_forward.5} parent=1 // pred_region
      _
    $region13: #{policy_forward.5} parent=1 // pred_fallthru
      _
    // Predicated region
    $region14: #{policy_forward.5} parent=1 // pred_check
      _
    $region15: #{policy_forward.5} parent=1 // pred_check_branch
      %40 = sbr.rel (0) target = $region17
    $region16: #{policy_forward.5} parent=1 // pred_region
      _
    $region17: #{policy_forward.5} parent=1 // pred_fallthru
      _
    // Predicated region
    $region18: #{policy_forward.5} parent=1 // pred_check
      _
    $region19: #{policy_forward.5} parent=1 // pred_check_branch
      %42 = sbr.rel (0) target = $region21
    $region20: #{policy_forward.5} parent=1 // pred_region
      _
    $region21: #{policy_forward.5} parent=1 // pred_fallthru
      _
    // Predicated region
    $region22: #{policy_forward.5} parent=1 // pred_check
      _
    $region23: #{policy_forward.5} parent=1 // pred_check_branch
      %44 = sbr.rel (0) target = $region25
    $region24: #{policy_forward.5} parent=1 // pred_region
      _
    $region25: #{policy_forward.5} parent=1 // pred_fallthru
      _
    // Predicated region
    $region26: #{policy_forward.5} parent=1 // pred_check
      _
    $region27: #{policy_forward.5} parent=1 // pred_check_branch
      %46 = sbr.rel (0) target = $region29
    $region28: #{policy_forward.5} parent=1 // pred_region
      _
    $region29: #{policy_forward.5} parent=1 // pred_fallthru
      _
    // Predicated region
    $region30: #{policy_forward.5} parent=1 // pred_check
      _
    $region31: #{policy_forward.5} parent=1 // pred_check_branch
      %48 = sbr.rel (0) target = $region33
    $region32: #{policy_forward.5} parent=1 // pred_region
      _
    $region33: #{policy_forward.5} parent=1 // pred_fallthru
      _
    // Predicated region
    $region34: #{policy_forward.5} parent=1 // pred_check
      _
    $region35: #{policy_forward.5} parent=1 // pred_check_branch
      %50 = sbr.rel (0) target = $region37
    $region36: #{policy_forward.5} parent=1 // pred_region
      _
    $region37: #{policy_forward.5} parent=1 // pred_fallthru
      _
    // Predicated region
    $region38: #{policy_forward.5} parent=1 // pred_check
      _
    $region39: #{policy_forward.5} parent=1 // pred_check_branch
      %52 = sbr.rel (0) target = $region41
    $region40: #{policy_forward.5} parent=1 // pred_region
      _
    $region41: #{policy_forward.5} parent=1 // pred_fallthru
      _
    // Predicated region
    $region42: #{policy_forward.5} parent=1 // pred_check
      _
    $region43: #{policy_forward.5} parent=1 // pred_check_branch
      %54 = sbr.rel (0) target = $region45
    $region44: #{policy_forward.5} parent=1 // pred_region
      _
    $region45: #{policy_forward.5} parent=1 // pred_fallthru
      _
    // Predicated region
    $region46: #{policy_forward.5} parent=1 // pred_check
      _
    $region47: #{policy_forward.5} parent=1 // pred_check_branch
      %56 = sbr.rel (0) target = $region49
    $region48: #{policy_forward.5} parent=1 // pred_region
      _
    $region49: #{policy_forward.5} parent=1 // pred_fallthru
      _
    // Predicated region
    $region50: #{policy_forward.5} parent=1 // pred_check
      _
    $region51: #{policy_forward.5} parent=1 // pred_check_branch
      %58 = sbr.rel (0) target = $region53
    $region52: #{policy_forward.5} parent=1 // pred_region
      _
    $region53: #{policy_forward.5} parent=1 // pred_fallthru
      _
    // Predicated region
    $region54: #{policy_forward.5} parent=1 // pred_check
      _
    $region55: #{policy_forward.5} parent=1 // pred_check_branch
      %60 = sbr.rel (0) target = $region57
    $region56: #{policy_forward.5} parent=1 // pred_region
      _
    $region57: #{policy_forward.5} parent=1 // pred_fallthru
      _
    // Predicated region
    $region58: #{policy_forward.5} parent=1 // pred_check
      _
    $region59: #{policy_forward.5} parent=1 // pred_check_branch
      %62 = sbr.rel (0) target = $region61
    $region60: #{policy_forward.5} parent=1 // pred_region
      _
    $region61: #{policy_forward.5} parent=1 // pred_fallthru
      _
    // Predicated region
    $region62: #{policy_forward.5} parent=1 // pred_check
      _
    $region63: #{policy_forward.5} parent=1 // pred_check_branch
      %64 = sbr.rel (0) target = $region65
    $region64: #{policy_forward.5} parent=1 // pred_region
      _
    $region65: #{policy_forward.5} parent=1 // pred_fallthru
      _
    // Predicated region
    $region66: #{policy_forward.5} parent=1 // pred_check
      _
    $region67: #{policy_forward.5} parent=1 // pred_check_branch
      %66 = sbr.rel (0) target = $region69
    $region68: #{policy_forward.5} parent=1 // pred_region
      _
    $region69: #{policy_forward.5} parent=1 // pred_fallthru
      _
    // Predicated region
    $region70: #{policy_forward.5} parent=1 // pred_check
      _
    $region71: #{policy_forward.5} parent=1 // pred_check_branch
      %68 = sbr.rel (0) target = $region73
    $region72: #{policy_forward.5} parent=1 // pred_region
      _
    $region73: #{policy_forward.5} parent=1 // pred_fallthru
      _
    // Predicated region
    $region74: #{policy_forward.5} parent=1 // pred_check
      _
    $region75: #{policy_forward.5} parent=1 // pred_check_branch
      %70 = sbr.rel (0) target = $region77
    $region76: #{policy_forward.5} parent=1 // pred_region
      _
    $region77: #{policy_forward.5} parent=1 // pred_fallthru
      _
    // Predicated region
    $region78: #{policy_forward.5} parent=1 // pred_check
      _
    $region79: #{policy_forward.5} parent=1 // pred_check_branch
      %72 = sbr.rel (0) target = $region81
    $region80: #{policy_forward.5} parent=1 // pred_region
      _
    $region81: #{policy_forward.5} parent=1 // pred_fallthru
      _
    // Predicated region
    $region82: #{policy_forward.5} parent=1 // pred_check
      _
    $region83: #{policy_forward.5} parent=1 // pred_check_branch
      %74 = sbr.rel (0) target = $region85
    $region84: #{policy_forward.5} parent=1 // pred_region
      _
    $region85: #{policy_forward.5} parent=1 // pred_fallthru
      _
    %v75 = vld [vmem:[%s0] sm:$0x3]
    %v76 = vld [vmem:[%s1] sm:$0xff]
    %v77 = vld [vmem:[%s1 + $0x8] sm:$0xff]
    %v78 = vld [vmem:[%s1 + $0x10] sm:$0xff]
    %v79 = vld [vmem:[%s1 + $0x18] sm:$0xff]
    %v80 = vld [vmem:[%s2] sm:$0x1]
    %v82 = vlaneseq
    %v83 = vshrl.u32 %v82, 7
    %v84 = vsub.s32 0, %v83
    %v85 = vrot.slane %v80, %v84
    %vm87 = vcmask 261120
    %v89 = vsel %vm87, %v75, 0
    %91 = vmatprep.subr.mxu0 0.0
    %92 = vmatpush1.msra.mxu0 0.0
    %93 = vmatprep.subr.mxu0 0.0
    %94 = vmatpush1.msra.mxu0 0.0
    %95 = vmatprep.subr.mxu0 0.0
    %96 = vmatpush1.msra.mxu0 0.0
    %97 = vmatprep.subr.mxu0 0.0
    %98 = vmatpush1.msra.mxu0 0.0
    %99 = vmatprep.subr.mxu0 0.0
    %100 = vmatpush1.msra.mxu0 0.0
    %101 = vmatprep.subr.mxu0 0.0
    %102 = vmatpush1.msra.mxu0 0.0
    %103 = vmatprep.subr.mxu0 0.0
    %104 = vmatpush1.msra.mxu0 0.0
    %105 = vmatprep.subr.mxu0 0.0
    %106 = vmatpush1.msra.mxu0 0.0
    %107 = vmatprep.subr.mxu0 0.0
    %108 = vmatpush1.msra.mxu0 0.0
    %109 = vmatprep.subr.mxu0 0.0
    %110 = vmatpush1.msra.mxu0 0.0
    %111 = vmatprep.subr.mxu0 0.0
    %112 = vmatpush1.msra.mxu0 0.0
    %113 = vmatprep.subr.mxu0 0.0
    %114 = vmatpush1.msra.mxu0 0.0
    %115 = vmatprep.subr.mxu0 0.0
    %116 = vmatpush1.msra.mxu0 %v79
    %117 = vmatprep.subr.mxu0 0.0
    %118 = vmatpush1.msra.mxu0 %v78
    %119 = vmatprep.subr.mxu0 0.0
    %120 = vmatpush1.msra.mxu0 %v77
    %121 = vmatprep.subr.mxu0 0.0
    %122 = vmatpush1.msra.mxu0 %v76
    %123 = vmatprep.subr.mxu0 0.0
    %124 = vmatpush2.msra.mxu0 0.0
    %125 = vmatprep.subr.mxu0 0.0
    %126 = vmatpush2.msra.mxu0 0.0
    %127 = vmatprep.subr.mxu0 0.0
    %128 = vmatpush2.msra.mxu0 0.0
    %129 = vmatprep.subr.mxu0 0.0
    %130 = vmatpush2.msra.mxu0 0.0
    %131 = vmatprep.subr.mxu0 0.0
    %132 = vmatpush2.msra.mxu0 0.0
    %133 = vmatprep.subr.mxu0 0.0
    %134 = vmatpush2.msra.mxu0 0.0
    %135 = vmatprep.subr.mxu0 0.0
    %136 = vmatpush2.msra.mxu0 0.0
    %137 = vmatprep.subr.mxu0 0.0
    %138 = vmatpush2.msra.mxu0 0.0
    %139 = vmatprep.subr.mxu0 0.0
    %140 = vmatpush2.msra.mxu0 0.0
    %141 = vmatprep.subr.mxu0 0.0
    %142 = vmatpush2.msra.mxu0 0.0
    %143 = vmatprep.subr.mxu0 0.0
    %144 = vmatpush2.msra.mxu0 0.0
    %145 = vmatprep.subr.mxu0 0.0
    %146 = vmatpush2.msra.mxu0 0.0
    %147 = vmatprep.subr.mxu0 0.0
    %148 = vmatpush2.msra.mxu0 0.0
    %149 = vmatprep.subr.mxu0 0.0
    %150 = vmatpush2.msra.mxu0 0.0
    %151 = vmatprep.subr.mxu0 0.0
    %152 = vmatpush2.msra.mxu0 0.0
    %153 = vmatprep.subr.mxu0 0.0
    %154 = vmatpush2.msra.mxu0 0.0
    %155 = vmatprep.mubr.f32.mxu0 0.0
    %156 = vmatmul.mubr.f32.gmra.mxu0 %v89
    %v157 = vpop.f32.mrf.mxu0
    %v158 = vadd.f32 %v85, %v157
    %v159 = vpop.f32.mrf.mxu0
    %160 = vdwg.mxu0
    %v161 = vmax.f32 %v158, 0.0
    %v162 = vld [vmem:[%s3] sm:$0xff]
    %v163 = vld [vmem:[%s3 + $0x8] sm:$0xff]
    %v164 = vld [vmem:[%s3 + $0x10] sm:$0xff]
    %v165 = vld [vmem:[%s3 + $0x18] sm:$0xff]
    %v166 = vld [vmem:[%s4] sm:$0x1]
    %v168 = vlaneseq
    %v169 = vshrl.u32 %v168, 7
    %v170 = vsub.s32 0, %v169
    %v171 = vrot.slane %v166, %v170
    %v174 = vsel %vm87, %v161, 0
    %176 = vmatprep.subr.mxu0 0.0
    %177 = vmatpush1.msra.mxu0 0.0
    %178 = vmatprep.subr.mxu0 0.0
    %179 = vmatpush1.msra.mxu0 0.0
    %180 = vmatprep.subr.mxu0 0.0
    %181 = vmatpush1.msra.mxu0 0.0
    %182 = vmatprep.subr.mxu0 0.0
    %183 = vmatpush1.msra.mxu0 0.0
    %184 = vmatprep.subr.mxu0 0.0
    %185 = vmatpush1.msra.mxu0 0.0
    %186 = vmatprep.subr.mxu0 0.0
    %187 = vmatpush1.msra.mxu0 0.0
    %188 = vmatprep.subr.mxu0 0.0
    %189 = vmatpush1.msra.mxu0 0.0
    %190 = vmatprep.subr.mxu0 0.0
    %191 = vmatpush1.msra.mxu0 0.0
    %192 = vmatprep.subr.mxu0 0.0
    %193 = vmatpush1.msra.mxu0 0.0
    %194 = vmatprep.subr.mxu0 0.0
    %195 = vmatpush1.msra.mxu0 0.0
    %196 = vmatprep.subr.mxu0 0.0
    %197 = vmatpush1.msra.mxu0 0.0
    %198 = vmatprep.subr.mxu0 0.0
    %199 = vmatpush1.msra.mxu0 0.0
    %200 = vmatprep.subr.mxu0 0.0
    %201 = vmatpush1.msra.mxu0 %v165
    %202 = vmatprep.subr.mxu0 0.0
    %203 = vmatpush1.msra.mxu0 %v164
    %204 = vmatprep.subr.mxu0 0.0
    %205 = vmatpush1.msra.mxu0 %v163
    %206 = vmatprep.subr.mxu0 0.0
    %207 = vmatpush1.msra.mxu0 %v162
    %208 = vmatprep.subr.mxu0 0.0
    %209 = vmatpush2.msra.mxu0 0.0
    %210 = vmatprep.subr.mxu0 0.0
    %211 = vmatpush2.msra.mxu0 0.0
    %212 = vmatprep.subr.mxu0 0.0
    %213 = vmatpush2.msra.mxu0 0.0
    %214 = vmatprep.subr.mxu0 0.0
    %215 = vmatpush2.msra.mxu0 0.0
    %216 = vmatprep.subr.mxu0 0.0
    %217 = vmatpush2.msra.mxu0 0.0
    %218 = vmatprep.subr.mxu0 0.0
    %219 = vmatpush2.msra.mxu0 0.0
    %220 = vmatprep.subr.mxu0 0.0
    %221 = vmatpush2.msra.mxu0 0.0
    %222 = vmatprep.subr.mxu0 0.0
    %223 = vmatpush2.msra.mxu0 0.0
    %224 = vmatprep.subr.mxu0 0.0
    %225 = vmatpush2.msra.mxu0 0.0
    %226 = vmatprep.subr.mxu0 0.0
    %227 = vmatpush2.msra.mxu0 0.0
    %228 = vmatprep.subr.mxu0 0.0
    %229 = vmatpush2.msra.mxu0 0.0
    %230 = vmatprep.subr.mxu0 0.0
    %231 = vmatpush2.msra.mxu0 0.0
    %232 = vmatprep.subr.mxu0 0.0
    %233 = vmatpush2.msra.mxu0 0.0
    %234 = vmatprep.subr.mxu0 0.0
    %235 = vmatpush2.msra.mxu0 0.0
    %236 = vmatprep.subr.mxu0 0.0
    %237 = vmatpush2.msra.mxu0 0.0
    %238 = vmatprep.subr.mxu0 0.0
    %239 = vmatpush2.msra.mxu0 0.0
    %240 = vmatprep.mubr.f32.mxu0 0.0
    %241 = vmatmul.mubr.f32.gmra.mxu0 %v174
    %v242 = vpop.f32.mrf.mxu0
    %v243 = vadd.f32 %v171, %v242
    %v244 = vpop.f32.mrf.mxu0
    %245 = vdwg.mxu0
    %v246 = vmax.f32 %v243, 0.0
    %v247 = vld [vmem:[%s5] sm:$0xff]
    %v248 = vld [vmem:[%s5 + $0x8] sm:$0xff]
    %v249 = vld [vmem:[%s5 + $0x10] sm:$0xff]
    %v250 = vld [vmem:[%s5 + $0x18] sm:$0xff]
    %v251 = vld [vmem:[%s6] sm:$0x1]
    %v253 = vlaneseq
    %v254 = vshrl.u32 %v253, 7
    %v255 = vsub.s32 0, %v254
    %v256 = vrot.slane %v251, %v255
    %v259 = vsel %vm87, %v246, 0
    %261 = vmatprep.subr.mxu0 0.0
    %262 = vmatpush1.msra.mxu0 0.0
    %263 = vmatprep.subr.mxu0 0.0
    %264 = vmatpush1.msra.mxu0 0.0
    %265 = vmatprep.subr.mxu0 0.0
    %266 = vmatpush1.msra.mxu0 0.0
    %267 = vmatprep.subr.mxu0 0.0
    %268 = vmatpush1.msra.mxu0 0.0
    %269 = vmatprep.subr.mxu0 0.0
    %270 = vmatpush1.msra.mxu0 0.0
    %271 = vmatprep.subr.mxu0 0.0
    %272 = vmatpush1.msra.mxu0 0.0
    %273 = vmatprep.subr.mxu0 0.0
    %274 = vmatpush1.msra.mxu0 0.0
    %275 = vmatprep.subr.mxu0 0.0
    %276 = vmatpush1.msra.mxu0 0.0
    %277 = vmatprep.subr.mxu0 0.0
    %278 = vmatpush1.msra.mxu0 0.0
    %279 = vmatprep.subr.mxu0 0.0
    %280 = vmatpush1.msra.mxu0 0.0
    %281 = vmatprep.subr.mxu0 0.0
    %282 = vmatpush1.msra.mxu0 0.0
    %283 = vmatprep.subr.mxu0 0.0
    %284 = vmatpush1.msra.mxu0 0.0
    %285 = vmatprep.subr.mxu0 0.0
    %286 = vmatpush1.msra.mxu0 %v250
    %287 = vmatprep.subr.mxu0 0.0
    %288 = vmatpush1.msra.mxu0 %v249
    %289 = vmatprep.subr.mxu0 0.0
    %290 = vmatpush1.msra.mxu0 %v248
    %291 = vmatprep.subr.mxu0 0.0
    %292 = vmatpush1.msra.mxu0 %v247
    %293 = vmatprep.subr.mxu0 0.0
    %294 = vmatpush2.msra.mxu0 0.0
    %295 = vmatprep.subr.mxu0 0.0
    %296 = vmatpush2.msra.mxu0 0.0
    %297 = vmatprep.subr.mxu0 0.0
    %298 = vmatpush2.msra.mxu0 0.0
    %299 = vmatprep.subr.mxu0 0.0
    %300 = vmatpush2.msra.mxu0 0.0
    %301 = vmatprep.subr.mxu0 0.0
    %302 = vmatpush2.msra.mxu0 0.0
    %303 = vmatprep.subr.mxu0 0.0
    %304 = vmatpush2.msra.mxu0 0.0
    %305 = vmatprep.subr.mxu0 0.0
    %306 = vmatpush2.msra.mxu0 0.0
    %307 = vmatprep.subr.mxu0 0.0
    %308 = vmatpush2.msra.mxu0 0.0
    %309 = vmatprep.subr.mxu0 0.0
    %310 = vmatpush2.msra.mxu0 0.0
    %311 = vmatprep.subr.mxu0 0.0
    %312 = vmatpush2.msra.mxu0 0.0
    %313 = vmatprep.subr.mxu0 0.0
    %314 = vmatpush2.msra.mxu0 0.0
    %315 = vmatprep.subr.mxu0 0.0
    %316 = vmatpush2.msra.mxu0 0.0
    %317 = vmatprep.subr.mxu0 0.0
    %318 = vmatpush2.msra.mxu0 0.0
    %319 = vmatprep.subr.mxu0 0.0
    %320 = vmatpush2.msra.mxu0 0.0
    %321 = vmatprep.subr.mxu0 0.0
    %322 = vmatpush2.msra.mxu0 0.0
    %323 = vmatprep.subr.mxu0 0.0
    %324 = vmatpush2.msra.mxu0 0.0
    %325 = vmatprep.mubr.f32.mxu0 0.0
    %326 = vmatmul.mubr.f32.gmra.mxu0 %v259
    %v327 = vpop.f32.mrf.mxu0
    %v328 = vadd.f32 %v256, %v327
    %v329 = vpop.f32.mrf.mxu0
    %330 = vdwg.mxu0
    %vm331 = vcmask 123904
    %v332 = vsel %vm331, %v328, -inf
    %333 = vmax.xlane.f32.xlu0 %v332
    %v334 = vpop.xlane.xlu0 %333
    %v335 = vlaneseq
    %v336 = vand.u32 %v335, 127
    %vm337 = vcmp.ge.f32.partialorder %v328, %v334
    %v338 = vsel %vm337, %v336, 16
    %v339 = vsel %vm331, %v338, 2147483647
    %v340 = vand.u32 %v339, 65535
    %v341 = vshra.s32 %v339, 16
    %v342 = vcvt.s32.f32 %v340
    %v343 = vcvt.s32.f32 %v341
    %344 = vmin.xlane.f32.xlu0 %v343
    %v345 = vpop.xlane.xlu0 %344
    %vm346 = vcmp.eq.f32.partialorder %v343, %v345
    %v347 = vsel %vm346, %v342, inf
    %348 = vmin.xlane.f32.xlu0 %v347
    %v349 = vpop.xlane.xlu0 %348
    %v350 = vcvt.f32.s32 %v349
    %v351 = vcvt.f32.s32 %v345
    %v352 = vshll.u32 %v351, 16
    %v353 = vadd.s32 %v352, %v350
    %vm354 = vcmp.eq.s32.totalorder %v336, %v353
    %v355 = vsel %vm354, 1, 0
    %v356 = vcvt.s32.f32 %v355
    %v357 = vld [vmem:[%s7] sm:$0xff]
    %v358 = vld [vmem:[%s7 + $0x8] sm:$0xff]
    %v359 = vld [vmem:[%s8] sm:$0x1]
    %v361 = vlaneseq
    %v362 = vshrl.u32 %v361, 7
    %v363 = vsub.s32 0, %v362
    %v364 = vrot.slane %v359, %v363
    %vm366 = vcmask 130048
    %v368 = vsel %vm366, %v356, 0
    %370 = vmatprep.subr.mxu0 0.0
    %371 = vmatpush1.msra.mxu0 0.0
    %372 = vmatprep.subr.mxu0 0.0
    %373 = vmatpush1.msra.mxu0 0.0
    %374 = vmatprep.subr.mxu0 0.0
    %375 = vmatpush1.msra.mxu0 0.0
    %376 = vmatprep.subr.mxu0 0.0
    %377 = vmatpush1.msra.mxu0 0.0
    %378 = vmatprep.subr.mxu0 0.0
    %379 = vmatpush1.msra.mxu0 0.0
    %380 = vmatprep.subr.mxu0 0.0
    %381 = vmatpush1.msra.mxu0 0.0
    %382 = vmatprep.subr.mxu0 0.0
    %383 = vmatpush1.msra.mxu0 0.0
    %384 = vmatprep.subr.mxu0 0.0
    %385 = vmatpush1.msra.mxu0 0.0
    %386 = vmatprep.subr.mxu0 0.0
    %387 = vmatpush1.msra.mxu0 0.0
    %388 = vmatprep.subr.mxu0 0.0
    %389 = vmatpush1.msra.mxu0 0.0
    %390 = vmatprep.subr.mxu0 0.0
    %391 = vmatpush1.msra.mxu0 0.0
    %392 = vmatprep.subr.mxu0 0.0
    %393 = vmatpush1.msra.mxu0 0.0
    %394 = vmatprep.subr.mxu0 0.0
    %395 = vmatpush1.msra.mxu0 0.0
    %396 = vmatprep.subr.mxu0 0.0
    %397 = vmatpush1.msra.mxu0 0.0
    %398 = vmatprep.subr.mxu0 0.0
    %399 = vmatpush1.msra.mxu0 %v358
    %400 = vmatprep.subr.mxu0 0.0
    %401 = vmatpush1.msra.mxu0 %v357
    %402 = vmatprep.subr.mxu0 0.0
    %403 = vmatpush2.msra.mxu0 0.0
    %404 = vmatprep.subr.mxu0 0.0
    %405 = vmatpush2.msra.mxu0 0.0
    %406 = vmatprep.subr.mxu0 0.0
    %407 = vmatpush2.msra.mxu0 0.0
    %408 = vmatprep.subr.mxu0 0.0
    %409 = vmatpush2.msra.mxu0 0.0
    %410 = vmatprep.subr.mxu0 0.0
    %411 = vmatpush2.msra.mxu0 0.0
    %412 = vmatprep.subr.mxu0 0.0
    %413 = vmatpush2.msra.mxu0 0.0
    %414 = vmatprep.subr.mxu0 0.0
    %415 = vmatpush2.msra.mxu0 0.0
    %416 = vmatprep.subr.mxu0 0.0
    %417 = vmatpush2.msra.mxu0 0.0
    %418 = vmatprep.subr.mxu0 0.0
    %419 = vmatpush2.msra.mxu0 0.0
    %420 = vmatprep.subr.mxu0 0.0
    %421 = vmatpush2.msra.mxu0 0.0
    %422 = vmatprep.subr.mxu0 0.0
    %423 = vmatpush2.msra.mxu0 0.0
    %424 = vmatprep.subr.mxu0 0.0
    %425 = vmatpush2.msra.mxu0 0.0
    %426 = vmatprep.subr.mxu0 0.0
    %427 = vmatpush2.msra.mxu0 0.0
    %428 = vmatprep.subr.mxu0 0.0
    %429 = vmatpush2.msra.mxu0 0.0
    %430 = vmatprep.subr.mxu0 0.0
    %431 = vmatpush2.msra.mxu0 0.0
    %432 = vmatprep.subr.mxu0 0.0
    %433 = vmatpush2.msra.mxu0 0.0
    %434 = vmatprep.mubr.f32.mxu0 0.0
    %435 = vmatmul.mubr.f32.gmra.mxu0 %v368
    %v436 = vpop.f32.mrf.mxu0
    %v437 = vadd.f32 %v364, %v436
    %v438 = vpop.f32.mrf.mxu0
    %439 = vdwg.mxu0
    %v440 = vmax.f32 %v437, 0.0
    %v441 = vld [vmem:[%s9] sm:$0xff]
    %v442 = vld [vmem:[%s9 + $0x8] sm:$0xff]
    %v443 = vld [vmem:[%s9 + $0x10] sm:$0xff]
    %v444 = vld [vmem:[%s9 + $0x18] sm:$0xff]
    %v445 = vld [vmem:[%s10] sm:$0x1]
    %v447 = vlaneseq
    %v448 = vshrl.u32 %v447, 7
    %v449 = vsub.s32 0, %v448
    %v450 = vrot.slane %v445, %v449
    %v453 = vsel %vm87, %v440, 0
    %455 = vmatprep.subr.mxu0 0.0
    %456 = vmatpush1.msra.mxu0 0.0
    %457 = vmatprep.subr.mxu0 0.0
    %458 = vmatpush1.msra.mxu0 0.0
    %459 = vmatprep.subr.mxu0 0.0
    %460 = vmatpush1.msra.mxu0 0.0
    %461 = vmatprep.subr.mxu0 0.0
    %462 = vmatpush1.msra.mxu0 0.0
    %463 = vmatprep.subr.mxu0 0.0
    %464 = vmatpush1.msra.mxu0 0.0
    %465 = vmatprep.subr.mxu0 0.0
    %466 = vmatpush1.msra.mxu0 0.0
    %467 = vmatprep.subr.mxu0 0.0
    %468 = vmatpush1.msra.mxu0 0.0
    %469 = vmatprep.subr.mxu0 0.0
    %470 = vmatpush1.msra.mxu0 0.0
    %471 = vmatprep.subr.mxu0 0.0
    %472 = vmatpush1.msra.mxu0 0.0
    %473 = vmatprep.subr.mxu0 0.0
    %474 = vmatpush1.msra.mxu0 0.0
    %475 = vmatprep.subr.mxu0 0.0
    %476 = vmatpush1.msra.mxu0 0.0
    %477 = vmatprep.subr.mxu0 0.0
    %478 = vmatpush1.msra.mxu0 0.0
    %479 = vmatprep.subr.mxu0 0.0
    %480 = vmatpush1.msra.mxu0 %v444
    %481 = vmatprep.subr.mxu0 0.0
    %482 = vmatpush1.msra.mxu0 %v443
    %483 = vmatprep.subr.mxu0 0.0
    %484 = vmatpush1.msra.mxu0 %v442
    %485 = vmatprep.subr.mxu0 0.0
    %486 = vmatpush1.msra.mxu0 %v441
    %487 = vmatprep.subr.mxu0 0.0
    %488 = vmatpush2.msra.mxu0 0.0
    %489 = vmatprep.subr.mxu0 0.0
    %490 = vmatpush2.msra.mxu0 0.0
    %491 = vmatprep.subr.mxu0 0.0
    %492 = vmatpush2.msra.mxu0 0.0
    %493 = vmatprep.subr.mxu0 0.0
    %494 = vmatpush2.msra.mxu0 0.0
    %495 = vmatprep.subr.mxu0 0.0
    %496 = vmatpush2.msra.mxu0 0.0
    %497 = vmatprep.subr.mxu0 0.0
    %498 = vmatpush2.msra.mxu0 0.0
    %499 = vmatprep.subr.mxu0 0.0
    %500 = vmatpush2.msra.mxu0 0.0
    %501 = vmatprep.subr.mxu0 0.0
    %502 = vmatpush2.msra.mxu0 0.0
    %503 = vmatprep.subr.mxu0 0.0
    %504 = vmatpush2.msra.mxu0 0.0
    %505 = vmatprep.subr.mxu0 0.0
    %506 = vmatpush2.msra.mxu0 0.0
    %507 = vmatprep.subr.mxu0 0.0
    %508 = vmatpush2.msra.mxu0 0.0
    %509 = vmatprep.subr.mxu0 0.0
    %510 = vmatpush2.msra.mxu0 0.0
    %511 = vmatprep.subr.mxu0 0.0
    %512 = vmatpush2.msra.mxu0 0.0
    %513 = vmatprep.subr.mxu0 0.0
    %514 = vmatpush2.msra.mxu0 0.0
    %515 = vmatprep.subr.mxu0 0.0
    %516 = vmatpush2.msra.mxu0 0.0
    %517 = vmatprep.subr.mxu0 0.0
    %518 = vmatpush2.msra.mxu0 0.0
    %519 = vmatprep.mubr.f32.mxu0 0.0
    %520 = vmatmul.mubr.f32.gmra.mxu0 %v453
    %v521 = vpop.f32.mrf.mxu0
    %v522 = vadd.f32 %v450, %v521
    %v523 = vpop.f32.mrf.mxu0
    %524 = vdwg.mxu0
    %v525 = vadd.f32 %v75, %v522
    %v526 = vld [vmem:[%s11] sm:$0xff]
    %v527 = vld [vmem:[%s11 + $0x8] sm:$0xff]
    %v528 = vld [vmem:[%s11 + $0x10] sm:$0xff]
    %v529 = vld [vmem:[%s11 + $0x18] sm:$0xff]
    %v530 = vld [vmem:[%s12] sm:$0x1]
    %v532 = vlaneseq
    %v533 = vshrl.u32 %v532, 7
    %v534 = vsub.s32 0, %v533
    %v535 = vrot.slane %v530, %v534
    %v538 = vsel %vm87, %v525, 0
    %540 = vmatprep.subr.mxu0 0.0
    %541 = vmatpush1.msra.mxu0 0.0
    %542 = vmatprep.subr.mxu0 0.0
    %543 = vmatpush1.msra.mxu0 0.0
    %544 = vmatprep.subr.mxu0 0.0
    %545 = vmatpush1.msra.mxu0 0.0
    %546 = vmatprep.subr.mxu0 0.0
    %547 = vmatpush1.msra.mxu0 0.0
    %548 = vmatprep.subr.mxu0 0.0
    %549 = vmatpush1.msra.mxu0 0.0
    %550 = vmatprep.subr.mxu0 0.0
    %551 = vmatpush1.msra.mxu0 0.0
    %552 = vmatprep.subr.mxu0 0.0
    %553 = vmatpush1.msra.mxu0 0.0
    %554 = vmatprep.subr.mxu0 0.0
    %555 = vmatpush1.msra.mxu0 0.0
    %556 = vmatprep.subr.mxu0 0.0
    %557 = vmatpush1.msra.mxu0 0.0
    %558 = vmatprep.subr.mxu0 0.0
    %559 = vmatpush1.msra.mxu0 0.0
    %560 = vmatprep.subr.mxu0 0.0
    %561 = vmatpush1.msra.mxu0 0.0
    %562 = vmatprep.subr.mxu0 0.0
    %563 = vmatpush1.msra.mxu0 0.0
    %564 = vmatprep.subr.mxu0 0.0
    %565 = vmatpush1.msra.mxu0 %v529
    %566 = vmatprep.subr.mxu0 0.0
    %567 = vmatpush1.msra.mxu0 %v528
    %568 = vmatprep.subr.mxu0 0.0
    %569 = vmatpush1.msra.mxu0 %v527
    %570 = vmatprep.subr.mxu0 0.0
    %571 = vmatpush1.msra.mxu0 %v526
    %572 = vmatprep.subr.mxu0 0.0
    %573 = vmatpush2.msra.mxu0 0.0
    %574 = vmatprep.subr.mxu0 0.0
    %575 = vmatpush2.msra.mxu0 0.0
    %576 = vmatprep.subr.mxu0 0.0
    %577 = vmatpush2.msra.mxu0 0.0
    %578 = vmatprep.subr.mxu0 0.0
    %579 = vmatpush2.msra.mxu0 0.0
    %580 = vmatprep.subr.mxu0 0.0
    %581 = vmatpush2.msra.mxu0 0.0
    %582 = vmatprep.subr.mxu0 0.0
    %583 = vmatpush2.msra.mxu0 0.0
    %584 = vmatprep.subr.mxu0 0.0
    %585 = vmatpush2.msra.mxu0 0.0
    %586 = vmatprep.subr.mxu0 0.0
    %587 = vmatpush2.msra.mxu0 0.0
    %588 = vmatprep.subr.mxu0 0.0
    %589 = vmatpush2.msra.mxu0 0.0
    %590 = vmatprep.subr.mxu0 0.0
    %591 = vmatpush2.msra.mxu0 0.0
    %592 = vmatprep.subr.mxu0 0.0
    %593 = vmatpush2.msra.mxu0 0.0
    %594 = vmatprep.subr.mxu0 0.0
    %595 = vmatpush2.msra.mxu0 0.0
    %596 = vmatprep.subr.mxu0 0.0
    %597 = vmatpush2.msra.mxu0 0.0
    %598 = vmatprep.subr.mxu0 0.0
    %599 = vmatpush2.msra.mxu0 0.0
    %600 = vmatprep.subr.mxu0 0.0
    %601 = vmatpush2.msra.mxu0 0.0
    %602 = vmatprep.subr.mxu0 0.0
    %603 = vmatpush2.msra.mxu0 0.0
    %604 = vmatprep.mubr.f32.mxu0 0.0
    %605 = vmatmul.mubr.f32.gmra.mxu0 %v538
    %v606 = vpop.f32.mrf.mxu0
    %v607 = vadd.f32 %v535, %v606
    %v608 = vpop.f32.mrf.mxu0
    %609 = vdwg.mxu0
    %v610 = vmax.f32 %v607, 0.0
    %v611 = vld [vmem:[%s13] sm:$0xff]
    %v612 = vld [vmem:[%s13 + $0x8] sm:$0xff]
    %v613 = vld [vmem:[%s13 + $0x10] sm:$0xff]
    %v614 = vld [vmem:[%s13 + $0x18] sm:$0xff]
    %v615 = vld [vmem:[%s14] sm:$0x1]
    %v617 = vlaneseq
    %v618 = vshrl.u32 %v617, 7
    %v619 = vsub.s32 0, %v618
    %v620 = vrot.slane %v615, %v619
    %v623 = vsel %vm87, %v610, 0
    %625 = vmatprep.subr.mxu0 0.0
    %626 = vmatpush1.msra.mxu0 0.0
    %627 = vmatprep.subr.mxu0 0.0
    %628 = vmatpush1.msra.mxu0 0.0
    %629 = vmatprep.subr.mxu0 0.0
    %630 = vmatpush1.msra.mxu0 0.0
    %631 = vmatprep.subr.mxu0 0.0
    %632 = vmatpush1.msra.mxu0 0.0
    %633 = vmatprep.subr.mxu0 0.0
    %634 = vmatpush1.msra.mxu0 0.0
    %635 = vmatprep.subr.mxu0 0.0
    %636 = vmatpush1.msra.mxu0 0.0
    %637 = vmatprep.subr.mxu0 0.0
    %638 = vmatpush1.msra.mxu0 0.0
    %639 = vmatprep.subr.mxu0 0.0
    %640 = vmatpush1.msra.mxu0 0.0
    %641 = vmatprep.subr.mxu0 0.0
    %642 = vmatpush1.msra.mxu0 0.0
    %643 = vmatprep.subr.mxu0 0.0
    %644 = vmatpush1.msra.mxu0 0.0
    %645 = vmatprep.subr.mxu0 0.0
    %646 = vmatpush1.msra.mxu0 0.0
    %647 = vmatprep.subr.mxu0 0.0
    %648 = vmatpush1.msra.mxu0 0.0
    %649 = vmatprep.subr.mxu0 0.0
    %650 = vmatpush1.msra.mxu0 %v614
    %651 = vmatprep.subr.mxu0 0.0
    %652 = vmatpush1.msra.mxu0 %v613
    %653 = vmatprep.subr.mxu0 0.0
    %654 = vmatpush1.msra.mxu0 %v612
    %655 = vmatprep.subr.mxu0 0.0
    %656 = vmatpush1.msra.mxu0 %v611
    %657 = vmatprep.subr.mxu0 0.0
    %658 = vmatpush2.msra.mxu0 0.0
    %659 = vmatprep.subr.mxu0 0.0
    %660 = vmatpush2.msra.mxu0 0.0
    %661 = vmatprep.subr.mxu0 0.0
    %662 = vmatpush2.msra.mxu0 0.0
    %663 = vmatprep.subr.mxu0 0.0
    %664 = vmatpush2.msra.mxu0 0.0
    %665 = vmatprep.subr.mxu0 0.0
    %666 = vmatpush2.msra.mxu0 0.0
    %667 = vmatprep.subr.mxu0 0.0
    %668 = vmatpush2.msra.mxu0 0.0
    %669 = vmatprep.subr.mxu0 0.0
    %670 = vmatpush2.msra.mxu0 0.0
    %671 = vmatprep.subr.mxu0 0.0
    %672 = vmatpush2.msra.mxu0 0.0
    %673 = vmatprep.subr.mxu0 0.0
    %674 = vmatpush2.msra.mxu0 0.0
    %675 = vmatprep.subr.mxu0 0.0
    %676 = vmatpush2.msra.mxu0 0.0
    %677 = vmatprep.subr.mxu0 0.0
    %678 = vmatpush2.msra.mxu0 0.0
    %679 = vmatprep.subr.mxu0 0.0
    %680 = vmatpush2.msra.mxu0 0.0
    %681 = vmatprep.subr.mxu0 0.0
    %682 = vmatpush2.msra.mxu0 0.0
    %683 = vmatprep.subr.mxu0 0.0
    %684 = vmatpush2.msra.mxu0 0.0
    %685 = vmatprep.subr.mxu0 0.0
    %686 = vmatpush2.msra.mxu0 0.0
    %687 = vmatprep.subr.mxu0 0.0
    %688 = vmatpush2.msra.mxu0 0.0
    %689 = vmatprep.mubr.f32.mxu0 0.0
    %690 = vmatmul.mubr.f32.gmra.mxu0 %v623
    %v691 = vpop.f32.mrf.mxu0
    %v692 = vadd.f32 %v620, %v691
    %v693 = vpop.f32.mrf.mxu0
    %694 = vdwg.mxu0
    %v695 = vmax.f32 %v692, 0.0
    %v696 = vld [vmem:[%s15] sm:$0xff]
    %v697 = vld [vmem:[%s15 + $0x8] sm:$0xff]
    %v698 = vld [vmem:[%s15 + $0x10] sm:$0xff]
    %v699 = vld [vmem:[%s15 + $0x18] sm:$0xff]
    %v700 = vld [vmem:[%s16] sm:$0x1]
    %v702 = vlaneseq
    %v703 = vshrl.u32 %v702, 7
    %v704 = vsub.s32 0, %v703
    %v705 = vrot.slane %v700, %v704
    %v708 = vsel %vm87, %v695, 0
    %710 = vmatprep.subr.mxu0 0.0
    %711 = vmatpush1.msra.mxu0 0.0
    %712 = vmatprep.subr.mxu0 0.0
    %713 = vmatpush1.msra.mxu0 0.0
    %714 = vmatprep.subr.mxu0 0.0
    %715 = vmatpush1.msra.mxu0 0.0
    %716 = vmatprep.subr.mxu0 0.0
    %717 = vmatpush1.msra.mxu0 0.0
    %718 = vmatprep.subr.mxu0 0.0
    %719 = vmatpush1.msra.mxu0 0.0
    %720 = vmatprep.subr.mxu0 0.0
    %721 = vmatpush1.msra.mxu0 0.0
    %722 = vmatprep.subr.mxu0 0.0
    %723 = vmatpush1.msra.mxu0 0.0
    %724 = vmatprep.subr.mxu0 0.0
    %725 = vmatpush1.msra.mxu0 0.0
    %726 = vmatprep.subr.mxu0 0.0
    %727 = vmatpush1.msra.mxu0 0.0
    %728 = vmatprep.subr.mxu0 0.0
    %729 = vmatpush1.msra.mxu0 0.0
    %730 = vmatprep.subr.mxu0 0.0
    %731 = vmatpush1.msra.mxu0 0.0
    %732 = vmatprep.subr.mxu0 0.0
    %733 = vmatpush1.msra.mxu0 0.0
    %734 = vmatprep.subr.mxu0 0.0
    %735 = vmatpush1.msra.mxu0 %v699
    %736 = vmatprep.subr.mxu0 0.0
    %737 = vmatpush1.msra.mxu0 %v698
    %738 = vmatprep.subr.mxu0 0.0
    %739 = vmatpush1.msra.mxu0 %v697
    %740 = vmatprep.subr.mxu0 0.0
    %741 = vmatpush1.msra.mxu0 %v696
    %742 = vmatprep.subr.mxu0 0.0
    %743 = vmatpush2.msra.mxu0 0.0
    %744 = vmatprep.subr.mxu0 0.0
    %745 = vmatpush2.msra.mxu0 0.0
    %746 = vmatprep.subr.mxu0 0.0
    %747 = vmatpush2.msra.mxu0 0.0
    %748 = vmatprep.subr.mxu0 0.0
    %749 = vmatpush2.msra.mxu0 0.0
    %750 = vmatprep.subr.mxu0 0.0
    %751 = vmatpush2.msra.mxu0 0.0
    %752 = vmatprep.subr.mxu0 0.0
    %753 = vmatpush2.msra.mxu0 0.0
    %754 = vmatprep.subr.mxu0 0.0
    %755 = vmatpush2.msra.mxu0 0.0
    %756 = vmatprep.subr.mxu0 0.0
    %757 = vmatpush2.msra.mxu0 0.0
    %758 = vmatprep.subr.mxu0 0.0
    %759 = vmatpush2.msra.mxu0 0.0
    %760 = vmatprep.subr.mxu0 0.0
    %761 = vmatpush2.msra.mxu0 0.0
    %762 = vmatprep.subr.mxu0 0.0
    %763 = vmatpush2.msra.mxu0 0.0
    %764 = vmatprep.subr.mxu0 0.0
    %765 = vmatpush2.msra.mxu0 0.0
    %766 = vmatprep.subr.mxu0 0.0
    %767 = vmatpush2.msra.mxu0 0.0
    %768 = vmatprep.subr.mxu0 0.0
    %769 = vmatpush2.msra.mxu0 0.0
    %770 = vmatprep.subr.mxu0 0.0
    %771 = vmatpush2.msra.mxu0 0.0
    %772 = vmatprep.subr.mxu0 0.0
    %773 = vmatpush2.msra.mxu0 0.0
    %774 = vmatprep.mubr.f32.mxu0 0.0
    %775 = vmatmul.mubr.f32.gmra.mxu0 %v708
    %v776 = vpop.f32.mrf.mxu0
    %v777 = vadd.f32 %v705, %v776
    %v778 = vpop.f32.mrf.mxu0
    %779 = vdwg.mxu0
    %vm780 = vcmask 9216
    %v781 = vsel %vm780, %v777, -inf
    %782 = vmax.xlane.f32.xlu0 %v781
    %v783 = vpop.xlane.xlu0 %782
    %vm784 = vcmp.ge.f32.partialorder %v777, %v783
    %v785 = vsel %vm784, %v336, 2
    %v786 = vsel %vm780, %v785, 2147483647
    %v787 = vand.u32 %v786, 65535
    %v788 = vshra.s32 %v786, 16
    %v789 = vcvt.s32.f32 %v787
    %v790 = vcvt.s32.f32 %v788
    %791 = vmin.xlane.f32.xlu0 %v790
    %v792 = vpop.xlane.xlu0 %791
    %vm793 = vcmp.eq.f32.partialorder %v790, %v792
    %v794 = vsel %vm793, %v789, inf
    %795 = vmin.xlane.f32.xlu0 %v794
    %v796 = vpop.xlane.xlu0 %795
    %v797 = vcvt.f32.s32 %v796
    %v798 = vcvt.f32.s32 %v792
    %v799 = vshll.u32 %v798, 16
    %v800 = vadd.s32 %v799, %v797
    %vm801 = vcmp.eq.s32.totalorder %v336, %v800
    %v802 = vsel %vm801, 1, 0
    %v803 = vcvt.s32.f32 %v802
    %v804 = vld [vmem:[%s17] sm:$0x3]
    %v805 = vld [vmem:[%s18] sm:$0x1]
    %v807 = vlaneseq
    %v808 = vshrl.u32 %v807, 7
    %v809 = vsub.s32 0, %v808
    %v810 = vrot.slane %v805, %v809
    %vm812 = vcmask 15360
    %v814 = vsel %vm812, %v803, 0
    %vm816 = vcmask 1041408
    %v818 = vsel %vm816, %v804, 0
    %820 = vmatprep.subr.mxu0 0.0
    %821 = vmatpush1.msra.mxu0 0.0
    %822 = vmatprep.subr.mxu0 0.0
    %823 = vmatpush1.msra.mxu0 0.0
    %824 = vmatprep.subr.mxu0 0.0
    %825 = vmatpush1.msra.mxu0 0.0
    %826 = vmatprep.subr.mxu0 0.0
    %827 = vmatpush1.msra.mxu0 0.0
    %828 = vmatprep.subr.mxu0 0.0
    %829 = vmatpush1.msra.mxu0 0.0
    %830 = vmatprep.subr.mxu0 0.0
    %831 = vmatpush1.msra.mxu0 0.0
    %832 = vmatprep.subr.mxu0 0.0
    %833 = vmatpush1.msra.mxu0 0.0
    %834 = vmatprep.subr.mxu0 0.0
    %835 = vmatpush1.msra.mxu0 0.0
    %836 = vmatprep.subr.mxu0 0.0
    %837 = vmatpush1.msra.mxu0 0.0
    %838 = vmatprep.subr.mxu0 0.0
    %839 = vmatpush1.msra.mxu0 0.0
    %840 = vmatprep.subr.mxu0 0.0
    %841 = vmatpush1.msra.mxu0 0.0
    %842 = vmatprep.subr.mxu0 0.0
    %843 = vmatpush1.msra.mxu0 0.0
    %844 = vmatprep.subr.mxu0 0.0
    %845 = vmatpush1.msra.mxu0 0.0
    %846 = vmatprep.subr.mxu0 0.0
    %847 = vmatpush1.msra.mxu0 0.0
    %848 = vmatprep.subr.mxu0 0.0
    %849 = vmatpush1.msra.mxu0 0.0
    %850 = vmatprep.subr.mxu0 0.0
    %851 = vmatpush1.msra.mxu0 %v818
    %852 = vmatprep.subr.mxu0 0.0
    %853 = vmatpush2.msra.mxu0 0.0
    %854 = vmatprep.subr.mxu0 0.0
    %855 = vmatpush2.msra.mxu0 0.0
    %856 = vmatprep.subr.mxu0 0.0
    %857 = vmatpush2.msra.mxu0 0.0
    %858 = vmatprep.subr.mxu0 0.0
    %859 = vmatpush2.msra.mxu0 0.0
    %860 = vmatprep.subr.mxu0 0.0
    %861 = vmatpush2.msra.mxu0 0.0
    %862 = vmatprep.subr.mxu0 0.0
    %863 = vmatpush2.msra.mxu0 0.0
    %864 = vmatprep.subr.mxu0 0.0
    %865 = vmatpush2.msra.mxu0 0.0
    %866 = vmatprep.subr.mxu0 0.0
    %867 = vmatpush2.msra.mxu0 0.0
    %868 = vmatprep.subr.mxu0 0.0
    %869 = vmatpush2.msra.mxu0 0.0
    %870 = vmatprep.subr.mxu0 0.0
    %871 = vmatpush2.msra.mxu0 0.0
    %872 = vmatprep.subr.mxu0 0.0
    %873 = vmatpush2.msra.mxu0 0.0
    %874 = vmatprep.subr.mxu0 0.0
    %875 = vmatpush2.msra.mxu0 0.0
    %876 = vmatprep.subr.mxu0 0.0
    %877 = vmatpush2.msra.mxu0 0.0
    %878 = vmatprep.subr.mxu0 0.0
    %879 = vmatpush2.msra.mxu0 0.0
    %880 = vmatprep.subr.mxu0 0.0
    %881 = vmatpush2.msra.mxu0 0.0
    %882 = vmatprep.subr.mxu0 0.0
    %883 = vmatpush2.msra.mxu0 0.0
    %884 = vmatprep.mubr.f32.mxu0 0.0
    %885 = vmatmul.mubr.f32.gmra.mxu0 %v814
    %v886 = vpop.f32.mrf.mxu0
    %v887 = vadd.f32 %v810, %v886
    %v888 = vpop.f32.mrf.mxu0
    %889 = vdwg.mxu0
    %v890 = vmax.f32 %v887, 0.0
    %v891 = vld [vmem:[%s19] sm:$0xff]
    %v892 = vld [vmem:[%s19 + $0x8] sm:$0xff]
    %v893 = vld [vmem:[%s19 + $0x10] sm:$0xff]
    %v894 = vld [vmem:[%s19 + $0x18] sm:$0xff]
    %v895 = vld [vmem:[%s20] sm:$0x1]
    %v897 = vlaneseq
    %v898 = vshrl.u32 %v897, 7
    %v899 = vsub.s32 0, %v898
    %v900 = vrot.slane %v895, %v899
    %v903 = vsel %vm87, %v890, 0
    %905 = vmatprep.subr.mxu0 0.0
    %906 = vmatpush1.msra.mxu0 0.0
    %907 = vmatprep.subr.mxu0 0.0
    %908 = vmatpush1.msra.mxu0 0.0
    %909 = vmatprep.subr.mxu0 0.0
    %910 = vmatpush1.msra.mxu0 0.0
    %911 = vmatprep.subr.mxu0 0.0
    %912 = vmatpush1.msra.mxu0 0.0
    %913 = vmatprep.subr.mxu0 0.0
    %914 = vmatpush1.msra.mxu0 0.0
    %915 = vmatprep.subr.mxu0 0.0
    %916 = vmatpush1.msra.mxu0 0.0
    %917 = vmatprep.subr.mxu0 0.0
    %918 = vmatpush1.msra.mxu0 0.0
    %919 = vmatprep.subr.mxu0 0.0
    %920 = vmatpush1.msra.mxu0 0.0
    %921 = vmatprep.subr.mxu0 0.0
    %922 = vmatpush1.msra.mxu0 0.0
    %923 = vmatprep.subr.mxu0 0.0
    %924 = vmatpush1.msra.mxu0 0.0
    %925 = vmatprep.subr.mxu0 0.0
    %926 = vmatpush1.msra.mxu0 0.0
    %927 = vmatprep.subr.mxu0 0.0
    %928 = vmatpush1.msra.mxu0 0.0
    %929 = vmatprep.subr.mxu0 0.0
    %930 = vmatpush1.msra.mxu0 %v894
    %931 = vmatprep.subr.mxu0 0.0
    %932 = vmatpush1.msra.mxu0 %v893
    %933 = vmatprep.subr.mxu0 0.0
    %934 = vmatpush1.msra.mxu0 %v892
    %935 = vmatprep.subr.mxu0 0.0
    %936 = vmatpush1.msra.mxu0 %v891
    %937 = vmatprep.subr.mxu0 0.0
    %938 = vmatpush2.msra.mxu0 0.0
    %939 = vmatprep.subr.mxu0 0.0
    %940 = vmatpush2.msra.mxu0 0.0
    %941 = vmatprep.subr.mxu0 0.0
    %942 = vmatpush2.msra.mxu0 0.0
    %943 = vmatprep.subr.mxu0 0.0
    %944 = vmatpush2.msra.mxu0 0.0
    %945 = vmatprep.subr.mxu0 0.0
    %946 = vmatpush2.msra.mxu0 0.0
    %947 = vmatprep.subr.mxu0 0.0
    %948 = vmatpush2.msra.mxu0 0.0
    %949 = vmatprep.subr.mxu0 0.0
    %950 = vmatpush2.msra.mxu0 0.0
    %951 = vmatprep.subr.mxu0 0.0
    %952 = vmatpush2.msra.mxu0 0.0
    %953 = vmatprep.subr.mxu0 0.0
    %954 = vmatpush2.msra.mxu0 0.0
    %955 = vmatprep.subr.mxu0 0.0
    %956 = vmatpush2.msra.mxu0 0.0
    %957 = vmatprep.subr.mxu0 0.0
    %958 = vmatpush2.msra.mxu0 0.0
    %959 = vmatprep.subr.mxu0 0.0
    %960 = vmatpush2.msra.mxu0 0.0
    %961 = vmatprep.subr.mxu0 0.0
    %962 = vmatpush2.msra.mxu0 0.0
    %963 = vmatprep.subr.mxu0 0.0
    %964 = vmatpush2.msra.mxu0 0.0
    %965 = vmatprep.subr.mxu0 0.0
    %966 = vmatpush2.msra.mxu0 0.0
    %967 = vmatprep.subr.mxu0 0.0
    %968 = vmatpush2.msra.mxu0 0.0
    %969 = vmatprep.mubr.f32.mxu0 0.0
    %970 = vmatmul.mubr.f32.gmra.mxu0 %v903
    %v971 = vpop.f32.mrf.mxu0
    %v972 = vadd.f32 %v900, %v971
    %v973 = vpop.f32.mrf.mxu0
    %974 = vdwg.mxu0
    %v975 = vadd.f32 %v525, %v972
    %976 = vst.msk [vmem:[#allocation2] sm:$0x3] %vm331, %v328
    %vm977 = vcmask 1024
    %978 = vst.msk [vmem:[%s22] sm:$0x3] %vm977, %v353
    %979 = vst.msk [vmem:[#allocation4] sm:$0x3] %vm780, %v777
    %980 = vst.msk [vmem:[%s24] sm:$0x3] %vm977, %v800
    %vm981 = vcmask 254976
    %982 = vst.msk [vmem:[%s25] sm:$0x3] %vm981, %v975
    // Predicated region
    $region86: #{policy_forward.5} parent=1 // pred_check
      _
    $region87: #{policy_forward.5} parent=1 // pred_check_branch
      %984 = sbr.rel (0) target = $region89
    $region88: #{policy_forward.5} parent=1 // pred_region
      %s986 = ssub.s32 32, 32
      %987 = vsyncadd [#allocation3], %s986
      %s989 = sshll.u32 [#allocation2], 4
      %s990 = int_to_ptr.vmem [resolvable:$true] %s989
      %992 = dma.vmem_to_hbm [thread:$0]  %s990, 32, %s21, [#allocation3]
    $region89: #{policy_forward.5} parent=1 // pred_fallthru
      _
    // Predicated region
    $region90: #{policy_forward.5} parent=1 // pred_check
      _
    $region91: #{policy_forward.5} parent=1 // pred_check_branch
      %994 = sbr.rel (0) target = $region93
    $region92: #{policy_forward.5} parent=1 // pred_region
      _
    $region93: #{policy_forward.5} parent=1 // pred_fallthru
      _
    // Predicated region
    $region94: #{policy_forward.5} parent=1 // pred_check
      _
    $region95: #{policy_forward.5} parent=1 // pred_check_branch
      %996 = sbr.rel (0) target = $region97
    $region96: #{policy_forward.5} parent=1 // pred_region
      %s998 = ssub.s32 32, 32
      %999 = vsyncadd [#allocation5], %s998
      %s1001 = sshll.u32 [#allocation4], 4
      %s1002 = int_to_ptr.vmem [resolvable:$true] %s1001
      %1004 = dma.vmem_to_hbm [thread:$0]  %s1002, 32, %s23, [#allocation5]
    $region97: #{policy_forward.5} parent=1 // pred_fallthru
      _
    // Predicated region
    $region98: #{policy_forward.5} parent=1 // pred_check
      _
    $region99: #{policy_forward.5} parent=1 // pred_check_branch
      %1006 = sbr.rel (0) target = $region101
    $region100: #{policy_forward.5} parent=1 // pred_region
      _
    $region101: #{policy_forward.5} parent=1 // pred_fallthru
      _
    // Predicated region
    $region102: #{policy_forward.5} parent=1 // pred_check
      _
    $region103: #{policy_forward.5} parent=1 // pred_check_branch
      %1008 = sbr.rel (0) target = $region105
    $region104: #{policy_forward.5} parent=1 // pred_region
      _
    $region105: #{policy_forward.5} parent=1 // pred_fallthru
      _
    // Predicated region
    $region106: #{policy_forward.5} parent=1 // pred_check
      _
    $region107: #{policy_forward.5} parent=1 // pred_check_branch
      %1010 = sbr.rel (0) target = $region109
    $region108: #{policy_forward.5} parent=1 // pred_region
      %1011 = dma.done [#allocation3], 32
    $region109: #{policy_forward.5} parent=1 // pred_fallthru
      _
    // Predicated region
    $region110: #{policy_forward.5} parent=1 // pred_check
      _
    $region111: #{policy_forward.5} parent=1 // pred_check_branch
      %1013 = sbr.rel (0) target = $region113
    $region112: #{policy_forward.5} parent=1 // pred_region
      _
    $region113: #{policy_forward.5} parent=1 // pred_fallthru
      _
    // Predicated region
    $region114: #{policy_forward.5} parent=1 // pred_check
      _
    $region115: #{policy_forward.5} parent=1 // pred_check_branch
      %1015 = sbr.rel (0) target = $region117
    $region116: #{policy_forward.5} parent=1 // pred_region
      %1016 = dma.done [#allocation5], 32
    $region117: #{policy_forward.5} parent=1 // pred_fallthru
      _
    // Predicated region
    $region118: #{policy_forward.5} parent=1 // pred_check
      _
    $region119: #{policy_forward.5} parent=1 // pred_check_branch
      %1018 = sbr.rel (0) target = $region121
    $region120: #{policy_forward.5} parent=1 // pred_region
      _
    $region121: #{policy_forward.5} parent=1 // pred_fallthru
      _
    // Predicated region
    $region122: #{policy_forward.5} parent=1 // pred_check
      _
    $region123: #{policy_forward.5} parent=1 // pred_check_branch
      %1020 = sbr.rel (0) target = $region125
    $region124: #{policy_forward.5} parent=1 // pred_region
      _
    $region125: #{policy_forward.5} parent=1 // pred_fallthru
      _
    %1021 = vsyncpa [#allocation3], 1
    %1022 = vsyncpa [#allocation5], 1

// kernel: policy_forward.6
$region0: #{policy_forward.6}
  #allocation0 [shape = 'u32[]', space=smem, size = 0x4, offset = 0x4, fixed_abs, tag = 'smem constant byte address 0x4 - core index']
  #allocation1 [shape = 'u32[144,128]{1,0:T(1,128)}', space=vmem, size = 0x12000, scoped, tag = 'internal scratch']
  #allocation2 [shape = 'f32[1,1]{1,0:T(1,128)S(1)}', space=vmem, size = 0x200, scoped, tag = 'scoped memory for policy_forward.6']
  %s0 = inlined_call_operand.vmem [shape: f32[2,32], index: 0, kind: input, shape index: {}]
  %s1 = inlined_call_operand.vmem [shape: f32[16,32], index: 1, kind: input, shape index: {}]
  %s2 = inlined_call_operand.vmem [shape: s32[2,1], index: 2, kind: input, shape index: {}]
  %s3 = inlined_call_operand.vmem [shape: f32[2,1], index: 3, kind: input, shape index: {}]
  %s4 = inlined_call_operand.vmem [shape: f32[32,32], index: 4, kind: input, shape index: {}]
  %s5 = inlined_call_operand.vmem [shape: f32[1,32], index: 5, kind: input, shape index: {}]
  %s6 = inlined_call_operand.vmem [shape: f32[32,32], index: 6, kind: input, shape index: {}]
  %s7 = inlined_call_operand.vmem [shape: f32[1,32], index: 7, kind: input, shape index: {}]
  %s8 = inlined_call_operand.vmem [shape: f32[32,32], index: 8, kind: input, shape index: {}]
  %s9 = inlined_call_operand.vmem [shape: f32[1,32], index: 9, kind: input, shape index: {}]
  %s10 = inlined_call_operand.vmem [shape: f32[32,1], index: 10, kind: input, shape index: {}]
  %s11 = inlined_call_operand.<no memory space> [shape: f32[1,1], index: 11, kind: input, shape index: {}]
  %s12 = inlined_call_operand.vmem [shape: f32[32,32], index: 12, kind: input, shape index: {}]
  %s13 = inlined_call_operand.vmem [shape: f32[1,32], index: 13, kind: input, shape index: {}]
  %s14 = inlined_call_operand.vmem [shape: f32[32,32], index: 14, kind: input, shape index: {}]
  %s15 = inlined_call_operand.vmem [shape: f32[1,32], index: 15, kind: input, shape index: {}]
  %s16 = inlined_call_operand.vmem [shape: f32[32,32], index: 16, kind: input, shape index: {}]
  %s17 = inlined_call_operand.vmem [shape: f32[1,32], index: 17, kind: input, shape index: {}]
  %s18 = inlined_call_operand.vmem [shape: f32[32,32], index: 18, kind: input, shape index: {}]
  %s19 = inlined_call_operand.vmem [shape: f32[1,32], index: 19, kind: input, shape index: {}]
  %s20 = inlined_call_operand.hbm [shape: f32[2,9], index: 20, kind: output, shape index: {0}]
  %s21 = inlined_call_operand.vmem [shape: s32[2,1], index: 21, kind: output, shape index: {1}]
  %s22 = inlined_call_operand.vmem [shape: s32[2,1], index: 22, kind: output, shape index: {2}]
  %s23 = inlined_call_operand.vmem [shape: f32[2,32], index: 23, kind: output, shape index: {3}]
  %s24 = inlined_call_operand.hbm [shape: f32[2,8], index: 24, kind: output, shape index: {4}]
  %s25 = inlined_call_operand.vmem [shape: s32[2,1], index: 25, kind: output, shape index: {5}]
  %26 = xla_tuple %s20, %s21, %s22, %s23, %s24, %s25
  %s27 = sld [smem:[#allocation0]]
  $region130: #{policy_forward.6} parent=0
    _
  %s29 = ssub.s32 1, %s27
  %s30 = scalar_select 0, %s29, %s27
  %v31 = vstv %s11
  %32 = vst [vmem:[#allocation2] sm:$0x1] %v31
  $region1: #{policy_forward.6} parent=0
    #allocation3 [shape = 'u8[1024]{0}', space=vmem, size = 0x400, scoped, tag = 'output window, operand 0, single buffered']
    #allocation4 [shape = 's32[1]{0}', space=sflag, size = 0x4, scoped, tag = 'scoped memory for policy_forward.6']
    #allocation5 [shape = 'u8[1024]{0}', space=vmem, size = 0x400, scoped, tag = 'output window, operand 4, single buffered']
    #allocation6 [shape = 's32[1]{0}', space=sflag, size = 0x4, scoped, tag = 'scoped memory for policy_forward.6']
    %33 = vsyncpa [#allocation4], 0
    %34 = vsyncpa [#allocation6], 0
    // Predicated region
    $region2: #{policy_forward.6} parent=1 // pred_check
      _
    $region3: #{policy_forward.6} parent=1 // pred_check_branch
      %36 = sbr.rel (0) target = $region5
    $region4: #{policy_forward.6} parent=1 // pred_region
      _
    $region5: #{policy_forward.6} parent=1 // pred_fallthru
      _
    // Predicated region
    $region6: #{policy_forward.6} parent=1 // pred_check
      _
    $region7: #{policy_forward.6} parent=1 // pred_check_branch
      %38 = sbr.rel (0) target = $region9
    $region8: #{policy_forward.6} parent=1 // pred_region
      _
    $region9: #{policy_forward.6} parent=1 // pred_fallthru
      _
    // Predicated region
    $region10: #{policy_forward.6} parent=1 // pred_check
      _
    $region11: #{policy_forward.6} parent=1 // pred_check_branch
      %40 = sbr.rel (0) target = $region13
    $region12: #{policy_forward.6} parent=1 // pred_region
      _
    $region13: #{policy_forward.6} parent=1 // pred_fallthru
      _
    // Predicated region
    $region14: #{policy_forward.6} parent=1 // pred_check
      _
    $region15: #{policy_forward.6} parent=1 // pred_check_branch
      %42 = sbr.rel (0) target = $region17
    $region16: #{policy_forward.6} parent=1 // pred_region
      _
    $region17: #{policy_forward.6} parent=1 // pred_fallthru
      _
    // Predicated region
    $region18: #{policy_forward.6} parent=1 // pred_check
      _
    $region19: #{policy_forward.6} parent=1 // pred_check_branch
      %44 = sbr.rel (0) target = $region21
    $region20: #{policy_forward.6} parent=1 // pred_region
      _
    $region21: #{policy_forward.6} parent=1 // pred_fallthru
      _
    // Predicated region
    $region22: #{policy_forward.6} parent=1 // pred_check
      _
    $region23: #{policy_forward.6} parent=1 // pred_check_branch
      %46 = sbr.rel (0) target = $region25
    $region24: #{policy_forward.6} parent=1 // pred_region
      _
    $region25: #{policy_forward.6} parent=1 // pred_fallthru
      _
    // Predicated region
    $region26: #{policy_forward.6} parent=1 // pred_check
      _
    $region27: #{policy_forward.6} parent=1 // pred_check_branch
      %48 = sbr.rel (0) target = $region29
    $region28: #{policy_forward.6} parent=1 // pred_region
      _
    $region29: #{policy_forward.6} parent=1 // pred_fallthru
      _
    // Predicated region
    $region30: #{policy_forward.6} parent=1 // pred_check
      _
    $region31: #{policy_forward.6} parent=1 // pred_check_branch
      %50 = sbr.rel (0) target = $region33
    $region32: #{policy_forward.6} parent=1 // pred_region
      _
    $region33: #{policy_forward.6} parent=1 // pred_fallthru
      _
    // Predicated region
    $region34: #{policy_forward.6} parent=1 // pred_check
      _
    $region35: #{policy_forward.6} parent=1 // pred_check_branch
      %52 = sbr.rel (0) target = $region37
    $region36: #{policy_forward.6} parent=1 // pred_region
      _
    $region37: #{policy_forward.6} parent=1 // pred_fallthru
      _
    // Predicated region
    $region38: #{policy_forward.6} parent=1 // pred_check
      _
    $region39: #{policy_forward.6} parent=1 // pred_check_branch
      %54 = sbr.rel (0) target = $region41
    $region40: #{policy_forward.6} parent=1 // pred_region
      _
    $region41: #{policy_forward.6} parent=1 // pred_fallthru
      _
    // Predicated region
    $region42: #{policy_forward.6} parent=1 // pred_check
      _
    $region43: #{policy_forward.6} parent=1 // pred_check_branch
      %56 = sbr.rel (0) target = $region45
    $region44: #{policy_forward.6} parent=1 // pred_region
      _
    $region45: #{policy_forward.6} parent=1 // pred_fallthru
      _
    // Predicated region
    $region46: #{policy_forward.6} parent=1 // pred_check
      _
    $region47: #{policy_forward.6} parent=1 // pred_check_branch
      %58 = sbr.rel (0) target = $region49
    $region48: #{policy_forward.6} parent=1 // pred_region
      _
    $region49: #{policy_forward.6} parent=1 // pred_fallthru
      _
    // Predicated region
    $region50: #{policy_forward.6} parent=1 // pred_check
      _
    $region51: #{policy_forward.6} parent=1 // pred_check_branch
      %60 = sbr.rel (0) target = $region53
    $region52: #{policy_forward.6} parent=1 // pred_region
      _
    $region53: #{policy_forward.6} parent=1 // pred_fallthru
      _
    // Predicated region
    $region54: #{policy_forward.6} parent=1 // pred_check
      _
    $region55: #{policy_forward.6} parent=1 // pred_check_branch
      %62 = sbr.rel (0) target = $region57
    $region56: #{policy_forward.6} parent=1 // pred_region
      _
    $region57: #{policy_forward.6} parent=1 // pred_fallthru
      _
    // Predicated region
    $region58: #{policy_forward.6} parent=1 // pred_check
      _
    $region59: #{policy_forward.6} parent=1 // pred_check_branch
      %64 = sbr.rel (0) target = $region61
    $region60: #{policy_forward.6} parent=1 // pred_region
      _
    $region61: #{policy_forward.6} parent=1 // pred_fallthru
      _
    // Predicated region
    $region62: #{policy_forward.6} parent=1 // pred_check
      _
    $region63: #{policy_forward.6} parent=1 // pred_check_branch
      %66 = sbr.rel (0) target = $region65
    $region64: #{policy_forward.6} parent=1 // pred_region
      _
    $region65: #{policy_forward.6} parent=1 // pred_fallthru
      _
    // Predicated region
    $region66: #{policy_forward.6} parent=1 // pred_check
      _
    $region67: #{policy_forward.6} parent=1 // pred_check_branch
      %68 = sbr.rel (0) target = $region69
    $region68: #{policy_forward.6} parent=1 // pred_region
      _
    $region69: #{policy_forward.6} parent=1 // pred_fallthru
      _
    // Predicated region
    $region70: #{policy_forward.6} parent=1 // pred_check
      _
    $region71: #{policy_forward.6} parent=1 // pred_check_branch
      %70 = sbr.rel (0) target = $region73
    $region72: #{policy_forward.6} parent=1 // pred_region
      _
    $region73: #{policy_forward.6} parent=1 // pred_fallthru
      _
    // Predicated region
    $region74: #{policy_forward.6} parent=1 // pred_check
      _
    $region75: #{policy_forward.6} parent=1 // pred_check_branch
      %72 = sbr.rel (0) target = $region77
    $region76: #{policy_forward.6} parent=1 // pred_region
      _
    $region77: #{policy_forward.6} parent=1 // pred_fallthru
      _
    // Predicated region
    $region78: #{policy_forward.6} parent=1 // pred_check
      _
    $region79: #{policy_forward.6} parent=1 // pred_check_branch
      %74 = sbr.rel (0) target = $region81
    $region80: #{policy_forward.6} parent=1 // pred_region
      _
    $region81: #{policy_forward.6} parent=1 // pred_fallthru
      _
    %v75 = vld [vmem:[%s0] sm:$0x3]
    %v76 = vld [vmem:[%s1] sm:$0xff]
    %v77 = vld [vmem:[%s1 + $0x8] sm:$0xff]
    %v78 = vld [vmem:[%s2] sm:$0x3]
    %v79 = vld [vmem:[%s3] sm:$0x3]
    %v80 = vlaneseq
    %v81 = vand.u32 %v80, 127
    %82 = vset.pattern.permute.xlu0 0
    %83 = vperm.xlu0 %82, %v78
    %v84 = vpop.permute.xlu0 %83
    %vm85 = vcmp.lt.s32.totalorder %v81, %v84
    %vm86 = vcmp.gt.f32.partialorder %v79, 0.5
    %v87 = vld [vmem:[%s4] sm:$0xff]
    %v88 = vld [vmem:[%s4 + $0x8] sm:$0xff]
    %v89 = vld [vmem:[%s4 + $0x10] sm:$0xff]
    %v90 = vld [vmem:[%s4 + $0x18] sm:$0xff]
    %v91 = vld [vmem:[%s5] sm:$0x1]
    %v93 = vlaneseq
    %v94 = vshrl.u32 %v93, 7
    %v95 = vsub.s32 0, %v94
    %v96 = vrot.slane %v91, %v95
    %vm98 = vcmask 261120
    %v100 = vsel %vm98, %v76, 0
    %v103 = vsel %vm98, %v77, 0
    %105 = vmatprep.subr.mxu0 0.0
    %106 = vmatpush1.msra.mxu0 0.0
    %107 = vmatprep.subr.mxu0 0.0
    %108 = vmatpush1.msra.mxu0 0.0
    %109 = vmatprep.subr.mxu0 0.0
    %110 = vmatpush1.msra.mxu0 0.0
    %111 = vmatprep.subr.mxu0 0.0
    %112 = vmatpush1.msra.mxu0 0.0
    %113 = vmatprep.subr.mxu0 0.0
    %114 = vmatpush1.msra.mxu0 0.0
    %115 = vmatprep.subr.mxu0 0.0
    %116 = vmatpush1.msra.mxu0 0.0
    %117 = vmatprep.subr.mxu0 0.0
    %118 = vmatpush1.msra.mxu0 0.0
    %119 = vmatprep.subr.mxu0 0.0
    %120 = vmatpush1.msra.mxu0 0.0
    %121 = vmatprep.subr.mxu0 0.0
    %122 = vmatpush1.msra.mxu0 0.0
    %123 = vmatprep.subr.mxu0 0.0
    %124 = vmatpush1.msra.mxu0 0.0
    %125 = vmatprep.subr.mxu0 0.0
    %126 = vmatpush1.msra.mxu0 0.0
    %127 = vmatprep.subr.mxu0 0.0
    %128 = vmatpush1.msra.mxu0 0.0
    %129 = vmatprep.subr.mxu0 0.0
    %130 = vmatpush1.msra.mxu0 %v90
    %131 = vmatprep.subr.mxu0 0.0
    %132 = vmatpush1.msra.mxu0 %v89
    %133 = vmatprep.subr.mxu0 0.0
    %134 = vmatpush1.msra.mxu0 %v88
    %135 = vmatprep.subr.mxu0 0.0
    %136 = vmatpush1.msra.mxu0 %v87
    %137 = vmatprep.subr.mxu0 0.0
    %138 = vmatpush2.msra.mxu0 0.0
    %139 = vmatprep.subr.mxu0 0.0
    %140 = vmatpush2.msra.mxu0 0.0
    %141 = vmatprep.subr.mxu0 0.0
    %142 = vmatpush2.msra.mxu0 0.0
    %143 = vmatprep.subr.mxu0 0.0
    %144 = vmatpush2.msra.mxu0 0.0
    %145 = vmatprep.subr.mxu0 0.0
    %146 = vmatpush2.msra.mxu0 0.0
    %147 = vmatprep.subr.mxu0 0.0
    %148 = vmatpush2.msra.mxu0 0.0
    %149 = vmatprep.subr.mxu0 0.0
    %150 = vmatpush2.msra.mxu0 0.0
    %151 = vmatprep.subr.mxu0 0.0
    %152 = vmatpush2.msra.mxu0 0.0
    %153 = vmatprep.subr.mxu0 0.0
    %154 = vmatpush2.msra.mxu0 0.0
    %155 = vmatprep.subr.mxu0 0.0
    %156 = vmatpush2.msra.mxu0 0.0
    %157 = vmatprep.subr.mxu0 0.0
    %158 = vmatpush2.msra.mxu0 0.0
    %159 = vmatprep.subr.mxu0 0.0
    %160 = vmatpush2.msra.mxu0 0.0
    %161 = vmatprep.subr.mxu0 0.0
    %162 = vmatpush2.msra.mxu0 0.0
    %163 = vmatprep.subr.mxu0 0.0
    %164 = vmatpush2.msra.mxu0 0.0
    %165 = vmatprep.subr.mxu0 0.0
    %166 = vmatpush2.msra.mxu0 0.0
    %167 = vmatprep.subr.mxu0 0.0
    %168 = vmatpush2.msra.mxu0 0.0
    %169 = vmatprep.mubr.f32.mxu0 0.0
    %170 = vmatmul.mubr.f32.gmra.mxu0 %v100
    %v171 = vpop.f32.mrf.mxu0
    %v172 = vadd.f32 %v96, %v171
    %v173 = vpop.f32.mrf.mxu0
    %174 = vmatprep.mubr.f32.mxu0 0.0
    %175 = vmatmul.mubr.f32.gmra.mxu0 %v103
    %v176 = vpop.f32.mrf.mxu0
    %v177 = vadd.f32 %v96, %v176
    %v178 = vpop.f32.mrf.mxu0
    %179 = vdwg.mxu0
    %v180 = vld [vmem:[%s6] sm:$0xff]
    %v181 = vld [vmem:[%s6 + $0x8] sm:$0xff]
    %v182 = vld [vmem:[%s6 + $0x10] sm:$0xff]
    %v183 = vld [vmem:[%s6 + $0x18] sm:$0xff]
    %v184 = vld [vmem:[%s7] sm:$0x1]
    %v186 = vlaneseq
    %v187 = vshrl.u32 %v186, 7
    %v188 = vsub.s32 0, %v187
    %v189 = vrot.slane %v184, %v188
    %v192 = vsel %vm98, %v75, 0
    %194 = vmatprep.subr.mxu0 0.0
    %195 = vmatpush1.msra.mxu0 0.0
    %196 = vmatprep.subr.mxu0 0.0
    %197 = vmatpush1.msra.mxu0 0.0
    %198 = vmatprep.subr.mxu0 0.0
    %199 = vmatpush1.msra.mxu0 0.0
    %200 = vmatprep.subr.mxu0 0.0
    %201 = vmatpush1.msra.mxu0 0.0
    %202 = vmatprep.subr.mxu0 0.0
    %203 = vmatpush1.msra.mxu0 0.0
    %204 = vmatprep.subr.mxu0 0.0
    %205 = vmatpush1.msra.mxu0 0.0
    %206 = vmatprep.subr.mxu0 0.0
    %207 = vmatpush1.msra.mxu0 0.0
    %208 = vmatprep.subr.mxu0 0.0
    %209 = vmatpush1.msra.mxu0 0.0
    %210 = vmatprep.subr.mxu0 0.0
    %211 = vmatpush1.msra.mxu0 0.0
    %212 = vmatprep.subr.mxu0 0.0
    %213 = vmatpush1.msra.mxu0 0.0
    %214 = vmatprep.subr.mxu0 0.0
    %215 = vmatpush1.msra.mxu0 0.0
    %216 = vmatprep.subr.mxu0 0.0
    %217 = vmatpush1.msra.mxu0 0.0
    %218 = vmatprep.subr.mxu0 0.0
    %219 = vmatpush1.msra.mxu0 %v183
    %220 = vmatprep.subr.mxu0 0.0
    %221 = vmatpush1.msra.mxu0 %v182
    %222 = vmatprep.subr.mxu0 0.0
    %223 = vmatpush1.msra.mxu0 %v181
    %224 = vmatprep.subr.mxu0 0.0
    %225 = vmatpush1.msra.mxu0 %v180
    %226 = vmatprep.subr.mxu0 0.0
    %227 = vmatpush2.msra.mxu0 0.0
    %228 = vmatprep.subr.mxu0 0.0
    %229 = vmatpush2.msra.mxu0 0.0
    %230 = vmatprep.subr.mxu0 0.0
    %231 = vmatpush2.msra.mxu0 0.0
    %232 = vmatprep.subr.mxu0 0.0
    %233 = vmatpush2.msra.mxu0 0.0
    %234 = vmatprep.subr.mxu0 0.0
    %235 = vmatpush2.msra.mxu0 0.0
    %236 = vmatprep.subr.mxu0 0.0
    %237 = vmatpush2.msra.mxu0 0.0
    %238 = vmatprep.subr.mxu0 0.0
    %239 = vmatpush2.msra.mxu0 0.0
    %240 = vmatprep.subr.mxu0 0.0
    %241 = vmatpush2.msra.mxu0 0.0
    %242 = vmatprep.subr.mxu0 0.0
    %243 = vmatpush2.msra.mxu0 0.0
    %244 = vmatprep.subr.mxu0 0.0
    %245 = vmatpush2.msra.mxu0 0.0
    %246 = vmatprep.subr.mxu0 0.0
    %247 = vmatpush2.msra.mxu0 0.0
    %248 = vmatprep.subr.mxu0 0.0
    %249 = vmatpush2.msra.mxu0 0.0
    %250 = vmatprep.subr.mxu0 0.0
    %251 = vmatpush2.msra.mxu0 0.0
    %252 = vmatprep.subr.mxu0 0.0
    %253 = vmatpush2.msra.mxu0 0.0
    %254 = vmatprep.subr.mxu0 0.0
    %255 = vmatpush2.msra.mxu0 0.0
    %256 = vmatprep.subr.mxu0 0.0
    %257 = vmatpush2.msra.mxu0 0.0
    %258 = vmatprep.mubr.f32.mxu0 0.0
    %259 = vmatmul.mubr.f32.gmra.mxu0 %v192
    %v260 = vpop.f32.mrf.mxu0
    %v261 = vadd.f32 %v189, %v260
    %v262 = vpop.f32.mrf.mxu0
    %263 = vdwg.mxu0
    %v264 = vmax.f32 %v261, 0.0
    %v265 = vld [vmem:[%s8] sm:$0xff]
    %v266 = vld [vmem:[%s8 + $0x8] sm:$0xff]
    %v267 = vld [vmem:[%s8 + $0x10] sm:$0xff]
    %v268 = vld [vmem:[%s8 + $0x18] sm:$0xff]
    %v269 = vld [vmem:[%s9] sm:$0x1]
    %v271 = vlaneseq
    %v272 = vshrl.u32 %v271, 7
    %v273 = vsub.s32 0, %v272
    %v274 = vrot.slane %v269, %v273
    %v277 = vsel %vm98, %v264, 0
    %279 = vmatprep.subr.mxu0 0.0
    %280 = vmatpush1.msra.mxu0 0.0
    %281 = vmatprep.subr.mxu0 0.0
    %282 = vmatpush1.msra.mxu0 0.0
    %283 = vmatprep.subr.mxu0 0.0
    %284 = vmatpush1.msra.mxu0 0.0
    %285 = vmatprep.subr.mxu0 0.0
    %286 = vmatpush1.msra.mxu0 0.0
    %287 = vmatprep.subr.mxu0 0.0
    %288 = vmatpush1.msra.mxu0 0.0
    %289 = vmatprep.subr.mxu0 0.0
    %290 = vmatpush1.msra.mxu0 0.0
    %291 = vmatprep.subr.mxu0 0.0
    %292 = vmatpush1.msra.mxu0 0.0
    %293 = vmatprep.subr.mxu0 0.0
    %294 = vmatpush1.msra.mxu0 0.0
    %295 = vmatprep.subr.mxu0 0.0
    %296 = vmatpush1.msra.mxu0 0.0
    %297 = vmatprep.subr.mxu0 0.0
    %298 = vmatpush1.msra.mxu0 0.0
    %299 = vmatprep.subr.mxu0 0.0
    %300 = vmatpush1.msra.mxu0 0.0
    %301 = vmatprep.subr.mxu0 0.0
    %302 = vmatpush1.msra.mxu0 0.0
    %303 = vmatprep.subr.mxu0 0.0
    %304 = vmatpush1.msra.mxu0 %v268
    %305 = vmatprep.subr.mxu0 0.0
    %306 = vmatpush1.msra.mxu0 %v267
    %307 = vmatprep.subr.mxu0 0.0
    %308 = vmatpush1.msra.mxu0 %v266
    %309 = vmatprep.subr.mxu0 0.0
    %310 = vmatpush1.msra.mxu0 %v265
    %311 = vmatprep.subr.mxu0 0.0
    %312 = vmatpush2.msra.mxu0 0.0
    %313 = vmatprep.subr.mxu0 0.0
    %314 = vmatpush2.msra.mxu0 0.0
    %315 = vmatprep.subr.mxu0 0.0
    %316 = vmatpush2.msra.mxu0 0.0
    %317 = vmatprep.subr.mxu0 0.0
    %318 = vmatpush2.msra.mxu0 0.0
    %319 = vmatprep.subr.mxu0 0.0
    %320 = vmatpush2.msra.mxu0 0.0
    %321 = vmatprep.subr.mxu0 0.0
    %322 = vmatpush2.msra.mxu0 0.0
    %323 = vmatprep.subr.mxu0 0.0
    %324 = vmatpush2.msra.mxu0 0.0
    %325 = vmatprep.subr.mxu0 0.0
    %326 = vmatpush2.msra.mxu0 0.0
    %327 = vmatprep.subr.mxu0 0.0
    %328 = vmatpush2.msra.mxu0 0.0
    %329 = vmatprep.subr.mxu0 0.0
    %330 = vmatpush2.msra.mxu0 0.0
    %331 = vmatprep.subr.mxu0 0.0
    %332 = vmatpush2.msra.mxu0 0.0
    %333 = vmatprep.subr.mxu0 0.0
    %334 = vmatpush2.msra.mxu0 0.0
    %335 = vmatprep.subr.mxu0 0.0
    %336 = vmatpush2.msra.mxu0 0.0
    %337 = vmatprep.subr.mxu0 0.0
    %338 = vmatpush2.msra.mxu0 0.0
    %339 = vmatprep.subr.mxu0 0.0
    %340 = vmatpush2.msra.mxu0 0.0
    %341 = vmatprep.subr.mxu0 0.0
    %342 = vmatpush2.msra.mxu0 0.0
    %343 = vmatprep.mubr.f32.mxu0 0.0
    %344 = vmatmul.mubr.f32.gmra.mxu0 %v277
    %v345 = vpop.f32.mrf.mxu0
    %v346 = vadd.f32 %v274, %v345
    %v347 = vpop.f32.mrf.mxu0
    %348 = vdwg.mxu0
    %v351 = vunpack.c.l.s4 1966171168
    %v352 = vunpack.c.0.s8 %v351
    %v353 = vlaneseq
    %v354 = vshrl.u32 %v353, 7
    %v355 = vsub.s32 %v352, %v354
    %v356 = vrot.slane %v346, %v355
    %v357 = vcombine.high %v356, %v356
    %v359 = vunpack.c.l.s4 1966171168
    %v360 = vunpack.c.0.s8 %v359
    %v361 = vlaneseq
    %v362 = vshrl.u32 %v361, 7
    %v363 = vsub.s32 %v360, %v362
    %v364 = vrot.slane %v356, %v363
    %v366 = vunpack.c.l.s4 1966171168
    %v367 = vunpack.c.0.s8 %v366
    %v368 = vlaneseq
    %v369 = vshrl.u32 %v368, 7
    %v370 = vsub.s32 %v367, %v369
    %v371 = vrot.slane %v357, %v370
    %v372 = vsel %vm98, %v364, 0
    %v375 = vsel %vm98, %v172, 0
    %377 = vmatprep.subr.mxu0 0.0
    %378 = vmatpush1.xpose.msra.mxu0 0.0
    %379 = vmatprep.subr.mxu0 0.0
    %380 = vmatpush1.xpose.msra.mxu0 0.0
    %381 = vmatprep.subr.mxu0 0.0
    %382 = vmatpush1.xpose.msra.mxu0 0.0
    %383 = vmatprep.subr.mxu0 0.0
    %384 = vmatpush1.xpose.msra.mxu0 0.0
    %385 = vmatprep.subr.mxu0 0.0
    %386 = vmatpush1.xpose.msra.mxu0 0.0
    %387 = vmatprep.subr.mxu0 0.0
    %388 = vmatpush1.xpose.msra.mxu0 0.0
    %389 = vmatprep.subr.mxu0 0.0
    %390 = vmatpush1.xpose.msra.mxu0 0.0
    %391 = vmatprep.subr.mxu0 0.0
    %392 = vmatpush1.xpose.msra.mxu0 0.0
    %393 = vmatprep.subr.mxu0 0.0
    %394 = vmatpush1.xpose.msra.mxu0 0.0
    %395 = vmatprep.subr.mxu0 0.0
    %396 = vmatpush1.xpose.msra.mxu0 0.0
    %397 = vmatprep.subr.mxu0 0.0
    %398 = vmatpush1.xpose.msra.mxu0 0.0
    %399 = vmatprep.subr.mxu0 0.0
    %400 = vmatpush1.xpose.msra.mxu0 0.0
    %401 = vmatprep.subr.mxu0 0.0
    %402 = vmatpush1.xpose.msra.mxu0 0.0
    %403 = vmatprep.subr.mxu0 0.0
    %404 = vmatpush1.xpose.msra.mxu0 0.0
    %405 = vmatprep.subr.mxu0 0.0
    %406 = vmatpush1.xpose.msra.mxu0 0.0
    %407 = vmatprep.subr.mxu0 0.0
    %408 = vmatpush1.xpose.msra.mxu0 %v375
    %409 = vmatprep.subr.mxu0 0.0
    %410 = vmatpush2.xpose.msra.mxu0 0.0
    %411 = vmatprep.subr.mxu0 0.0
    %412 = vmatpush2.xpose.msra.mxu0 0.0
    %413 = vmatprep.subr.mxu0 0.0
    %414 = vmatpush2.xpose.msra.mxu0 0.0
    %415 = vmatprep.subr.mxu0 0.0
    %416 = vmatpush2.xpose.msra.mxu0 0.0
    %417 = vmatprep.subr.mxu0 0.0
    %418 = vmatpush2.xpose.msra.mxu0 0.0
    %419 = vmatprep.subr.mxu0 0.0
    %420 = vmatpush2.xpose.msra.mxu0 0.0
    %421 = vmatprep.subr.mxu0 0.0
    %422 = vmatpush2.xpose.msra.mxu0 0.0
    %423 = vmatprep.subr.mxu0 0.0
    %424 = vmatpush2.xpose.msra.mxu0 0.0
    %425 = vmatprep.subr.mxu0 0.0
    %426 = vmatpush2.xpose.msra.mxu0 0.0
    %427 = vmatprep.subr.mxu0 0.0
    %428 = vmatpush2.xpose.msra.mxu0 0.0
    %429 = vmatprep.subr.mxu0 0.0
    %430 = vmatpush2.xpose.msra.mxu0 0.0
    %431 = vmatprep.subr.mxu0 0.0
    %432 = vmatpush2.xpose.msra.mxu0 0.0
    %433 = vmatprep.subr.mxu0 0.0
    %434 = vmatpush2.xpose.msra.mxu0 0.0
    %435 = vmatprep.subr.mxu0 0.0
    %436 = vmatpush2.xpose.msra.mxu0 0.0
    %437 = vmatprep.subr.mxu0 0.0
    %438 = vmatpush2.xpose.msra.mxu0 0.0
    %439 = vmatprep.subr.mxu0 0.0
    %440 = vmatpush2.xpose.msra.mxu0 0.0
    %441 = vmatprep.mubr.f32.mxu0 0.0
    %442 = vmatmul.mubr.f32.gmra.mxu0 %v372
    %v443 = vpop.f32.mrf.mxu0
    %v444 = vadd.f32 0.0, %v443
    %v445 = vpop.f32.mrf.mxu0
    %446 = vdwg.mxu0
    %v447 = vsel %vm98, %v371, 0
    %v450 = vsel %vm98, %v177, 0
    %452 = vmatprep.subr.mxu0 0.0
    %453 = vmatpush1.xpose.msra.mxu0 0.0
    %454 = vmatprep.subr.mxu0 0.0
    %455 = vmatpush1.xpose.msra.mxu0 0.0
    %456 = vmatprep.subr.mxu0 0.0
    %457 = vmatpush1.xpose.msra.mxu0 0.0
    %458 = vmatprep.subr.mxu0 0.0
    %459 = vmatpush1.xpose.msra.mxu0 0.0
    %460 = vmatprep.subr.mxu0 0.0
    %461 = vmatpush1.xpose.msra.mxu0 0.0
    %462 = vmatprep.subr.mxu0 0.0
    %463 = vmatpush1.xpose.msra.mxu0 0.0
    %464 = vmatprep.subr.mxu0 0.0
    %465 = vmatpush1.xpose.msra.mxu0 0.0
    %466 = vmatprep.subr.mxu0 0.0
    %467 = vmatpush1.xpose.msra.mxu0 0.0
    %468 = vmatprep.subr.mxu0 0.0
    %469 = vmatpush1.xpose.msra.mxu0 0.0
    %470 = vmatprep.subr.mxu0 0.0
    %471 = vmatpush1.xpose.msra.mxu0 0.0
    %472 = vmatprep.subr.mxu0 0.0
    %473 = vmatpush1.xpose.msra.mxu0 0.0
    %474 = vmatprep.subr.mxu0 0.0
    %475 = vmatpush1.xpose.msra.mxu0 0.0
    %476 = vmatprep.subr.mxu0 0.0
    %477 = vmatpush1.xpose.msra.mxu0 0.0
    %478 = vmatprep.subr.mxu0 0.0
    %479 = vmatpush1.xpose.msra.mxu0 0.0
    %480 = vmatprep.subr.mxu0 0.0
    %481 = vmatpush1.xpose.msra.mxu0 0.0
    %482 = vmatprep.subr.mxu0 0.0
    %483 = vmatpush1.xpose.msra.mxu0 %v450
    %484 = vmatprep.subr.mxu0 0.0
    %485 = vmatpush2.xpose.msra.mxu0 0.0
    %486 = vmatprep.subr.mxu0 0.0
    %487 = vmatpush2.xpose.msra.mxu0 0.0
    %488 = vmatprep.subr.mxu0 0.0
    %489 = vmatpush2.xpose.msra.mxu0 0.0
    %490 = vmatprep.subr.mxu0 0.0
    %491 = vmatpush2.xpose.msra.mxu0 0.0
    %492 = vmatprep.subr.mxu0 0.0
    %493 = vmatpush2.xpose.msra.mxu0 0.0
    %494 = vmatprep.subr.mxu0 0.0
    %495 = vmatpush2.xpose.msra.mxu0 0.0
    %496 = vmatprep.subr.mxu0 0.0
    %497 = vmatpush2.xpose.msra.mxu0 0.0
    %498 = vmatprep.subr.mxu0 0.0
    %499 = vmatpush2.xpose.msra.mxu0 0.0
    %500 = vmatprep.subr.mxu0 0.0
    %501 = vmatpush2.xpose.msra.mxu0 0.0
    %502 = vmatprep.subr.mxu0 0.0
    %503 = vmatpush2.xpose.msra.mxu0 0.0
    %504 = vmatprep.subr.mxu0 0.0
    %505 = vmatpush2.xpose.msra.mxu0 0.0
    %506 = vmatprep.subr.mxu0 0.0
    %507 = vmatpush2.xpose.msra.mxu0 0.0
    %508 = vmatprep.subr.mxu0 0.0
    %509 = vmatpush2.xpose.msra.mxu0 0.0
    %510 = vmatprep.subr.mxu0 0.0
    %511 = vmatpush2.xpose.msra.mxu0 0.0
    %512 = vmatprep.subr.mxu0 0.0
    %513 = vmatpush2.xpose.msra.mxu0 0.0
    %514 = vmatprep.subr.mxu0 0.0
    %515 = vmatpush2.xpose.msra.mxu0 0.0
    %516 = vmatprep.mubr.f32.mxu0 0.0
    %517 = vmatmul.mubr.f32.gmra.mxu0 %v447
    %v518 = vpop.f32.mrf.mxu0
    %v519 = vadd.f32 0.0, %v518
    %v520 = vpop.f32.mrf.mxu0
    %521 = vdwg.mxu0
    %v524 = vrot.slane %v519, 7
    %vm525 = vcmask 1041409
    %v526 = vsel %vm525, %v524, %v444
    %v528 = vsel %vm85, %v526, -1e+09
    %v529 = vld [vmem:[%s10] sm:$0xff]
    %v530 = vld [vmem:[%s10 + $0x8] sm:$0xff]
    %v531 = vld [vmem:[%s10 + $0x10] sm:$0xff]
    %v532 = vld [vmem:[%s10 + $0x18] sm:$0xff]
    %v533 = vld [vmem:[#allocation2] sm:$0x1]
    %v535 = vlaneseq
    %v536 = vshrl.u32 %v535, 7
    %v537 = vsub.s32 0, %v536
    %v538 = vrot.slane %v533, %v537
    %540 = vmatprep.subr.mxu0 0.0
    %541 = vmatpush1.msra.mxu0 0.0
    %542 = vmatprep.subr.mxu0 0.0
    %543 = vmatpush1.msra.mxu0 0.0
    %544 = vmatprep.subr.mxu0 0.0
    %545 = vmatpush1.msra.mxu0 0.0
    %546 = vmatprep.subr.mxu0 0.0
    %547 = vmatpush1.msra.mxu0 0.0
    %548 = vmatprep.subr.mxu0 0.0
    %549 = vmatpush1.msra.mxu0 0.0
    %550 = vmatprep.subr.mxu0 0.0
    %551 = vmatpush1.msra.mxu0 0.0
    %552 = vmatprep.subr.mxu0 0.0
    %553 = vmatpush1.msra.mxu0 0.0
    %554 = vmatprep.subr.mxu0 0.0
    %555 = vmatpush1.msra.mxu0 0.0
    %556 = vmatprep.subr.mxu0 0.0
    %557 = vmatpush1.msra.mxu0 0.0
    %558 = vmatprep.subr.mxu0 0.0
    %559 = vmatpush1.msra.mxu0 0.0
    %560 = vmatprep.subr.mxu0 0.0
    %561 = vmatpush1.msra.mxu0 0.0
    %562 = vmatprep.subr.mxu0 0.0
    %563 = vmatpush1.msra.mxu0 0.0
    %564 = vmatprep.subr.mxu0 0.0
    %565 = vmatpush1.msra.mxu0 %v532
    %566 = vmatprep.subr.mxu0 0.0
    %567 = vmatpush1.msra.mxu0 %v531
    %568 = vmatprep.subr.mxu0 0.0
    %569 = vmatpush1.msra.mxu0 %v530
    %570 = vmatprep.subr.mxu0 0.0
    %571 = vmatpush1.msra.mxu0 %v529
    %572 = vmatprep.subr.mxu0 0.0
    %573 = vmatpush2.msra.mxu0 0.0
    %574 = vmatprep.subr.mxu0 0.0
    %575 = vmatpush2.msra.mxu0 0.0
    %576 = vmatprep.subr.mxu0 0.0
    %577 = vmatpush2.msra.mxu0 0.0
    %578 = vmatprep.subr.mxu0 0.0
    %579 = vmatpush2.msra.mxu0 0.0
    %580 = vmatprep.subr.mxu0 0.0
    %581 = vmatpush2.msra.mxu0 0.0
    %582 = vmatprep.subr.mxu0 0.0
    %583 = vmatpush2.msra.mxu0 0.0
    %584 = vmatprep.subr.mxu0 0.0
    %585 = vmatpush2.msra.mxu0 0.0
    %586 = vmatprep.subr.mxu0 0.0
    %587 = vmatpush2.msra.mxu0 0.0
    %588 = vmatprep.subr.mxu0 0.0
    %589 = vmatpush2.msra.mxu0 0.0
    %590 = vmatprep.subr.mxu0 0.0
    %591 = vmatpush2.msra.mxu0 0.0
    %592 = vmatprep.subr.mxu0 0.0
    %593 = vmatpush2.msra.mxu0 0.0
    %594 = vmatprep.subr.mxu0 0.0
    %595 = vmatpush2.msra.mxu0 0.0
    %596 = vmatprep.subr.mxu0 0.0
    %597 = vmatpush2.msra.mxu0 0.0
    %598 = vmatprep.subr.mxu0 0.0
    %599 = vmatpush2.msra.mxu0 0.0
    %600 = vmatprep.subr.mxu0 0.0
    %601 = vmatpush2.msra.mxu0 0.0
    %602 = vmatprep.subr.mxu0 0.0
    %603 = vmatpush2.msra.mxu0 0.0
    %604 = vmatprep.mubr.f32.mxu0 0.0
    %605 = vmatmul.mubr.f32.gmra.mxu0 %v192
    %v606 = vpop.f32.mrf.mxu0
    %v607 = vadd.f32 %v538, %v606
    %v608 = vpop.f32.mrf.mxu0
    %609 = vdwg.mxu0
    %611 = vrot.lane.b32.xlu0 %v607, 8
    %v612 = vpop.permute.xlu0 %611
    %vm614 = vcmask 64512
    %v615 = vsel %vm614, %v528, %v612
    %vm616 = vcmp.lt.s32.totalorder %v81, 8
    %v617 = vsel %vm616, -1e+09, 0.0
    %v618 = vsel %vm86, 1, 0
    %619 = vset.pattern.permute.xlu0 0
    %620 = vperm.xlu0 %619, %v618
    %v621 = vpop.permute.xlu0 %620
    %vm622 = vcmp.eq.s32.totalorder %v621, 1
    %v623 = vsel %vm622, %v615, %v617
    %vm624 = vcmask 66560
    %v625 = vsel %vm624, %v623, -inf
    %626 = vmax.xlane.f32.xlu0 %v625
    %v627 = vpop.xlane.xlu0 %626
    %vm628 = vcmp.ge.f32.partialorder %v623, %v627
    %v629 = vsel %vm628, %v81, 9
    %v630 = vsel %vm624, %v629, 2147483647
    %v631 = vand.u32 %v630, 65535
    %v632 = vshra.s32 %v630, 16
    %v633 = vcvt.s32.f32 %v631
    %v634 = vcvt.s32.f32 %v632
    %635 = vmin.xlane.f32.xlu0 %v634
    %v636 = vpop.xlane.xlu0 %635
    %vm637 = vcmp.eq.f32.partialorder %v634, %v636
    %v638 = vsel %vm637, %v633, inf
    %639 = vmin.xlane.f32.xlu0 %v638
    %v640 = vpop.xlane.xlu0 %639
    %v641 = vcvt.f32.s32 %v640
    %v642 = vcvt.f32.s32 %v636
    %v643 = vshll.u32 %v642, 16
    %v644 = vadd.s32 %v643, %v641
    %vm645 = vcmask 58368
    %v646 = vsel %vm645, %v528, -inf
    %647 = vmax.xlane.f32.xlu0 %v646
    %v648 = vpop.xlane.xlu0 %647
    %vm649 = vcmp.ge.f32.partialorder %v528, %v648
    %v650 = vsel %vm649, %v81, 8
    %v651 = vsel %vm645, %v650, 2147483647
    %v652 = vand.u32 %v651, 65535
    %v653 = vshra.s32 %v651, 16
    %v654 = vcvt.s32.f32 %v652
    %v655 = vcvt.s32.f32 %v653
    %656 = vmin.xlane.f32.xlu0 %v655
    %v657 = vpop.xlane.xlu0 %656
    %vm658 = vcmp.eq.f32.partialorder %v655, %v657
    %v659 = vsel %vm658, %v654, inf
    %660 = vmin.xlane.f32.xlu0 %v659
    %v661 = vpop.xlane.xlu0 %660
    %v662 = vcvt.f32.s32 %v661
    %v663 = vcvt.f32.s32 %v657
    %v664 = vshll.u32 %v663, 16
    %v665 = vadd.s32 %v664, %v662
    %vm666 = vcmp.eq.s32.totalorder %v81, %v665
    %v667 = vsel %vm666, 1, 0
    %v668 = vcvt.s32.f32 %v667
    %v671 = vunpack.c.l.s4 1966171168
    %v672 = vunpack.c.0.s8 %v671
    %v673 = vlaneseq
    %v674 = vshrl.u32 %v673, 7
    %v675 = vsub.s32 %v672, %v674
    %v676 = vrot.slane %v668, %v675
    %v677 = vcombine.high %v676, %v676
    %v679 = vunpack.c.l.s4 1966171168
    %v680 = vunpack.c.0.s8 %v679
    %v681 = vlaneseq
    %v682 = vshrl.u32 %v681, 7
    %v683 = vsub.s32 %v680, %v682
    %v684 = vrot.slane %v676, %v683
    %v686 = vunpack.c.l.s4 1966171168
    %v687 = vunpack.c.0.s8 %v686
    %v688 = vlaneseq
    %v689 = vshrl.u32 %v688, 7
    %v690 = vsub.s32 %v687, %v689
    %v691 = vrot.slane %v677, %v690
    %v692 = vsel %vm614, %v684, 0
    %694 = vmatprep.subr.mxu0 0.0
    %695 = vmatpush1.msra.mxu0 0.0
    %696 = vmatprep.subr.mxu0 0.0
    %697 = vmatpush1.msra.mxu0 0.0
    %698 = vmatprep.subr.mxu0 0.0
    %699 = vmatpush1.msra.mxu0 0.0
    %700 = vmatprep.subr.mxu0 0.0
    %701 = vmatpush1.msra.mxu0 0.0
    %702 = vmatprep.subr.mxu0 0.0
    %703 = vmatpush1.msra.mxu0 0.0
    %704 = vmatprep.subr.mxu0 0.0
    %705 = vmatpush1.msra.mxu0 0.0
    %706 = vmatprep.subr.mxu0 0.0
    %707 = vmatpush1.msra.mxu0 0.0
    %708 = vmatprep.subr.mxu0 0.0
    %709 = vmatpush1.msra.mxu0 0.0
    %710 = vmatprep.subr.mxu0 0.0
    %711 = vmatpush1.msra.mxu0 0.0
    %712 = vmatprep.subr.mxu0 0.0
    %713 = vmatpush1.msra.mxu0 0.0
    %714 = vmatprep.subr.mxu0 0.0
    %715 = vmatpush1.msra.mxu0 0.0
    %716 = vmatprep.subr.mxu0 0.0
    %717 = vmatpush1.msra.mxu0 0.0
    %718 = vmatprep.subr.mxu0 0.0
    %719 = vmatpush1.msra.mxu0 0.0
    %720 = vmatprep.subr.mxu0 0.0
    %721 = vmatpush1.msra.mxu0 0.0
    %722 = vmatprep.subr.mxu0 0.0
    %723 = vmatpush1.msra.mxu0 0.0
    %724 = vmatprep.subr.mxu0 0.0
    %725 = vmatpush1.msra.mxu0 %v172
    %726 = vmatprep.subr.mxu0 0.0
    %727 = vmatpush2.msra.mxu0 0.0
    %728 = vmatprep.subr.mxu0 0.0
    %729 = vmatpush2.msra.mxu0 0.0
    %730 = vmatprep.subr.mxu0 0.0
    %731 = vmatpush2.msra.mxu0 0.0
    %732 = vmatprep.subr.mxu0 0.0
    %733 = vmatpush2.msra.mxu0 0.0
    %734 = vmatprep.subr.mxu0 0.0
    %735 = vmatpush2.msra.mxu0 0.0
    %736 = vmatprep.subr.mxu0 0.0
    %737 = vmatpush2.msra.mxu0 0.0
    %738 = vmatprep.subr.mxu0 0.0
    %739 = vmatpush2.msra.mxu0 0.0
    %740 = vmatprep.subr.mxu0 0.0
    %741 = vmatpush2.msra.mxu0 0.0
    %742 = vmatprep.subr.mxu0 0.0
    %743 = vmatpush2.msra.mxu0 0.0
    %744 = vmatprep.subr.mxu0 0.0
    %745 = vmatpush2.msra.mxu0 0.0
    %746 = vmatprep.subr.mxu0 0.0
    %747 = vmatpush2.msra.mxu0 0.0
    %748 = vmatprep.subr.mxu0 0.0
    %749 = vmatpush2.msra.mxu0 0.0
    %750 = vmatprep.subr.mxu0 0.0
    %751 = vmatpush2.msra.mxu0 0.0
    %752 = vmatprep.subr.mxu0 0.0
    %753 = vmatpush2.msra.mxu0 0.0
    %754 = vmatprep.subr.mxu0 0.0
    %755 = vmatpush2.msra.mxu0 0.0
    %756 = vmatprep.subr.mxu0 0.0
    %757 = vmatpush2.msra.mxu0 0.0
    %758 = vmatprep.mubr.f32.mxu0 0.0
    %759 = vmatmul.mubr.f32.gmra.mxu0 %v692
    %v760 = vpop.f32.mrf.mxu0
    %v761 = vadd.f32 0.0, %v760
    %v762 = vpop.f32.mrf.mxu0
    %763 = vdwg.mxu0
    %v764 = vsel %vm614, %v691, 0
    %766 = vmatprep.subr.mxu0 0.0
    %767 = vmatpush1.msra.mxu0 0.0
    %768 = vmatprep.subr.mxu0 0.0
    %769 = vmatpush1.msra.mxu0 0.0
    %770 = vmatprep.subr.mxu0 0.0
    %771 = vmatpush1.msra.mxu0 0.0
    %772 = vmatprep.subr.mxu0 0.0
    %773 = vmatpush1.msra.mxu0 0.0
    %774 = vmatprep.subr.mxu0 0.0
    %775 = vmatpush1.msra.mxu0 0.0
    %776 = vmatprep.subr.mxu0 0.0
    %777 = vmatpush1.msra.mxu0 0.0
    %778 = vmatprep.subr.mxu0 0.0
    %779 = vmatpush1.msra.mxu0 0.0
    %780 = vmatprep.subr.mxu0 0.0
    %781 = vmatpush1.msra.mxu0 0.0
    %782 = vmatprep.subr.mxu0 0.0
    %783 = vmatpush1.msra.mxu0 0.0
    %784 = vmatprep.subr.mxu0 0.0
    %785 = vmatpush1.msra.mxu0 0.0
    %786 = vmatprep.subr.mxu0 0.0
    %787 = vmatpush1.msra.mxu0 0.0
    %788 = vmatprep.subr.mxu0 0.0
    %789 = vmatpush1.msra.mxu0 0.0
    %790 = vmatprep.subr.mxu0 0.0
    %791 = vmatpush1.msra.mxu0 0.0
    %792 = vmatprep.subr.mxu0 0.0
    %793 = vmatpush1.msra.mxu0 0.0
    %794 = vmatprep.subr.mxu0 0.0
    %795 = vmatpush1.msra.mxu0 0.0
    %796 = vmatprep.subr.mxu0 0.0
    %797 = vmatpush1.msra.mxu0 %v177
    %798 = vmatprep.subr.mxu0 0.0
    %799 = vmatpush2.msra.mxu0 0.0
    %800 = vmatprep.subr.mxu0 0.0
    %801 = vmatpush2.msra.mxu0 0.0
    %802 = vmatprep.subr.mxu0 0.0
    %803 = vmatpush2.msra.mxu0 0.0
    %804 = vmatprep.subr.mxu0 0.0
    %805 = vmatpush2.msra.mxu0 0.0
    %806 = vmatprep.subr.mxu0 0.0
    %807 = vmatpush2.msra.mxu0 0.0
    %808 = vmatprep.subr.mxu0 0.0
    %809 = vmatpush2.msra.mxu0 0.0
    %810 = vmatprep.subr.mxu0 0.0
    %811 = vmatpush2.msra.mxu0 0.0
    %812 = vmatprep.subr.mxu0 0.0
    %813 = vmatpush2.msra.mxu0 0.0
    %814 = vmatprep.subr.mxu0 0.0
    %815 = vmatpush2.msra.mxu0 0.0
    %816 = vmatprep.subr.mxu0 0.0
    %817 = vmatpush2.msra.mxu0 0.0
    %818 = vmatprep.subr.mxu0 0.0
    %819 = vmatpush2.msra.mxu0 0.0
    %820 = vmatprep.subr.mxu0 0.0
    %821 = vmatpush2.msra.mxu0 0.0
    %822 = vmatprep.subr.mxu0 0.0
    %823 = vmatpush2.msra.mxu0 0.0
    %824 = vmatprep.subr.mxu0 0.0
    %825 = vmatpush2.msra.mxu0 0.0
    %826 = vmatprep.subr.mxu0 0.0
    %827 = vmatpush2.msra.mxu0 0.0
    %828 = vmatprep.subr.mxu0 0.0
    %829 = vmatpush2.msra.mxu0 0.0
    %830 = vmatprep.mubr.f32.mxu0 0.0
    %831 = vmatmul.mubr.f32.gmra.mxu0 %v764
    %v832 = vpop.f32.mrf.mxu0
    %v833 = vadd.f32 0.0, %v832
    %v834 = vpop.f32.mrf.mxu0
    %835 = vdwg.mxu0
    %v836 = vld [vmem:[%s12] sm:$0xff]
    %v837 = vld [vmem:[%s12 + $0x8] sm:$0xff]
    %v838 = vld [vmem:[%s12 + $0x10] sm:$0xff]
    %v839 = vld [vmem:[%s12 + $0x18] sm:$0xff]
    %v840 = vld [vmem:[%s13] sm:$0x1]
    %v842 = vlaneseq
    %v843 = vshrl.u32 %v842, 7
    %v844 = vsub.s32 0, %v843
    %v845 = vrot.slane %v840, %v844
    %v849 = vrot.slane %v833, 7
    %v850 = vsel %vm525, %v849, %v761
    %v851 = vsel %vm98, %v850, 0
    %853 = vmatprep.subr.mxu0 0.0
    %854 = vmatpush1.msra.mxu0 0.0
    %855 = vmatprep.subr.mxu0 0.0
    %856 = vmatpush1.msra.mxu0 0.0
    %857 = vmatprep.subr.mxu0 0.0
    %858 = vmatpush1.msra.mxu0 0.0
    %859 = vmatprep.subr.mxu0 0.0
    %860 = vmatpush1.msra.mxu0 0.0
    %861 = vmatprep.subr.mxu0 0.0
    %862 = vmatpush1.msra.mxu0 0.0
    %863 = vmatprep.subr.mxu0 0.0
    %864 = vmatpush1.msra.mxu0 0.0
    %865 = vmatprep.subr.mxu0 0.0
    %866 = vmatpush1.msra.mxu0 0.0
    %867 = vmatprep.subr.mxu0 0.0
    %868 = vmatpush1.msra.mxu0 0.0
    %869 = vmatprep.subr.mxu0 0.0
    %870 = vmatpush1.msra.mxu0 0.0
    %871 = vmatprep.subr.mxu0 0.0
    %872 = vmatpush1.msra.mxu0 0.0
    %873 = vmatprep.subr.mxu0 0.0
    %874 = vmatpush1.msra.mxu0 0.0
    %875 = vmatprep.subr.mxu0 0.0
    %876 = vmatpush1.msra.mxu0 0.0
    %877 = vmatprep.subr.mxu0 0.0
    %878 = vmatpush1.msra.mxu0 %v839
    %879 = vmatprep.subr.mxu0 0.0
    %880 = vmatpush1.msra.mxu0 %v838
    %881 = vmatprep.subr.mxu0 0.0
    %882 = vmatpush1.msra.mxu0 %v837
    %883 = vmatprep.subr.mxu0 0.0
    %884 = vmatpush1.msra.mxu0 %v836
    %885 = vmatprep.subr.mxu0 0.0
    %886 = vmatpush2.msra.mxu0 0.0
    %887 = vmatprep.subr.mxu0 0.0
    %888 = vmatpush2.msra.mxu0 0.0
    %889 = vmatprep.subr.mxu0 0.0
    %890 = vmatpush2.msra.mxu0 0.0
    %891 = vmatprep.subr.mxu0 0.0
    %892 = vmatpush2.msra.mxu0 0.0
    %893 = vmatprep.subr.mxu0 0.0
    %894 = vmatpush2.msra.mxu0 0.0
    %895 = vmatprep.subr.mxu0 0.0
    %896 = vmatpush2.msra.mxu0 0.0
    %897 = vmatprep.subr.mxu0 0.0
    %898 = vmatpush2.msra.mxu0 0.0
    %899 = vmatprep.subr.mxu0 0.0
    %900 = vmatpush2.msra.mxu0 0.0
    %901 = vmatprep.subr.mxu0 0.0
    %902 = vmatpush2.msra.mxu0 0.0
    %903 = vmatprep.subr.mxu0 0.0
    %904 = vmatpush2.msra.mxu0 0.0
    %905 = vmatprep.subr.mxu0 0.0
    %906 = vmatpush2.msra.mxu0 0.0
    %907 = vmatprep.subr.mxu0 0.0
    %908 = vmatpush2.msra.mxu0 0.0
    %909 = vmatprep.subr.mxu0 0.0
    %910 = vmatpush2.msra.mxu0 0.0
    %911 = vmatprep.subr.mxu0 0.0
    %912 = vmatpush2.msra.mxu0 0.0
    %913 = vmatprep.subr.mxu0 0.0
    %914 = vmatpush2.msra.mxu0 0.0
    %915 = vmatprep.subr.mxu0 0.0
    %916 = vmatpush2.msra.mxu0 0.0
    %917 = vmatprep.mubr.f32.mxu0 0.0
    %918 = vmatmul.mubr.f32.gmra.mxu0 %v851
    %v919 = vpop.f32.mrf.mxu0
    %v920 = vadd.f32 %v845, %v919
    %v921 = vpop.f32.mrf.mxu0
    %922 = vdwg.mxu0
    %924 = vset.pattern.permute.xlu0 0
    %925 = vperm.xlu0 %924, %v79
    %v926 = vpop.permute.xlu0 %925
    %v928 = vmul.f32 %v920, %v926
    %v929 = vadd.f32 %v75, %v928
    %v930 = vld [vmem:[%s14] sm:$0xff]
    %v931 = vld [vmem:[%s14 + $0x8] sm:$0xff]
    %v932 = vld [vmem:[%s14 + $0x10] sm:$0xff]
    %v933 = vld [vmem:[%s14 + $0x18] sm:$0xff]
    %v934 = vld [vmem:[%s15] sm:$0x1]
    %v936 = vlaneseq
    %v937 = vshrl.u32 %v936, 7
    %v938 = vsub.s32 0, %v937
    %v939 = vrot.slane %v934, %v938
    %941 = vmatprep.subr.mxu0 0.0
    %942 = vmatpush1.msra.mxu0 0.0
    %943 = vmatprep.subr.mxu0 0.0
    %944 = vmatpush1.msra.mxu0 0.0
    %945 = vmatprep.subr.mxu0 0.0
    %946 = vmatpush1.msra.mxu0 0.0
    %947 = vmatprep.subr.mxu0 0.0
    %948 = vmatpush1.msra.mxu0 0.0
    %949 = vmatprep.subr.mxu0 0.0
    %950 = vmatpush1.msra.mxu0 0.0
    %951 = vmatprep.subr.mxu0 0.0
    %952 = vmatpush1.msra.mxu0 0.0
    %953 = vmatprep.subr.mxu0 0.0
    %954 = vmatpush1.msra.mxu0 0.0
    %955 = vmatprep.subr.mxu0 0.0
    %956 = vmatpush1.msra.mxu0 0.0
    %957 = vmatprep.subr.mxu0 0.0
    %958 = vmatpush1.msra.mxu0 0.0
    %959 = vmatprep.subr.mxu0 0.0
    %960 = vmatpush1.msra.mxu0 0.0
    %961 = vmatprep.subr.mxu0 0.0
    %962 = vmatpush1.msra.mxu0 0.0
    %963 = vmatprep.subr.mxu0 0.0
    %964 = vmatpush1.msra.mxu0 0.0
    %965 = vmatprep.subr.mxu0 0.0
    %966 = vmatpush1.msra.mxu0 %v933
    %967 = vmatprep.subr.mxu0 0.0
    %968 = vmatpush1.msra.mxu0 %v932
    %969 = vmatprep.subr.mxu0 0.0
    %970 = vmatpush1.msra.mxu0 %v931
    %971 = vmatprep.subr.mxu0 0.0
    %972 = vmatpush1.msra.mxu0 %v930
    %973 = vmatprep.subr.mxu0 0.0
    %974 = vmatpush2.msra.mxu0 0.0
    %975 = vmatprep.subr.mxu0 0.0
    %976 = vmatpush2.msra.mxu0 0.0
    %977 = vmatprep.subr.mxu0 0.0
    %978 = vmatpush2.msra.mxu0 0.0
    %979 = vmatprep.subr.mxu0 0.0
    %980 = vmatpush2.msra.mxu0 0.0
    %981 = vmatprep.subr.mxu0 0.0
    %982 = vmatpush2.msra.mxu0 0.0
    %983 = vmatprep.subr.mxu0 0.0
    %984 = vmatpush2.msra.mxu0 0.0
    %985 = vmatprep.subr.mxu0 0.0
    %986 = vmatpush2.msra.mxu0 0.0
    %987 = vmatprep.subr.mxu0 0.0
    %988 = vmatpush2.msra.mxu0 0.0
    %989 = vmatprep.subr.mxu0 0.0
    %990 = vmatpush2.msra.mxu0 0.0
    %991 = vmatprep.subr.mxu0 0.0
    %992 = vmatpush2.msra.mxu0 0.0
    %993 = vmatprep.subr.mxu0 0.0
    %994 = vmatpush2.msra.mxu0 0.0
    %995 = vmatprep.subr.mxu0 0.0
    %996 = vmatpush2.msra.mxu0 0.0
    %997 = vmatprep.subr.mxu0 0.0
    %998 = vmatpush2.msra.mxu0 0.0
    %999 = vmatprep.subr.mxu0 0.0
    %1000 = vmatpush2.msra.mxu0 0.0
    %1001 = vmatprep.subr.mxu0 0.0
    %1002 = vmatpush2.msra.mxu0 0.0
    %1003 = vmatprep.subr.mxu0 0.0
    %1004 = vmatpush2.msra.mxu0 0.0
    %1005 = vmatprep.mubr.f32.mxu0 0.0
    %1006 = vmatmul.mubr.f32.gmra.mxu0 %v100
    %v1007 = vpop.f32.mrf.mxu0
    %v1008 = vadd.f32 %v939, %v1007
    %v1009 = vpop.f32.mrf.mxu0
    %1010 = vmatprep.mubr.f32.mxu0 0.0
    %1011 = vmatmul.mubr.f32.gmra.mxu0 %v103
    %v1012 = vpop.f32.mrf.mxu0
    %v1013 = vadd.f32 %v939, %v1012
    %v1014 = vpop.f32.mrf.mxu0
    %1015 = vdwg.mxu0
    %v1016 = vld [vmem:[%s16] sm:$0xff]
    %v1017 = vld [vmem:[%s16 + $0x8] sm:$0xff]
    %v1018 = vld [vmem:[%s16 + $0x10] sm:$0xff]
    %v1019 = vld [vmem:[%s16 + $0x18] sm:$0xff]
    %v1020 = vld [vmem:[%s17] sm:$0x1]
    %v1022 = vlaneseq
    %v1023 = vshrl.u32 %v1022, 7
    %v1024 = vsub.s32 0, %v1023
    %v1025 = vrot.slane %v1020, %v1024
    %v1028 = vsel %vm98, %v929, 0
    %1030 = vmatprep.subr.mxu0 0.0
    %1031 = vmatpush1.msra.mxu0 0.0
    %1032 = vmatprep.subr.mxu0 0.0
    %1033 = vmatpush1.msra.mxu0 0.0
    %1034 = vmatprep.subr.mxu0 0.0
    %1035 = vmatpush1.msra.mxu0 0.0
    %1036 = vmatprep.subr.mxu0 0.0
    %1037 = vmatpush1.msra.mxu0 0.0
    %1038 = vmatprep.subr.mxu0 0.0
    %1039 = vmatpush1.msra.mxu0 0.0
    %1040 = vmatprep.subr.mxu0 0.0
    %1041 = vmatpush1.msra.mxu0 0.0
    %1042 = vmatprep.subr.mxu0 0.0
    %1043 = vmatpush1.msra.mxu0 0.0
    %1044 = vmatprep.subr.mxu0 0.0
    %1045 = vmatpush1.msra.mxu0 0.0
    %1046 = vmatprep.subr.mxu0 0.0
    %1047 = vmatpush1.msra.mxu0 0.0
    %1048 = vmatprep.subr.mxu0 0.0
    %1049 = vmatpush1.msra.mxu0 0.0
    %1050 = vmatprep.subr.mxu0 0.0
    %1051 = vmatpush1.msra.mxu0 0.0
    %1052 = vmatprep.subr.mxu0 0.0
    %1053 = vmatpush1.msra.mxu0 0.0
    %1054 = vmatprep.subr.mxu0 0.0
    %1055 = vmatpush1.msra.mxu0 %v1019
    %1056 = vmatprep.subr.mxu0 0.0
    %1057 = vmatpush1.msra.mxu0 %v1018
    %1058 = vmatprep.subr.mxu0 0.0
    %1059 = vmatpush1.msra.mxu0 %v1017
    %1060 = vmatprep.subr.mxu0 0.0
    %1061 = vmatpush1.msra.mxu0 %v1016
    %1062 = vmatprep.subr.mxu0 0.0
    %1063 = vmatpush2.msra.mxu0 0.0
    %1064 = vmatprep.subr.mxu0 0.0
    %1065 = vmatpush2.msra.mxu0 0.0
    %1066 = vmatprep.subr.mxu0 0.0
    %1067 = vmatpush2.msra.mxu0 0.0
    %1068 = vmatprep.subr.mxu0 0.0
    %1069 = vmatpush2.msra.mxu0 0.0
    %1070 = vmatprep.subr.mxu0 0.0
    %1071 = vmatpush2.msra.mxu0 0.0
    %1072 = vmatprep.subr.mxu0 0.0
    %1073 = vmatpush2.msra.mxu0 0.0
    %1074 = vmatprep.subr.mxu0 0.0
    %1075 = vmatpush2.msra.mxu0 0.0
    %1076 = vmatprep.subr.mxu0 0.0
    %1077 = vmatpush2.msra.mxu0 0.0
    %1078 = vmatprep.subr.mxu0 0.0
    %1079 = vmatpush2.msra.mxu0 0.0
    %1080 = vmatprep.subr.mxu0 0.0
    %1081 = vmatpush2.msra.mxu0 0.0
    %1082 = vmatprep.subr.mxu0 0.0
    %1083 = vmatpush2.msra.mxu0 0.0
    %1084 = vmatprep.subr.mxu0 0.0
    %1085 = vmatpush2.msra.mxu0 0.0
    %1086 = vmatprep.subr.mxu0 0.0
    %1087 = vmatpush2.msra.mxu0 0.0
    %1088 = vmatprep.subr.mxu0 0.0
    %1089 = vmatpush2.msra.mxu0 0.0
    %1090 = vmatprep.subr.mxu0 0.0
    %1091 = vmatpush2.msra.mxu0 0.0
    %1092 = vmatprep.subr.mxu0 0.0
    %1093 = vmatpush2.msra.mxu0 0.0
    %1094 = vmatprep.mubr.f32.mxu0 0.0
    %1095 = vmatmul.mubr.f32.gmra.mxu0 %v1028
    %v1096 = vpop.f32.mrf.mxu0
    %v1097 = vadd.f32 %v1025, %v1096
    %v1098 = vpop.f32.mrf.mxu0
    %1099 = vdwg.mxu0
    %v1100 = vmax.f32 %v1097, 0.0
    %v1101 = vld [vmem:[%s18] sm:$0xff]
    %v1102 = vld [vmem:[%s18 + $0x8] sm:$0xff]
    %v1103 = vld [vmem:[%s18 + $0x10] sm:$0xff]
    %v1104 = vld [vmem:[%s18 + $0x18] sm:$0xff]
    %v1105 = vld [vmem:[%s19] sm:$0x1]
    %v1107 = vlaneseq
    %v1108 = vshrl.u32 %v1107, 7
    %v1109 = vsub.s32 0, %v1108
    %v1110 = vrot.slane %v1105, %v1109
    %v1113 = vsel %vm98, %v1100, 0
    %1115 = vmatprep.subr.mxu0 0.0
    %1116 = vmatpush1.msra.mxu0 0.0
    %1117 = vmatprep.subr.mxu0 0.0
    %1118 = vmatpush1.msra.mxu0 0.0
    %1119 = vmatprep.subr.mxu0 0.0
    %1120 = vmatpush1.msra.mxu0 0.0
    %1121 = vmatprep.subr.mxu0 0.0
    %1122 = vmatpush1.msra.mxu0 0.0
    %1123 = vmatprep.subr.mxu0 0.0
    %1124 = vmatpush1.msra.mxu0 0.0
    %1125 = vmatprep.subr.mxu0 0.0
    %1126 = vmatpush1.msra.mxu0 0.0
    %1127 = vmatprep.subr.mxu0 0.0
    %1128 = vmatpush1.msra.mxu0 0.0
    %1129 = vmatprep.subr.mxu0 0.0
    %1130 = vmatpush1.msra.mxu0 0.0
    %1131 = vmatprep.subr.mxu0 0.0
    %1132 = vmatpush1.msra.mxu0 0.0
    %1133 = vmatprep.subr.mxu0 0.0
    %1134 = vmatpush1.msra.mxu0 0.0
    %1135 = vmatprep.subr.mxu0 0.0
    %1136 = vmatpush1.msra.mxu0 0.0
    %1137 = vmatprep.subr.mxu0 0.0
    %1138 = vmatpush1.msra.mxu0 0.0
    %1139 = vmatprep.subr.mxu0 0.0
    %1140 = vmatpush1.msra.mxu0 %v1104
    %1141 = vmatprep.subr.mxu0 0.0
    %1142 = vmatpush1.msra.mxu0 %v1103
    %1143 = vmatprep.subr.mxu0 0.0
    %1144 = vmatpush1.msra.mxu0 %v1102
    %1145 = vmatprep.subr.mxu0 0.0
    %1146 = vmatpush1.msra.mxu0 %v1101
    %1147 = vmatprep.subr.mxu0 0.0
    %1148 = vmatpush2.msra.mxu0 0.0
    %1149 = vmatprep.subr.mxu0 0.0
    %1150 = vmatpush2.msra.mxu0 0.0
    %1151 = vmatprep.subr.mxu0 0.0
    %1152 = vmatpush2.msra.mxu0 0.0
    %1153 = vmatprep.subr.mxu0 0.0
    %1154 = vmatpush2.msra.mxu0 0.0
    %1155 = vmatprep.subr.mxu0 0.0
    %1156 = vmatpush2.msra.mxu0 0.0
    %1157 = vmatprep.subr.mxu0 0.0
    %1158 = vmatpush2.msra.mxu0 0.0
    %1159 = vmatprep.subr.mxu0 0.0
    %1160 = vmatpush2.msra.mxu0 0.0
    %1161 = vmatprep.subr.mxu0 0.0
    %1162 = vmatpush2.msra.mxu0 0.0
    %1163 = vmatprep.subr.mxu0 0.0
    %1164 = vmatpush2.msra.mxu0 0.0
    %1165 = vmatprep.subr.mxu0 0.0
    %1166 = vmatpush2.msra.mxu0 0.0
    %1167 = vmatprep.subr.mxu0 0.0
    %1168 = vmatpush2.msra.mxu0 0.0
    %1169 = vmatprep.subr.mxu0 0.0
    %1170 = vmatpush2.msra.mxu0 0.0
    %1171 = vmatprep.subr.mxu0 0.0
    %1172 = vmatpush2.msra.mxu0 0.0
    %1173 = vmatprep.subr.mxu0 0.0
    %1174 = vmatpush2.msra.mxu0 0.0
    %1175 = vmatprep.subr.mxu0 0.0
    %1176 = vmatpush2.msra.mxu0 0.0
    %1177 = vmatprep.subr.mxu0 0.0
    %1178 = vmatpush2.msra.mxu0 0.0
    %1179 = vmatprep.mubr.f32.mxu0 0.0
    %1180 = vmatmul.mubr.f32.gmra.mxu0 %v1113
    %v1181 = vpop.f32.mrf.mxu0
    %v1182 = vadd.f32 %v1110, %v1181
    %v1183 = vpop.f32.mrf.mxu0
    %1184 = vdwg.mxu0
    %v1187 = vunpack.c.l.s4 1966171168
    %v1188 = vunpack.c.0.s8 %v1187
    %v1189 = vlaneseq
    %v1190 = vshrl.u32 %v1189, 7
    %v1191 = vsub.s32 %v1188, %v1190
    %v1192 = vrot.slane %v1182, %v1191
    %v1193 = vcombine.high %v1192, %v1192
    %v1195 = vunpack.c.l.s4 1966171168
    %v1196 = vunpack.c.0.s8 %v1195
    %v1197 = vlaneseq
    %v1198 = vshrl.u32 %v1197, 7
    %v1199 = vsub.s32 %v1196, %v1198
    %v1200 = vrot.slane %v1192, %v1199
    %v1202 = vunpack.c.l.s4 1966171168
    %v1203 = vunpack.c.0.s8 %v1202
    %v1204 = vlaneseq
    %v1205 = vshrl.u32 %v1204, 7
    %v1206 = vsub.s32 %v1203, %v1205
    %v1207 = vrot.slane %v1193, %v1206
    %v1208 = vsel %vm98, %v1200, 0
    %v1211 = vsel %vm98, %v1008, 0
    %1213 = vmatprep.subr.mxu0 0.0
    %1214 = vmatpush1.xpose.msra.mxu0 0.0
    %1215 = vmatprep.subr.mxu0 0.0
    %1216 = vmatpush1.xpose.msra.mxu0 0.0
    %1217 = vmatprep.subr.mxu0 0.0
    %1218 = vmatpush1.xpose.msra.mxu0 0.0
    %1219 = vmatprep.subr.mxu0 0.0
    %1220 = vmatpush1.xpose.msra.mxu0 0.0
    %1221 = vmatprep.subr.mxu0 0.0
    %1222 = vmatpush1.xpose.msra.mxu0 0.0
    %1223 = vmatprep.subr.mxu0 0.0
    %1224 = vmatpush1.xpose.msra.mxu0 0.0
    %1225 = vmatprep.subr.mxu0 0.0
    %1226 = vmatpush1.xpose.msra.mxu0 0.0
    %1227 = vmatprep.subr.mxu0 0.0
    %1228 = vmatpush1.xpose.msra.mxu0 0.0
    %1229 = vmatprep.subr.mxu0 0.0
    %1230 = vmatpush1.xpose.msra.mxu0 0.0
    %1231 = vmatprep.subr.mxu0 0.0
    %1232 = vmatpush1.xpose.msra.mxu0 0.0
    %1233 = vmatprep.subr.mxu0 0.0
    %1234 = vmatpush1.xpose.msra.mxu0 0.0
    %1235 = vmatprep.subr.mxu0 0.0
    %1236 = vmatpush1.xpose.msra.mxu0 0.0
    %1237 = vmatprep.subr.mxu0 0.0
    %1238 = vmatpush1.xpose.msra.mxu0 0.0
    %1239 = vmatprep.subr.mxu0 0.0
    %1240 = vmatpush1.xpose.msra.mxu0 0.0
    %1241 = vmatprep.subr.mxu0 0.0
    %1242 = vmatpush1.xpose.msra.mxu0 0.0
    %1243 = vmatprep.subr.mxu0 0.0
    %1244 = vmatpush1.xpose.msra.mxu0 %v1211
    %1245 = vmatprep.subr.mxu0 0.0
    %1246 = vmatpush2.xpose.msra.mxu0 0.0
    %1247 = vmatprep.subr.mxu0 0.0
    %1248 = vmatpush2.xpose.msra.mxu0 0.0
    %1249 = vmatprep.subr.mxu0 0.0
    %1250 = vmatpush2.xpose.msra.mxu0 0.0
    %1251 = vmatprep.subr.mxu0 0.0
    %1252 = vmatpush2.xpose.msra.mxu0 0.0
    %1253 = vmatprep.subr.mxu0 0.0
    %1254 = vmatpush2.xpose.msra.mxu0 0.0
    %1255 = vmatprep.subr.mxu0 0.0
    %1256 = vmatpush2.xpose.msra.mxu0 0.0
    %1257 = vmatprep.subr.mxu0 0.0
    %1258 = vmatpush2.xpose.msra.mxu0 0.0
    %1259 = vmatprep.subr.mxu0 0.0
    %1260 = vmatpush2.xpose.msra.mxu0 0.0
    %1261 = vmatprep.subr.mxu0 0.0
    %1262 = vmatpush2.xpose.msra.mxu0 0.0
    %1263 = vmatprep.subr.mxu0 0.0
    %1264 = vmatpush2.xpose.msra.mxu0 0.0
    %1265 = vmatprep.subr.mxu0 0.0
    %1266 = vmatpush2.xpose.msra.mxu0 0.0
    %1267 = vmatprep.subr.mxu0 0.0
    %1268 = vmatpush2.xpose.msra.mxu0 0.0
    %1269 = vmatprep.subr.mxu0 0.0
    %1270 = vmatpush2.xpose.msra.mxu0 0.0
    %1271 = vmatprep.subr.mxu0 0.0
    %1272 = vmatpush2.xpose.msra.mxu0 0.0
    %1273 = vmatprep.subr.mxu0 0.0
    %1274 = vmatpush2.xpose.msra.mxu0 0.0
    %1275 = vmatprep.subr.mxu0 0.0
    %1276 = vmatpush2.xpose.msra.mxu0 0.0
    %1277 = vmatprep.mubr.f32.mxu0 0.0
    %1278 = vmatmul.mubr.f32.gmra.mxu0 %v1208
    %v1279 = vpop.f32.mrf.mxu0
    %v1280 = vadd.f32 0.0, %v1279
    %v1281 = vpop.f32.mrf.mxu0
    %1282 = vdwg.mxu0
    %v1283 = vsel %vm98, %v1207, 0
    %v1286 = vsel %vm98, %v1013, 0
    %1288 = vmatprep.subr.mxu0 0.0
    %1289 = vmatpush1.xpose.msra.mxu0 0.0
    %1290 = vmatprep.subr.mxu0 0.0
    %1291 = vmatpush1.xpose.msra.mxu0 0.0
    %1292 = vmatprep.subr.mxu0 0.0
    %1293 = vmatpush1.xpose.msra.mxu0 0.0
    %1294 = vmatprep.subr.mxu0 0.0
    %1295 = vmatpush1.xpose.msra.mxu0 0.0
    %1296 = vmatprep.subr.mxu0 0.0
    %1297 = vmatpush1.xpose.msra.mxu0 0.0
    %1298 = vmatprep.subr.mxu0 0.0
    %1299 = vmatpush1.xpose.msra.mxu0 0.0
    %1300 = vmatprep.subr.mxu0 0.0
    %1301 = vmatpush1.xpose.msra.mxu0 0.0
    %1302 = vmatprep.subr.mxu0 0.0
    %1303 = vmatpush1.xpose.msra.mxu0 0.0
    %1304 = vmatprep.subr.mxu0 0.0
    %1305 = vmatpush1.xpose.msra.mxu0 0.0
    %1306 = vmatprep.subr.mxu0 0.0
    %1307 = vmatpush1.xpose.msra.mxu0 0.0
    %1308 = vmatprep.subr.mxu0 0.0
    %1309 = vmatpush1.xpose.msra.mxu0 0.0
    %1310 = vmatprep.subr.mxu0 0.0
    %1311 = vmatpush1.xpose.msra.mxu0 0.0
    %1312 = vmatprep.subr.mxu0 0.0
    %1313 = vmatpush1.xpose.msra.mxu0 0.0
    %1314 = vmatprep.subr.mxu0 0.0
    %1315 = vmatpush1.xpose.msra.mxu0 0.0
    %1316 = vmatprep.subr.mxu0 0.0
    %1317 = vmatpush1.xpose.msra.mxu0 0.0
    %1318 = vmatprep.subr.mxu0 0.0
    %1319 = vmatpush1.xpose.msra.mxu0 %v1286
    %1320 = vmatprep.subr.mxu0 0.0
    %1321 = vmatpush2.xpose.msra.mxu0 0.0
    %1322 = vmatprep.subr.mxu0 0.0
    %1323 = vmatpush2.xpose.msra.mxu0 0.0
    %1324 = vmatprep.subr.mxu0 0.0
    %1325 = vmatpush2.xpose.msra.mxu0 0.0
    %1326 = vmatprep.subr.mxu0 0.0
    %1327 = vmatpush2.xpose.msra.mxu0 0.0
    %1328 = vmatprep.subr.mxu0 0.0
    %1329 = vmatpush2.xpose.msra.mxu0 0.0
    %1330 = vmatprep.subr.mxu0 0.0
    %1331 = vmatpush2.xpose.msra.mxu0 0.0
    %1332 = vmatprep.subr.mxu0 0.0
    %1333 = vmatpush2.xpose.msra.mxu0 0.0
    %1334 = vmatprep.subr.mxu0 0.0
    %1335 = vmatpush2.xpose.msra.mxu0 0.0
    %1336 = vmatprep.subr.mxu0 0.0
    %1337 = vmatpush2.xpose.msra.mxu0 0.0
    %1338 = vmatprep.subr.mxu0 0.0
    %1339 = vmatpush2.xpose.msra.mxu0 0.0
    %1340 = vmatprep.subr.mxu0 0.0
    %1341 = vmatpush2.xpose.msra.mxu0 0.0
    %1342 = vmatprep.subr.mxu0 0.0
    %1343 = vmatpush2.xpose.msra.mxu0 0.0
    %1344 = vmatprep.subr.mxu0 0.0
    %1345 = vmatpush2.xpose.msra.mxu0 0.0
    %1346 = vmatprep.subr.mxu0 0.0
    %1347 = vmatpush2.xpose.msra.mxu0 0.0
    %1348 = vmatprep.subr.mxu0 0.0
    %1349 = vmatpush2.xpose.msra.mxu0 0.0
    %1350 = vmatprep.subr.mxu0 0.0
    %1351 = vmatpush2.xpose.msra.mxu0 0.0
    %1352 = vmatprep.mubr.f32.mxu0 0.0
    %1353 = vmatmul.mubr.f32.gmra.mxu0 %v1283
    %v1354 = vpop.f32.mrf.mxu0
    %v1355 = vadd.f32 0.0, %v1354
    %v1356 = vpop.f32.mrf.mxu0
    %1357 = vdwg.mxu0
    %v1360 = vrot.slane %v1355, 7
    %v1361 = vsel %vm525, %v1360, %v1280
    %v1363 = vsel %vm85, %v1361, -1e+09
    %v1364 = vsel %vm645, %v1363, -inf
    %1365 = vmax.xlane.f32.xlu0 %v1364
    %v1366 = vpop.xlane.xlu0 %1365
    %vm1367 = vcmp.ge.f32.partialorder %v1363, %v1366
    %v1368 = vsel %vm1367, %v81, 8
    %v1369 = vsel %vm645, %v1368, 2147483647
    %v1370 = vand.u32 %v1369, 65535
    %v1371 = vshra.s32 %v1369, 16
    %v1372 = vcvt.s32.f32 %v1370
    %v1373 = vcvt.s32.f32 %v1371
    %1374 = vmin.xlane.f32.xlu0 %v1373
    %v1375 = vpop.xlane.xlu0 %1374
    %vm1376 = vcmp.eq.f32.partialorder %v1373, %v1375
    %v1377 = vsel %vm1376, %v1372, inf
    %1378 = vmin.xlane.f32.xlu0 %v1377
    %v1379 = vpop.xlane.xlu0 %1378
    %v1380 = vcvt.f32.s32 %v1379
    %v1381 = vcvt.f32.s32 %v1375
    %v1382 = vshll.u32 %v1381, 16
    %v1383 = vadd.s32 %v1382, %v1380
    %1384 = vst.msk [vmem:[#allocation3] sm:$0x3] %vm624, %v623
    %vm1385 = vcmask 1024
    %1386 = vst.msk [vmem:[%s21] sm:$0x3] %vm1385, %v644
    %1387 = vst.msk [vmem:[%s22] sm:$0x3] %vm1385, %v618
    %vm1388 = vcmask 254976
    %1389 = vst.msk [vmem:[%s23] sm:$0x3] %vm1388, %v929
    %1390 = vst.msk [vmem:[#allocation5] sm:$0x3] %vm645, %v1363
    %1391 = vst.msk [vmem:[%s25] sm:$0x3] %vm1385, %v1383
    // Predicated region
    $region82: #{policy_forward.6} parent=1 // pred_check
      _
    $region83: #{policy_forward.6} parent=1 // pred_check_branch
      %1393 = sbr.rel (0) target = $region85
    $region84: #{policy_forward.6} parent=1 // pred_region
      %s1395 = ssub.s32 32, 32
      %1396 = vsyncadd [#allocation4], %s1395
      %s1398 = sshll.u32 [#allocation3], 4
      %s1399 = int_to_ptr.vmem [resolvable:$true] %s1398
      %1401 = dma.vmem_to_hbm [thread:$0]  %s1399, 32, %s20, [#allocation4]
    $region85: #{policy_forward.6} parent=1 // pred_fallthru
      _
    // Predicated region
    $region86: #{policy_forward.6} parent=1 // pred_check
      _
    $region87: #{policy_forward.6} parent=1 // pred_check_branch
      %1403 = sbr.rel (0) target = $region89
    $region88: #{policy_forward.6} parent=1 // pred_region
      _
    $region89: #{policy_forward.6} parent=1 // pred_fallthru
      _
    // Predicated region
    $region90: #{policy_forward.6} parent=1 // pred_check
      _
    $region91: #{policy_forward.6} parent=1 // pred_check_branch
      %1405 = sbr.rel (0) target = $region93
    $region92: #{policy_forward.6} parent=1 // pred_region
      _
    $region93: #{policy_forward.6} parent=1 // pred_fallthru
      _
    // Predicated region
    $region94: #{policy_forward.6} parent=1 // pred_check
      _
    $region95: #{policy_forward.6} parent=1 // pred_check_branch
      %1407 = sbr.rel (0) target = $region97
    $region96: #{policy_forward.6} parent=1 // pred_region
      _
    $region97: #{policy_forward.6} parent=1 // pred_fallthru
      _
    // Predicated region
    $region98: #{policy_forward.6} parent=1 // pred_check
      _
    $region99: #{policy_forward.6} parent=1 // pred_check_branch
      %1409 = sbr.rel (0) target = $region101
    $region100: #{policy_forward.6} parent=1 // pred_region
      %s1411 = ssub.s32 32, 32
      %1412 = vsyncadd [#allocation6], %s1411
      %s1414 = sshll.u32 [#allocation5], 4
      %s1415 = int_to_ptr.vmem [resolvable:$true] %s1414
      %1417 = dma.vmem_to_hbm [thread:$0]  %s1415, 32, %s24, [#allocation6]
    $region101: #{policy_forward.6} parent=1 // pred_fallthru
      _
    // Predicated region
    $region102: #{policy_forward.6} parent=1 // pred_check
      _
    $region103: #{policy_forward.6} parent=1 // pred_check_branch
      %1419 = sbr.rel (0) target = $region105
    $region104: #{policy_forward.6} parent=1 // pred_region
      _
    $region105: #{policy_forward.6} parent=1 // pred_fallthru
      _
    // Predicated region
    $region106: #{policy_forward.6} parent=1 // pred_check
      _
    $region107: #{policy_forward.6} parent=1 // pred_check_branch
      %1421 = sbr.rel (0) target = $region109
    $region108: #{policy_forward.6} parent=1 // pred_region
      %1422 = dma.done [#allocation4], 32
    $region109: #{policy_forward.6} parent=1 // pred_fallthru
      _
    // Predicated region
    $region110: #{policy_forward.6} parent=1 // pred_check
      _
    $region111: #{policy_forward.6} parent=1 // pred_check_branch
      %1424 = sbr.rel (0) target = $region113
    $region112: #{policy_forward.6} parent=1 // pred_region
      _
    $region113: #{policy_forward.6} parent=1 // pred_fallthru
      _
    // Predicated region
    $region114: #{policy_forward.6} parent=1 // pred_check
      _
    $region115: #{policy_forward.6} parent=1 // pred_check_branch
      %1426 = sbr.rel (0) target = $region117
    $region116: #{policy_forward.6} parent=1 // pred_region
      _
    $region117: #{policy_forward.6} parent=1 // pred_fallthru
      _
    // Predicated region
    $region118: #{policy_forward.6} parent=1 // pred_check
      _
    $region119: #{policy_forward.6} parent=1 // pred_check_branch
      %1428 = sbr.rel (0) target = $region121
    $region120: #{policy_forward.6} parent=1 // pred_region
      _
    $region121: #{policy_forward.6} parent=1 // pred_fallthru
      _
    // Predicated region
    $region122: #{policy_forward.6} parent=1 // pred_check
      _
    $region123: #{policy_forward.6} parent=1 // pred_check_branch
      %1430 = sbr.rel (0) target = $region125
    $region124: #{policy_forward.6} parent=1 // pred_region
      %1431 = dma.done [#allocation6], 32
    $region125: #{policy_forward.6} parent=1 // pred_fallthru
      _
    // Predicated region
    $region126: #{policy_forward.6} parent=1 // pred_check
      _
    $region127: #{policy_forward.6} parent=1 // pred_check_branch
      %1433 = sbr.rel (0) target = $region129
    $region128: #{policy_forward.6} parent=1 // pred_region
      _
    $region129: #{policy_forward.6} parent=1 // pred_fallthru
      _
    %1434 = vsyncpa [#allocation4], 1
    %1435 = vsyncpa [#allocation6], 1

// kernel: policy_forward.7
$region0: #{policy_forward.7}
  #allocation0 [shape = 'u32[]', space=smem, size = 0x4, offset = 0x4, fixed_abs, tag = 'smem constant byte address 0x4 - core index']
  #allocation1 [shape = 'u32[144,128]{1,0:T(1,128)}', space=vmem, size = 0x12000, scoped, tag = 'internal scratch']
  #allocation2 [shape = 'f32[1,1]{1,0:T(1,128)S(6)}', space=smem, size = 0x200, scoped, tag = 'scoped memory for policy_forward.7']
  %s0 = inlined_call_operand.vmem [shape: f32[2,32], index: 0, kind: input, shape index: {}]
  %s1 = inlined_call_operand.vmem [shape: f32[2,8,256], index: 1, kind: input, shape index: {}]
  %s2 = inlined_call_operand.vmem [shape: f32[32,8], index: 2, kind: input, shape index: {}]
  %s3 = inlined_call_operand.vmem [shape: f32[1,8], index: 3, kind: input, shape index: {}]
  %s4 = inlined_call_operand.vmem [shape: f32[1,8], index: 4, kind: input, shape index: {}]
  %s5 = inlined_call_operand.<no memory space> [shape: f32[1,1], index: 5, kind: input, shape index: {}]
  %s6 = inlined_call_operand.hbm [shape: f32[2,256], index: 6, kind: output, shape index: {0}]
  %s7 = inlined_call_operand.vmem [shape: s32[2,1], index: 7, kind: output, shape index: {1}]
  %8 = xla_tuple %s6, %s7
  %s9 = sld [smem:[#allocation0]]
  $region42: #{policy_forward.7} parent=0
    _
  %s11 = ssub.s32 1, %s9
  %s12 = scalar_select 0, %s11, %s9
  %13 = sst [smem:[#allocation2]] %s5
  $region1: #{policy_forward.7} parent=0
    #allocation3 [shape = 'u8[2048]{0}', space=vmem, size = 0x800, scoped, tag = 'output window, operand 0, single buffered']
    #allocation4 [shape = 's32[1]{0}', space=sflag, size = 0x4, scoped, tag = 'scoped memory for policy_forward.7']
    %14 = vsyncpa [#allocation4], 0
    // Predicated region
    $region2: #{policy_forward.7} parent=1 // pred_check
      _
    $region3: #{policy_forward.7} parent=1 // pred_check_branch
      %16 = sbr.rel (0) target = $region5
    $region4: #{policy_forward.7} parent=1 // pred_region
      _
    $region5: #{policy_forward.7} parent=1 // pred_fallthru
      _
    // Predicated region
    $region6: #{policy_forward.7} parent=1 // pred_check
      _
    $region7: #{policy_forward.7} parent=1 // pred_check_branch
      %18 = sbr.rel (0) target = $region9
    $region8: #{policy_forward.7} parent=1 // pred_region
      _
    $region9: #{policy_forward.7} parent=1 // pred_fallthru
      _
    // Predicated region
    $region10: #{policy_forward.7} parent=1 // pred_check
      _
    $region11: #{policy_forward.7} parent=1 // pred_check_branch
      %20 = sbr.rel (0) target = $region13
    $region12: #{policy_forward.7} parent=1 // pred_region
      _
    $region13: #{policy_forward.7} parent=1 // pred_fallthru
      _
    // Predicated region
    $region14: #{policy_forward.7} parent=1 // pred_check
      _
    $region15: #{policy_forward.7} parent=1 // pred_check_branch
      %22 = sbr.rel (0) target = $region17
    $region16: #{policy_forward.7} parent=1 // pred_region
      _
    $region17: #{policy_forward.7} parent=1 // pred_fallthru
      _
    // Predicated region
    $region18: #{policy_forward.7} parent=1 // pred_check
      _
    $region19: #{policy_forward.7} parent=1 // pred_check_branch
      %24 = sbr.rel (0) target = $region21
    $region20: #{policy_forward.7} parent=1 // pred_region
      _
    $region21: #{policy_forward.7} parent=1 // pred_fallthru
      _
    // Predicated region
    $region22: #{policy_forward.7} parent=1 // pred_check
      _
    $region23: #{policy_forward.7} parent=1 // pred_check_branch
      %26 = sbr.rel (0) target = $region25
    $region24: #{policy_forward.7} parent=1 // pred_region
      _
    $region25: #{policy_forward.7} parent=1 // pred_fallthru
      _
    %v27 = vld [vmem:[%s0] sm:$0x3]
    %v28 = vld [vmem:[%s1] sm:$0xff]
    %v29 = vld [vmem:[%s1 + $0x8] sm:$0xff]
    %v30 = vld [vmem:[%s1 + $0x10] sm:$0xff]
    %v31 = vld [vmem:[%s1 + $0x18] sm:$0xff]
    %v32 = vld [vmem:[%s2] sm:$0xff]
    %v33 = vld [vmem:[%s2 + $0x8] sm:$0xff]
    %v34 = vld [vmem:[%s2 + $0x10] sm:$0xff]
    %v35 = vld [vmem:[%s2 + $0x18] sm:$0xff]
    %v36 = vld [vmem:[%s3] sm:$0x1]
    %v38 = vlaneseq
    %v39 = vshrl.u32 %v38, 7
    %v40 = vsub.s32 0, %v39
    %v41 = vrot.slane %v36, %v40
    %vm43 = vcmask 261120
    %v45 = vsel %vm43, %v27, 0
    %47 = vmatprep.subr.mxu0 0.0
    %48 = vmatpush1.msra.mxu0 0.0
    %49 = vmatprep.subr.mxu0 0.0
    %50 = vmatpush1.msra.mxu0 0.0
    %51 = vmatprep.subr.mxu0 0.0
    %52 = vmatpush1.msra.mxu0 0.0
    %53 = vmatprep.subr.mxu0 0.0
    %54 = vmatpush1.msra.mxu0 0.0
    %55 = vmatprep.subr.mxu0 0.0
    %56 = vmatpush1.msra.mxu0 0.0
    %57 = vmatprep.subr.mxu0 0.0
    %58 = vmatpush1.msra.mxu0 0.0
    %59 = vmatprep.subr.mxu0 0.0
    %60 = vmatpush1.msra.mxu0 0.0
    %61 = vmatprep.subr.mxu0 0.0
    %62 = vmatpush1.msra.mxu0 0.0
    %63 = vmatprep.subr.mxu0 0.0
    %64 = vmatpush1.msra.mxu0 0.0
    %65 = vmatprep.subr.mxu0 0.0
    %66 = vmatpush1.msra.mxu0 0.0
    %67 = vmatprep.subr.mxu0 0.0
    %68 = vmatpush1.msra.mxu0 0.0
    %69 = vmatprep.subr.mxu0 0.0
    %70 = vmatpush1.msra.mxu0 0.0
    %71 = vmatprep.subr.mxu0 0.0
    %72 = vmatpush1.msra.mxu0 %v35
    %73 = vmatprep.subr.mxu0 0.0
    %74 = vmatpush1.msra.mxu0 %v34
    %75 = vmatprep.subr.mxu0 0.0
    %76 = vmatpush1.msra.mxu0 %v33
    %77 = vmatprep.subr.mxu0 0.0
    %78 = vmatpush1.msra.mxu0 %v32
    %79 = vmatprep.subr.mxu0 0.0
    %80 = vmatpush2.msra.mxu0 0.0
    %81 = vmatprep.subr.mxu0 0.0
    %82 = vmatpush2.msra.mxu0 0.0
    %83 = vmatprep.subr.mxu0 0.0
    %84 = vmatpush2.msra.mxu0 0.0
    %85 = vmatprep.subr.mxu0 0.0
    %86 = vmatpush2.msra.mxu0 0.0
    %87 = vmatprep.subr.mxu0 0.0
    %88 = vmatpush2.msra.mxu0 0.0
    %89 = vmatprep.subr.mxu0 0.0
    %90 = vmatpush2.msra.mxu0 0.0
    %91 = vmatprep.subr.mxu0 0.0
    %92 = vmatpush2.msra.mxu0 0.0
    %93 = vmatprep.subr.mxu0 0.0
    %94 = vmatpush2.msra.mxu0 0.0
    %95 = vmatprep.subr.mxu0 0.0
    %96 = vmatpush2.msra.mxu0 0.0
    %97 = vmatprep.subr.mxu0 0.0
    %98 = vmatpush2.msra.mxu0 0.0
    %99 = vmatprep.subr.mxu0 0.0
    %100 = vmatpush2.msra.mxu0 0.0
    %101 = vmatprep.subr.mxu0 0.0
    %102 = vmatpush2.msra.mxu0 0.0
    %103 = vmatprep.subr.mxu0 0.0
    %104 = vmatpush2.msra.mxu0 0.0
    %105 = vmatprep.subr.mxu0 0.0
    %106 = vmatpush2.msra.mxu0 0.0
    %107 = vmatprep.subr.mxu0 0.0
    %108 = vmatpush2.msra.mxu0 0.0
    %109 = vmatprep.subr.mxu0 0.0
    %110 = vmatpush2.msra.mxu0 0.0
    %111 = vmatprep.mubr.f32.mxu0 0.0
    %112 = vmatmul.mubr.f32.gmra.mxu0 %v45
    %v113 = vpop.f32.mrf.mxu0
    %v114 = vadd.f32 %v41, %v113
    %v115 = vpop.f32.mrf.mxu0
    %116 = vdwg.mxu0
    %v117 = vlaneseq
    %v118 = vshrl.u32 %v117, 7
    %v119 = vsub.s32 0, %v118
    %v120 = vrot.slane %v114, %v119
    %122 = vbcast.lane.b32.xlu0 %v120, 256
    %v123 = vpop.permute.xlu0 %122
    %v124 = vlaneseq
    %v125 = vshrl.u32 %v124, 7
    %v126 = vsub.s32 1, %v125
    %v127 = vrot.slane %v114, %v126
    %129 = vbcast.lane.b32.xlu0 %v127, 256
    %v130 = vpop.permute.xlu0 %129
    %v131 = vadd.f32 %v28, %v123
    %v132 = vadd.f32 %v29, %v123
    %v133 = vadd.f32 %v30, %v130
    %v134 = vadd.f32 %v31, %v130
    %v135 = vmax.f32 %v131, 0.0
    %v136 = vmax.f32 %v132, 0.0
    %v137 = vmax.f32 %v133, 0.0
    %v138 = vmax.f32 %v134, 0.0
    %v139 = vld [vmem:[%s4] sm:$0x1]
    %v140 = vlaneseq
    %v141 = vshrl.u32 %v140, 7
    %v142 = vsub.s32 0, %v141
    %v143 = vrot.slane %v139, %v142
    %145 = vbcast.lane.b32.xlu0 %v143, 256
    %v146 = vpop.permute.xlu0 %145
    %v147 = vmul.f32 %v135, %v146
    %v148 = vmul.f32 %v136, %v146
    %v149 = vmul.f32 %v137, %v146
    %v150 = vmul.f32 %v138, %v146
    %v151 = vrot.slane %v147, 4
    %v152 = vadd.f32 %v147, %v151
    %v153 = vrot.slane %v152, 2
    %v154 = vadd.f32 %v152, %v153
    %v155 = vrot.slane %v154, 1
    %v156 = vadd.f32 %v154, %v155
    %v157 = vrot.slane %v148, 4
    %v158 = vadd.f32 %v148, %v157
    %v159 = vrot.slane %v158, 2
    %v160 = vadd.f32 %v158, %v159
    %v161 = vrot.slane %v160, 1
    %v162 = vadd.f32 %v160, %v161
    %v163 = vrot.slane %v149, 4
    %v164 = vadd.f32 %v149, %v163
    %v165 = vrot.slane %v164, 2
    %v166 = vadd.f32 %v164, %v165
    %v167 = vrot.slane %v166, 1
    %v168 = vadd.f32 %v166, %v167
    %v169 = vrot.slane %v150, 4
    %v170 = vadd.f32 %v150, %v169
    %v171 = vrot.slane %v170, 2
    %v172 = vadd.f32 %v170, %v171
    %v173 = vrot.slane %v172, 1
    %v174 = vadd.f32 %v172, %v173
    %s175 = sld [smem:[#allocation2]]
    %v176 = vstv %s175
    %v177 = vadd.f32 %v156, %v176
    %v178 = vadd.f32 %v162, %v176
    %v179 = vadd.f32 %v168, %v176
    %v180 = vadd.f32 %v174, %v176
    %v185 = vcombine.low %v177, %v178
    %v187 = vunpack.c.l.s4 1983009808
    %v188 = vunpack.c.0.s8 %v187
    %v189 = vlaneseq
    %v190 = vshrl.u32 %v189, 7
    %v191 = vsub.s32 %v188, %v190
    %v192 = vrot.slane %v185, %v191
    %v193 = vcombine.low %v179, %v180
    %v195 = vunpack.c.l.s4 1983009808
    %v196 = vunpack.c.0.s8 %v195
    %v197 = vlaneseq
    %v198 = vshrl.u32 %v197, 7
    %v199 = vsub.s32 %v196, %v198
    %v200 = vrot.slane %v193, %v199
    %vm201 = vcmask 1044484
    %v202 = vsel %vm201, %v192, %v192
    %vm203 = vcmask 1046534
    %v204 = vsel %vm203, %v192, %v202
    %v205 = vrot.slane %v200, 7
    %vm206 = vcmask 1041409
    %v207 = vsel %vm206, %v205, %v204
    %vm208 = vcmask 1043459
    %v209 = vsel %vm208, %v205, %v207
    %vm210 = vcmask 1045509
    %v211 = vsel %vm210, %v205, %v209
    %vm212 = vcmask 1047559
    %v213 = vsel %vm212, %v205, %v211
    %215 = vst [vmem:[#allocation3] sm:$0xf] %v213
    %v216 = vsel %vm206, %v179, %v177
    %v217 = vsel %vm206, %v180, %v178
    %vm220 = vcmask 1041408
    %v221 = vsel %vm220, %v216, -inf
    %v222 = vsel %vm220, %v217, -inf
    %v223 = vmax.f32 %v221, %v222
    %224 = vmax.xlane.f32.xlu0 %v223
    %v225 = vpop.xlane.xlu0 %224
    %v226 = vlaneseq
    %v227 = vand.u32 %v226, 127
    %v228 = vadd.s32 %v227, 128
    %v230 = vrot.slane %v225, 1
    %vm233 = vcmp.ge.f32.partialorder %v177, %v225
    %vm234 = vcmp.ge.f32.partialorder %v178, %v225
    %vm235 = vcmp.ge.f32.partialorder %v179, %v230
    %vm236 = vcmp.ge.f32.partialorder %v180, %v230
    %v237 = vsel %vm233, %v227, 256
    %v238 = vsel %vm234, %v228, 256
    %v239 = vsel %vm235, %v227, 256
    %v240 = vsel %vm236, %v228, 256
    %v241 = vrot.slane %v239, 7
    %v242 = vsel %vm206, %v241, %v237
    %v243 = vrot.slane %v240, 7
    %v244 = vsel %vm206, %v243, %v238
    %v245 = vsel %vm220, %v242, 2147483647
    %v246 = vsel %vm220, %v244, 2147483647
    %vm247 = vcmp.lt.s32.totalorder %v245, %v246
    %v248 = vsel %vm247, %v245, %v246
    %v249 = vand.u32 %v248, 65535
    %v250 = vshra.s32 %v248, 16
    %v251 = vcvt.s32.f32 %v249
    %v252 = vcvt.s32.f32 %v250
    %253 = vmin.xlane.f32.xlu0 %v252
    %v254 = vpop.xlane.xlu0 %253
    %vm255 = vcmp.eq.f32.partialorder %v252, %v254
    %v256 = vsel %vm255, %v251, inf
    %257 = vmin.xlane.f32.xlu0 %v256
    %v258 = vpop.xlane.xlu0 %257
    %v259 = vcvt.f32.s32 %v258
    %v260 = vcvt.f32.s32 %v254
    %v261 = vshll.u32 %v260, 16
    %v262 = vadd.s32 %v261, %v259
    %vm263 = vcmask 1024
    %264 = vst.msk [vmem:[%s7] sm:$0x3] %vm263, %v262
    // Predicated region
    $region26: #{policy_forward.7} parent=1 // pred_check
      _
    $region27: #{policy_forward.7} parent=1 // pred_check_branch
      %266 = sbr.rel (0) target = $region29
    $region28: #{policy_forward.7} parent=1 // pred_region
      %s268 = ssub.s32 64, 64
      %269 = vsyncadd [#allocation4], %s268
      %s271 = sshll.u32 [#allocation3], 4
      %s272 = int_to_ptr.vmem [resolvable:$true] %s271
      %274 = dma.vmem_to_hbm [thread:$0]  %s272, 64, %s6, [#allocation4]
    $region29: #{policy_forward.7} parent=1 // pred_fallthru
      _
    // Predicated region
    $region30: #{policy_forward.7} parent=1 // pred_check
      _
    $region31: #{policy_forward.7} parent=1 // pred_check_branch
      %276 = sbr.rel (0) target = $region33
    $region32: #{policy_forward.7} parent=1 // pred_region
      _
    $region33: #{policy_forward.7} parent=1 // pred_fallthru
      _
    // Predicated region
    $region34: #{policy_forward.7} parent=1 // pred_check
      _
    $region35: #{policy_forward.7} parent=1 // pred_check_branch
      %278 = sbr.rel (0) target = $region37
    $region36: #{policy_forward.7} parent=1 // pred_region
      %279 = dma.done [#allocation4], 64
    $region37: #{policy_forward.7} parent=1 // pred_fallthru
      _
    // Predicated region
    $region38: #{policy_forward.7} parent=1 // pred_check
      _
    $region39: #{policy_forward.7} parent=1 // pred_check_branch
      %281 = sbr.rel (0) target = $region41
    $region40: #{policy_forward.7} parent=1 // pred_region
      _
    $region41: #{policy_forward.7} parent=1 // pred_fallthru
      _
    %282 = vsyncpa [#allocation4], 1

</llo_original>
